<compile_context>
chip_gen: v5e
topology: v5e:2x2
jax: 0.10.0
libtpu: 0.0.40
codegen_flags: <defaults>
</compile_context>

<pallas_src>
import functools

import jax
import jax.numpy as jnp
from jax import lax
from jax.experimental import pallas as pl
from jax.experimental.pallas import tpu as pltpu

_LANE = 128


def _round_up(x, m):
    return ((x + m - 1) // m) * m


def _pad_last(a, target):
    pad = target - a.shape[-1]
    if pad == 0:
        return a
    return jnp.pad(a, [(0, 0)] * (a.ndim - 1) + [(0, pad)])


def _pad_rows(a, target):
    pad = target - a.shape[0]
    if pad == 0:
        return a
    return jnp.pad(a, [(0, pad)] + [(0, 0)] * (a.ndim - 1))


# ----------------------------------------------------------------------------
# Pallas kernels: lane-dense im2col matmuls (bf16 operands, f32 accumulation)
# with fused affine / product / concat / 1x1-head epilogues.
# ----------------------------------------------------------------------------
def _conv_kernel(p_ref, w_ref, s_ref, b_ref, o_ref):
    y = jnp.dot(p_ref[...], w_ref[...], preferred_element_type=jnp.float32)
    o_ref[...] = (y * s_ref[...] + b_ref[...]).astype(o_ref.dtype)


def _conv_partial_mul_kernel(mul_channels, p_ref, w_ref, s_ref, b_ref, m_ref, o_ref):
    # Output lanes [0, mul_channels) are multiplied by m, the rest pass through.
    y = jnp.dot(p_ref[...], w_ref[...], preferred_element_type=jnp.float32)
    yaff = y * s_ref[...] + b_ref[...]
    lane = lax.broadcasted_iota(jnp.int32, yaff.shape, 1)
    mul = jnp.where(lane < mul_channels, m_ref[...], 1.0)
    o_ref[...] = (yaff * mul).astype(o_ref.dtype)


def _conv3_concat_kernel(pa_ref, wa_ref, sa_ref, ba_ref,
                         pb_ref, wb_ref, sb_ref, bb_ref, m_ref,
                         pc_ref, wc_ref, sc_ref, bc_ref, o_ref):
    # Lanes [0, Ca): conv_a * conv_b * m.  Lanes [Ca, Ca+Cc): conv_c (weight
    # columns pre-shifted).  Disjoint (zero-padded) columns make the sum exact.
    ya = jnp.dot(pa_ref[...], wa_ref[...], preferred_element_type=jnp.float32)
    yb = jnp.dot(pb_ref[...], wb_ref[...], preferred_element_type=jnp.float32)
    yc = jnp.dot(pc_ref[...], wc_ref[...], preferred_element_type=jnp.float32)
    ya = ya * sa_ref[...] + ba_ref[...]
    yb = yb * sb_ref[...] + bb_ref[...]
    yc = yc * sc_ref[...] + bc_ref[...]
    o_ref[...] = (ya * yb * m_ref[...] + yc).astype(o_ref.dtype)


def _conv_head_kernel(p_ref, w_ref, s_ref, b_ref, w5_ref, b5_ref, o_ref, o5_ref):
    # conv4 (affine epilogue) plus the fused 1x1 conv5 head (cout=1) on top.
    y = jnp.dot(p_ref[...], w_ref[...], preferred_element_type=jnp.float32)
    yaff = y * s_ref[...] + b_ref[...]
    o_ref[...] = yaff.astype(o_ref.dtype)
    o5 = jnp.sum(yaff * w5_ref[...], axis=-1, keepdims=True) + b5_ref[...]
    o5_ref[...] = o5.astype(o5_ref.dtype)


# ----------------------------------------------------------------------------
# Wrapper helpers (im2col + lane/row padding are XLA glue; matmuls are Pallas).
# ----------------------------------------------------------------------------
def _row_tiling(rows):
    """Largest row tile that still keeps >= 2 grid steps; rows padded up."""
    for t in (1024, 512, 256, 128, 64, 32, 16):
        if rows >= 2 * t:
            return t, _round_up(rows, t)
    return 16, _round_up(rows, 16)


def _extract_patches(x_nhwc, k):
    """im2col: (N,H,W,C) -> (N*H*W, K*K*C), SAME padding, (tap, cin) order."""
    n, h, w, c = x_nhwc.shape
    if k == 1:
        return x_nhwc.reshape(n * h * w, c)
    pad = (k - 1) // 2
    xp = jnp.pad(x_nhwc, ((0, 0), (pad, pad), (pad, pad), (0, 0)))
    cols = [xp[:, dy:dy + h, dx:dx + w, :] for dy in range(k) for dx in range(k)]
    return jnp.concatenate(cols, axis=-1).reshape(n * h * w, k * k * c)


def _prep_patches(x_nhwc, k):
    """Lane-padded bf16 patch matrix (MXU operand)."""
    p = _extract_patches(x_nhwc, k)
    kkc_p = _round_up(p.shape[-1], _LANE)
    return _pad_last(p, kkc_p).astype(jnp.bfloat16), kkc_p


def _prep_weight(w_hwio, scale, shift, kkc_p, cout_p, col_offset=0):
    """bf16 weight matrix + f32 scale/shift rows, columns placed at col_offset."""
    kh, kw, cin, cout = w_hwio.shape
    left, right = col_offset, cout_p - cout - col_offset
    w2 = w_hwio.reshape(kh * kw * cin, cout).astype(jnp.float32)
    w2 = jnp.pad(w2, ((0, kkc_p - kh * kw * cin), (left, right))).astype(jnp.bfloat16)
    s2 = jnp.pad(scale.reshape(1, cout).astype(jnp.float32), ((0, 0), (left, right)))
    b2 = jnp.pad(shift.reshape(1, cout).astype(jnp.float32), ((0, 0), (left, right)))
    return w2, s2, b2


def _compiler_params():
    return pltpu.CompilerParams(
        dimension_semantics=("parallel",),      # row grid -> megacore sharding
        vmem_limit_bytes=32 * 1024 * 1024,      # safe on v5e/v6e/v7x
    )


def conv2d_pallas(x_nhwc, w_hwio, scale, shift):
    """SAME conv + folded per-channel affine, one im2col matmul per row tile."""
    n, h, w, _ = x_nhwc.shape
    rows = n * h * w
    cout = w_hwio.shape[-1]
    cout_p = _round_up(cout, _LANE)
    p, kkc_p = _prep_patches(x_nhwc, w_hwio.shape[0])
    w2, s2, b2 = _prep_weight(w_hwio, scale, shift, kkc_p, cout_p)
    tr, rows_p = _row_tiling(rows)
    p = _pad_rows(p, rows_p)
    y = pl.pallas_call(
        _conv_kernel,
        out_shape=jax.ShapeDtypeStruct((rows_p, cout_p), jnp.float32),
        grid=(rows_p // tr,),
        in_specs=[
            pl.BlockSpec((tr, kkc_p), lambda i: (i, 0)),
            pl.BlockSpec((kkc_p, cout_p), lambda i: (0, 0)),
            pl.BlockSpec((1, cout_p), lambda i: (0, 0)),
            pl.BlockSpec((1, cout_p), lambda i: (0, 0)),
        ],
        out_specs=pl.BlockSpec((tr, cout_p), lambda i: (i, 0)),
        compiler_params=_compiler_params(),
    )(p, w2, s2, b2)
    return y[:rows, :cout].reshape(n, h, w, cout)


def conv2d_partial_mul_pallas(x_nhwc, w_hwio, scale, shift, mul_nhwc, mul_channels):
    """conv(x)*scale+shift with channels [0, mul_channels) multiplied by mul."""
    n, h, w, _ = x_nhwc.shape
    rows = n * h * w
    cout = w_hwio.shape[-1]
    cout_p = _round_up(cout, _LANE)
    p, kkc_p = _prep_patches(x_nhwc, w_hwio.shape[0])
    w2, s2, b2 = _prep_weight(w_hwio, scale, shift, kkc_p, cout_p)
    m = _pad_last(mul_nhwc.reshape(rows, mul_channels).astype(jnp.float32), cout_p)
    tr, rows_p = _row_tiling(rows)
    p = _pad_rows(p, rows_p)
    m = _pad_rows(m, rows_p)
    y = pl.pallas_call(
        functools.partial(_conv_partial_mul_kernel, mul_channels),
        out_shape=jax.ShapeDtypeStruct((rows_p, cout_p), jnp.float32),
        grid=(rows_p // tr,),
        in_specs=[
            pl.BlockSpec((tr, kkc_p), lambda i: (i, 0)),
            pl.BlockSpec((kkc_p, cout_p), lambda i: (0, 0)),
            pl.BlockSpec((1, cout_p), lambda i: (0, 0)),
            pl.BlockSpec((1, cout_p), lambda i: (0, 0)),
            pl.BlockSpec((tr, cout_p), lambda i: (i, 0)),
        ],
        out_specs=pl.BlockSpec((tr, cout_p), lambda i: (i, 0)),
        compiler_params=_compiler_params(),
    )(p, w2, s2, b2, m)
    return y[:rows, :cout].reshape(n, h, w, cout)


def conv3_concat_pallas(xa, wa, sa, ba, xb, wb, sb, bb, m_nhwc, xc, wc, sc, bc):
    """cat([conv_a(xa)*conv_b(xb)*m, conv_c(xc)], channel) in one kernel.

    conv_c's weight/scale/shift columns are shifted by conv_a's cout, so the
    kernel's single lane-dense output already holds the channel concatenation.
    """
    n, h, w, _ = xa.shape
    rows = n * h * w
    ca = wa.shape[-1]
    cc = wc.shape[-1]
    cout = ca + cc
    cout_p = _round_up(cout, _LANE)
    pa, ka_p = _prep_patches(xa, wa.shape[0])
    pb, kb_p = _prep_patches(xb, wb.shape[0])
    pc, kc_p = _prep_patches(xc, wc.shape[0])
    wa2, sa2, ba2 = _prep_weight(wa, sa, ba, ka_p, cout_p, col_offset=0)
    wb2, sb2, bb2 = _prep_weight(wb, sb, bb, kb_p, cout_p, col_offset=0)
    wc2, sc2, bc2 = _prep_weight(wc, sc, bc, kc_p, cout_p, col_offset=ca)
    m = _pad_last(m_nhwc.reshape(rows, ca).astype(jnp.float32), cout_p)
    tr, rows_p = _row_tiling(rows)
    pa = _pad_rows(pa, rows_p)
    pb = _pad_rows(pb, rows_p)
    pc = _pad_rows(pc, rows_p)
    m = _pad_rows(m, rows_p)
    y = pl.pallas_call(
        _conv3_concat_kernel,
        out_shape=jax.ShapeDtypeStruct((rows_p, cout_p), jnp.float32),
        grid=(rows_p // tr,),
        in_specs=[
            pl.BlockSpec((tr, ka_p), lambda i: (i, 0)),
            pl.BlockSpec((ka_p, cout_p), lambda i: (0, 0)),
            pl.BlockSpec((1, cout_p), lambda i: (0, 0)),
            pl.BlockSpec((1, cout_p), lambda i: (0, 0)),
            pl.BlockSpec((tr, kb_p), lambda i: (i, 0)),
            pl.BlockSpec((kb_p, cout_p), lambda i: (0, 0)),
            pl.BlockSpec((1, cout_p), lambda i: (0, 0)),
            pl.BlockSpec((1, cout_p), lambda i: (0, 0)),
            pl.BlockSpec((tr, cout_p), lambda i: (i, 0)),
            pl.BlockSpec((tr, kc_p), lambda i: (i, 0)),
            pl.BlockSpec((kc_p, cout_p), lambda i: (0, 0)),
            pl.BlockSpec((1, cout_p), lambda i: (0, 0)),
            pl.BlockSpec((1, cout_p), lambda i: (0, 0)),
        ],
        out_specs=pl.BlockSpec((tr, cout_p), lambda i: (i, 0)),
        compiler_params=_compiler_params(),
    )(pa, wa2, sa2, ba2, pb, wb2, sb2, bb2, m, pc, wc2, sc2, bc2)
    return y[:rows, :cout].reshape(n, h, w, cout)


def conv2d_with_head_pallas(x_nhwc, w_hwio, scale, shift, w5, s5, b5):
    """conv4 (3x3 + affine) with the 1x1 conv5 head fused as a second output."""
    n, h, w, _ = x_nhwc.shape
    rows = n * h * w
    cout = w_hwio.shape[-1]
    cout_p = _round_up(cout, _LANE)
    p, kkc_p = _prep_patches(x_nhwc, w_hwio.shape[0])
    w2, s2, b2 = _prep_weight(w_hwio, scale, shift, kkc_p, cout_p)
    cin5 = w5.shape[2]
    w5row = w5.reshape(1, cin5).astype(jnp.float32) * s5.astype(jnp.float32).reshape(1, 1)
    w5row = _pad_last(w5row, cout_p)
    b5m = b5.astype(jnp.float32).reshape(1, 1)
    tr, rows_p = _row_tiling(rows)
    p = _pad_rows(p, rows_p)
    y, y5 = pl.pallas_call(
        _conv_head_kernel,
        out_shape=(jax.ShapeDtypeStruct((rows_p, cout_p), jnp.float32),
                   jax.ShapeDtypeStruct((rows_p, 1), jnp.float32)),
        grid=(rows_p // tr,),
        in_specs=[
            pl.BlockSpec((tr, kkc_p), lambda i: (i, 0)),
            pl.BlockSpec((kkc_p, cout_p), lambda i: (0, 0)),
            pl.BlockSpec((1, cout_p), lambda i: (0, 0)),
            pl.BlockSpec((1, cout_p), lambda i: (0, 0)),
            pl.BlockSpec((1, cout_p), lambda i: (0, 0)),
            pl.BlockSpec((1, 1), lambda i: (0, 0)),
        ],
        out_specs=(pl.BlockSpec((tr, cout_p), lambda i: (i, 0)),
                   pl.BlockSpec((tr, 1), lambda i: (i, 0))),
        compiler_params=_compiler_params(),
    )(p, w2, s2, b2, w5row, b5m)
    f = y[:rows, :cout].reshape(n, h, w, cout)
    o = y5[:rows, :].reshape(n, h, w, 1)
    return f, o


# ----------------------------------------------------------------------------
# Bilinear upsample (align_corners=True) — plain JAX glue (separable lerp).
# ----------------------------------------------------------------------------
def _interp_matrix(out_size, in_size):
    if in_size == 1:
        return jnp.ones((out_size, 1), jnp.float32)
    if out_size == 1:
        return jnp.zeros((1, in_size), jnp.float32).at[0, 0].set(1.0)
    coords = jnp.arange(out_size, dtype=jnp.float32) * ((in_size - 1) / (out_size - 1))
    src = jnp.arange(in_size, dtype=jnp.float32)
    return jnp.maximum(0.0, 1.0 - jnp.abs(src[None, :] - coords[:, None]))


def upsample_align_corners(x_nhwc, size):
    ho, wo = size
    _, h, w, _ = x_nhwc.shape
    ah = _interp_matrix(ho, h)
    aw = _interp_matrix(wo, w)
    y = jnp.einsum('oh,nhwc->nowc', ah, x_nhwc)
    y = jnp.einsum('pw,nowc->nopc', aw, y)
    return y


# ----------------------------------------------------------------------------
# Parameter construction (deterministic, eval-mode BN folded into scale/shift).
# ----------------------------------------------------------------------------
def _make_conv_params(key, cin, cout, ksize, bn=True, bias=False):
    kw, kg, kb, km, kv, kbias = jax.random.split(key, 6)
    w = jax.random.normal(kw, (ksize, ksize, cin, cout), jnp.float32)
    w = w / jnp.sqrt(float(ksize * ksize * cin))
    if bn:
        eps = 1e-5
        gamma = 1.0 + 0.1 * jax.random.normal(kg, (cout,), jnp.float32)
        beta = 0.1 * jax.random.normal(kb, (cout,), jnp.float32)
        mean = 0.1 * jax.random.normal(km, (cout,), jnp.float32)
        var = 1.0 + 0.1 * jax.random.uniform(kv, (cout,), jnp.float32)
        scale = gamma / jnp.sqrt(var + eps)
        shift = beta - mean * scale
    else:
        scale = jnp.ones((cout,), jnp.float32)
        shift = (0.1 * jax.random.normal(kbias, (cout,), jnp.float32)
                 if bias else jnp.zeros((cout,), jnp.float32))
    return (w, scale, shift)   # kernel size is read from w.shape (static)


def make_ppd_params(channel, key):
    names = ["cu1", "cu2", "cu3", "cu4", "cu5", "cc2", "cc3", "c4", "c5"]
    keys = dict(zip(names, jax.random.split(key, len(names))))
    c = channel
    return {
        "cu1": _make_conv_params(keys["cu1"], c, c, 3),
        "cu2": _make_conv_params(keys["cu2"], c, c, 3),
        "cu3": _make_conv_params(keys["cu3"], c, c, 3),
        "cu4": _make_conv_params(keys["cu4"], c, c, 3),
        "cu5": _make_conv_params(keys["cu5"], 2 * c, 2 * c, 3),
        "cc2": _make_conv_params(keys["cc2"], 2 * c, 2 * c, 3),
        "cc3": _make_conv_params(keys["cc3"], 3 * c, 3 * c, 3),
        "c4": _make_conv_params(keys["c4"], 3 * c, 3 * c, 3),
        "c5": _make_conv_params(keys["c5"], 3 * c, 1, 1, bn=False, bias=True),
    }


# ----------------------------------------------------------------------------
# PPD forward (Pallas) and pure-JAX references (shared structure).
# ----------------------------------------------------------------------------
def _forward_core(params, f1, f2, f3, conv_fn, conv_partial_mul_fn,
                  conv3_concat_fn, conv_head_fn):
    # f1, f2, f3 are NHWC here.
    c = f1.shape[-1]
    h2, w2 = f2.shape[1], f2.shape[2]
    h3, w3 = f3.shape[1], f3.shape[2]

    f1x2 = upsample_align_corners(f1, (h2, w2))
    f1x4 = upsample_align_corners(f1, (h3, w3))
    f2x2 = upsample_align_corners(f2, (h3, w3))

    # conv_upsample1 & conv_upsample4 merged (shared input f1x2); only the first
    # `c` output lanes are multiplied by f2, so this directly emits
    # cat([conv_up1(f1x2)*f2, conv_up4(f1x2)], channel) == conv_concat2 input.
    w14 = jnp.concatenate([params["cu1"][0], params["cu4"][0]], axis=-1)
    s14 = jnp.concatenate([params["cu1"][1], params["cu4"][1]], axis=-1)
    b14 = jnp.concatenate([params["cu1"][2], params["cu4"][2]], axis=-1)
    f2_2 = conv_partial_mul_fn(f1x2, w14, s14, b14, f2, c)

    f2_2 = conv_fn(f2_2, *params["cc2"])
    f2_2x2 = upsample_align_corners(f2_2, (h3, w3))

    # conv_upsample2(f1x4)*conv_upsample3(f2x2)*f3 and conv_upsample5(f2_2x2)
    # fused into one kernel whose output is already the channel-concatenated
    # conv_concat3 input.
    f3_2 = conv3_concat_fn(f1x4, *params["cu2"], f2x2, *params["cu3"], f3,
                           f2_2x2, *params["cu5"])
    f3_2 = conv_fn(f3_2, *params["cc3"])

    # conv4 with the 1x1 conv5 head fused into the same kernel.
    f3_2, out = conv_head_fn(f3_2, *params["c4"], *params["c5"])
    return f3_2, out


@jax.jit
def ppd_forward(params, f1_nchw, f2_nchw, f3_nchw):
    """Pallas implementation.  Inputs/outputs NCHW (PyTorch convention)."""
    to_nhwc = lambda t: jnp.transpose(t, (0, 2, 3, 1))
    to_nchw = lambda t: jnp.transpose(t, (0, 3, 1, 2))
    f3_2, out = _forward_core(
        params, to_nhwc(f1_nchw), to_nhwc(f2_nchw), to_nhwc(f3_nchw),
        conv2d_pallas, conv2d_partial_mul_pallas, conv3_concat_pallas,
        conv2d_with_head_pallas)
    return to_nchw(f3_2), to_nchw(out)


def _make_ref_fns(cast_bf16):
    """Reference ops; cast_bf16=True mirrors the kernels' bf16 MXU operands."""
    def conv_ref(x, w, s, b):
        if cast_bf16:
            x = x.astype(jnp.bfloat16)
            w = w.astype(jnp.bfloat16)
            prec = None
        else:
            prec = lax.Precision.HIGHEST
        k = w.shape[0]
        pad = (k - 1) // 2
        y = lax.conv_general_dilated(
            x, w, window_strides=(1, 1), padding=[(pad, pad), (pad, pad)],
            dimension_numbers=("NHWC", "HWIO", "NHWC"),
            preferred_element_type=jnp.float32, precision=prec)
        return y * s.reshape(1, 1, 1, -1) + b.reshape(1, 1, 1, -1)

    def partial_mul_ref(x, w, s, b, m, mc):
        y = conv_ref(x, w, s, b)
        return jnp.concatenate([y[..., :mc] * m, y[..., mc:]], axis=-1)

    def concat3_ref(xa, wa, sa, ba, xb, wb, sb, bb, m, xc, wc, sc, bc):
        return jnp.concatenate(
            [conv_ref(xa, wa, sa, ba) * conv_ref(xb, wb, sb, bb) * m,
             conv_ref(xc, wc, sc, bc)], axis=-1)

    def head_ref(x, w, s, b, w5, s5, b5):
        y = conv_ref(x, w, s, b)
        cin5 = w5.shape[2]
        o5 = jnp.einsum("nhwc,co->nhwo", y, w5.reshape(cin5, -1))
        o5 = o5 * s5.reshape(1, 1, 1, -1) + b5.reshape(1, 1, 1, -1)
        return y, o5

    return conv_ref, partial_mul_ref, concat3_ref, head_ref


def ppd_reference(params, f1_nchw, f2_nchw, f3_nchw, cast_bf16):
    to_nhwc = lambda t: jnp.transpose(t, (0, 2, 3, 1))
    to_nchw = lambda t: jnp.transpose(t, (0, 3, 1, 2))
    fns = _make_ref_fns(cast_bf16)
    f3_2, out = _forward_core(
        params, to_nhwc(f1_nchw), to_nhwc(f2_nchw), to_nhwc(f3_nchw), *fns)
    return to_nchw(f3_2), to_nchw(out)


# ----------------------------------------------------------------------------
if __name__ == "__main__":
    channel = 4
    batch = 2
    key = jax.random.PRNGKey(0)
    kp, k1, k2, k3 = jax.random.split(key, 4)

    params = make_ppd_params(channel, kp)
    # f1 is the coarsest feature map; f2 is 2x, f3 is 4x its spatial size.
    f1 = jax.random.normal(k1, (batch, channel, 4, 4), jnp.float32)
    f2 = jax.random.normal(k2, (batch, channel, 8, 8), jnp.float32)
    f3 = jax.random.normal(k3, (batch, channel, 16, 16), jnp.float32)

    f3_2, out = ppd_forward(params, f1, f2, f3)
    f3_2 = jax.block_until_ready(f3_2)
    out = jax.block_until_ready(out)

    assert f3_2.shape == (batch, 3 * channel, 16, 16)
    assert out.shape == (batch, 1, 16, 16)

    # Tight check vs. a reference with the same bf16 MXU-operand rounding.
    r3_2, rout = ppd_reference(params, f1, f2, f3, cast_bf16=True)
    d1 = float(jnp.max(jnp.abs(f3_2 - r3_2)))
    d2 = float(jnp.max(jnp.abs(out - rout)))
    assert jnp.allclose(f3_2, r3_2, atol=5e-3, rtol=5e-3), d1
    assert jnp.allclose(out, rout, atol=5e-3, rtol=5e-3), d2

    # Loose sanity bound vs. the full-f32 (HIGHEST precision) reference: bounds
    # the accumulated bf16 operand-rounding error of the whole decoder chain.
    g3_2, gout = ppd_reference(params, f1, f2, f3, cast_bf16=False)
    d3 = float(jnp.max(jnp.abs(f3_2 - g3_2)))
    d4 = float(jnp.max(jnp.abs(out - gout)))
    assert jnp.allclose(f3_2, g3_2, atol=1e-1, rtol=1e-1), d3
    assert jnp.allclose(out, gout, atol=1e-1, rtol=1e-1), d4

    print("KERNEL_OK")
</pallas_src>

<mosaic_0001>
module attributes {stable_mosaic.version = 11 : i64} {
  func.func @_conv_partial_mul_kernel(%arg0: i32, %arg1: memref<64x128xbf16, #tpu.memory_space<vmem>>, %arg2: memref<128x128xbf16, #tpu.memory_space<vmem>>, %arg3: memref<1x128xf32, #tpu.memory_space<vmem>>, %arg4: memref<1x128xf32, #tpu.memory_space<vmem>>, %arg5: memref<64x128xf32, #tpu.memory_space<vmem>>, %arg6: memref<64x128xf32, #tpu.memory_space<vmem>>) attributes {dimension_semantics = [#tpu.dimension_semantics<parallel>], iteration_bounds = array<i64: 2>, scalar_prefetch = 0 : i64, scratch_operands = 0 : i64, tpu.core_type = #tpu.core_type<tc>, window_params = [{transform_indices = @transform_0, window_bounds = array<i64: 64, 128>}, {pipeline_mode = #tpu.pipeline_mode<synchronous>, transform_indices = @transform_1, window_bounds = array<i64: 128, 128>}, {pipeline_mode = #tpu.pipeline_mode<synchronous>, transform_indices = @transform_2, window_bounds = array<i64: 1, 128>}, {pipeline_mode = #tpu.pipeline_mode<synchronous>, transform_indices = @transform_3, window_bounds = array<i64: 1, 128>}, {transform_indices = @transform_4, window_bounds = array<i64: 64, 128>}, {transform_indices = @transform_5, window_bounds = array<i64: 64, 128>}]} {
    %c0 = arith.constant 0 : index
    %c0_0 = arith.constant 0 : index
    %0 = vector.load %arg1[%c0, %c0_0] : memref<64x128xbf16, #tpu.memory_space<vmem>>, vector<64x128xbf16>
    %c0_1 = arith.constant 0 : index
    %c0_2 = arith.constant 0 : index
    %1 = vector.load %arg2[%c0_1, %c0_2] : memref<128x128xbf16, #tpu.memory_space<vmem>>, vector<128x128xbf16>
    %cst = arith.constant dense<0.000000e+00> : vector<64x128xf32>
    %2 = tpu.matmul %0, %1, %cst {dimension_numbers = #tpu.dot_dimension_numbers<[1], [0], [0], [1], [0, 0, 1, 1], [], []>} : vector<64x128xbf16>, vector<128x128xbf16>, vector<64x128xf32> -> vector<64x128xf32>
    %c0_3 = arith.constant 0 : index
    %c0_4 = arith.constant 0 : index
    %3 = vector.load %arg3[%c0_3, %c0_4] : memref<1x128xf32, #tpu.memory_space<vmem>>, vector<1x128xf32>
    %4 = vector.broadcast %3 : vector<1x128xf32> to vector<64x128xf32>
    %5 = arith.mulf %2, %4 : vector<64x128xf32>
    %c0_5 = arith.constant 0 : index
    %c0_6 = arith.constant 0 : index
    %6 = vector.load %arg4[%c0_5, %c0_6] : memref<1x128xf32, #tpu.memory_space<vmem>>, vector<1x128xf32>
    %7 = vector.broadcast %6 : vector<1x128xf32> to vector<64x128xf32>
    %8 = arith.addf %5, %7 : vector<64x128xf32>
    %9 = tpu.iota {dimensions = array<i32: 1>} : vector<64x128xi32>
    %c4_i32 = arith.constant 4 : i32
    %10 = vector.broadcast %c4_i32 : i32 to vector<64x128xi32>
    %11 = arith.cmpi slt, %9, %10 : vector<64x128xi32>
    %c0_7 = arith.constant 0 : index
    %c0_8 = arith.constant 0 : index
    %12 = vector.load %arg5[%c0_7, %c0_8] : memref<64x128xf32, #tpu.memory_space<vmem>>, vector<64x128xf32>
    %cst_9 = arith.constant 1.000000e+00 : f32
    %13 = vector.broadcast %cst_9 : f32 to vector<64x128xf32>
    %14 = arith.select %11, %12, %13 : vector<64x128xi1>, vector<64x128xf32>
    %15 = arith.mulf %8, %14 : vector<64x128xf32>
    %c0_10 = arith.constant 0 : index
    %c0_11 = arith.constant 0 : index
    %16 = vector.load %arg6[%c0_10, %c0_11] : memref<64x128xf32, #tpu.memory_space<vmem>>, vector<64x128xf32>
    tpu.vector_store %arg6[%c0_10, %c0_11], %15 {strides = array<i32>} : memref<64x128xf32, #tpu.memory_space<vmem>>, vector<64x128xf32>,
    return
  }
  func.func @transform_0(%arg0: i32) -> (i32, i32) {
    %c0_i32 = arith.constant 0 : i32
    %c0_i32_0 = arith.constant 0 : i32
    return %arg0, %c0_i32 : i32, i32
  }
  func.func @transform_1(%arg0: i32) -> (i32, i32) {
    %c0_i32 = arith.constant 0 : i32
    %c0_i32_0 = arith.constant 0 : i32
    %c0_i32_1 = arith.constant 0 : i32
    return %c0_i32, %c0_i32_0 : i32, i32
  }
  func.func @transform_2(%arg0: i32) -> (i32, i32) {
    %c0_i32 = arith.constant 0 : i32
    %c0_i32_0 = arith.constant 0 : i32
    %c0_i32_1 = arith.constant 0 : i32
    return %c0_i32, %c0_i32_0 : i32, i32
  }
  func.func @transform_3(%arg0: i32) -> (i32, i32) {
    %c0_i32 = arith.constant 0 : i32
    %c0_i32_0 = arith.constant 0 : i32
    %c0_i32_1 = arith.constant 0 : i32
    return %c0_i32, %c0_i32_0 : i32, i32
  }
  func.func @transform_4(%arg0: i32) -> (i32, i32) {
    %c0_i32 = arith.constant 0 : i32
    %c0_i32_0 = arith.constant 0 : i32
    return %arg0, %c0_i32 : i32, i32
  }
  func.func @transform_5(%arg0: i32) -> (i32, i32) {
    %c0_i32 = arith.constant 0 : i32
    %c0_i32_0 = arith.constant 0 : i32
    return %arg0, %c0_i32 : i32, i32
  }
}

module attributes {stable_mosaic.version = 11 : i64} {
  func.func @_conv_kernel(%arg0: i32, %arg1: memref<64x128xbf16, #tpu.memory_space<vmem>>, %arg2: memref<128x128xbf16, #tpu.memory_space<vmem>>, %arg3: memref<1x128xf32, #tpu.memory_space<vmem>>, %arg4: memref<1x128xf32, #tpu.memory_space<vmem>>, %arg5: memref<64x128xf32, #tpu.memory_space<vmem>>) attributes {dimension_semantics = [#tpu.dimension_semantics<parallel>], iteration_bounds = array<i64: 2>, scalar_prefetch = 0 : i64, scratch_operands = 0 : i64, tpu.core_type = #tpu.core_type<tc>, window_params = [{transform_indices = @transform_0, window_bounds = array<i64: 64, 128>}, {pipeline_mode = #tpu.pipeline_mode<synchronous>, transform_indices = @transform_1, window_bounds = array<i64: 128, 128>}, {pipeline_mode = #tpu.pipeline_mode<synchronous>, transform_indices = @transform_2, window_bounds = array<i64: 1, 128>}, {pipeline_mode = #tpu.pipeline_mode<synchronous>, transform_indices = @transform_3, window_bounds = array<i64: 1, 128>}, {transform_indices = @transform_4, window_bounds = array<i64: 64, 128>}]} {
    %c0 = arith.constant 0 : index
    %c0_0 = arith.constant 0 : index
    %0 = vector.load %arg1[%c0, %c0_0] : memref<64x128xbf16, #tpu.memory_space<vmem>>, vector<64x128xbf16>
    %c0_1 = arith.constant 0 : index
    %c0_2 = arith.constant 0 : index
    %1 = vector.load %arg2[%c0_1, %c0_2] : memref<128x128xbf16, #tpu.memory_space<vmem>>, vector<128x128xbf16>
    %cst = arith.constant dense<0.000000e+00> : vector<64x128xf32>
    %2 = tpu.matmul %0, %1, %cst {dimension_numbers = #tpu.dot_dimension_numbers<[1], [0], [0], [1], [0, 0, 1, 1], [], []>} : vector<64x128xbf16>, vector<128x128xbf16>, vector<64x128xf32> -> vector<64x128xf32>
    %c0_3 = arith.constant 0 : index
    %c0_4 = arith.constant 0 : index
    %3 = vector.load %arg3[%c0_3, %c0_4] : memref<1x128xf32, #tpu.memory_space<vmem>>, vector<1x128xf32>
    %4 = vector.broadcast %3 : vector<1x128xf32> to vector<64x128xf32>
    %5 = arith.mulf %2, %4 : vector<64x128xf32>
    %c0_5 = arith.constant 0 : index
    %c0_6 = arith.constant 0 : index
    %6 = vector.load %arg4[%c0_5, %c0_6] : memref<1x128xf32, #tpu.memory_space<vmem>>, vector<1x128xf32>
    %7 = vector.broadcast %6 : vector<1x128xf32> to vector<64x128xf32>
    %8 = arith.addf %5, %7 : vector<64x128xf32>
    %c0_7 = arith.constant 0 : index
    %c0_8 = arith.constant 0 : index
    %9 = vector.load %arg5[%c0_7, %c0_8] : memref<64x128xf32, #tpu.memory_space<vmem>>, vector<64x128xf32>
    tpu.vector_store %arg5[%c0_7, %c0_8], %8 {strides = array<i32>} : memref<64x128xf32, #tpu.memory_space<vmem>>, vector<64x128xf32>,
    return
  }
  func.func @transform_0(%arg0: i32) -> (i32, i32) {
    %c0_i32 = arith.constant 0 : i32
    %c0_i32_0 = arith.constant 0 : i32
    return %arg0, %c0_i32 : i32, i32
  }
  func.func @transform_1(%arg0: i32) -> (i32, i32) {
    %c0_i32 = arith.constant 0 : i32
    %c0_i32_0 = arith.constant 0 : i32
    %c0_i32_1 = arith.constant 0 : i32
    return %c0_i32, %c0_i32_0 : i32, i32
  }
  func.func @transform_2(%arg0: i32) -> (i32, i32) {
    %c0_i32 = arith.constant 0 : i32
    %c0_i32_0 = arith.constant 0 : i32
    %c0_i32_1 = arith.constant 0 : i32
    return %c0_i32, %c0_i32_0 : i32, i32
  }
  func.func @transform_3(%arg0: i32) -> (i32, i32) {
    %c0_i32 = arith.constant 0 : i32
    %c0_i32_0 = arith.constant 0 : i32
    %c0_i32_1 = arith.constant 0 : i32
    return %c0_i32, %c0_i32_0 : i32, i32
  }
  func.func @transform_4(%arg0: i32) -> (i32, i32) {
    %c0_i32 = arith.constant 0 : i32
    %c0_i32_0 = arith.constant 0 : i32
    return %arg0, %c0_i32 : i32, i32
  }
}

module attributes {stable_mosaic.version = 11 : i64} {
  func.func @_conv3_concat_kernel(%arg0: i32, %arg1: memref<256x128xbf16, #tpu.memory_space<vmem>>, %arg2: memref<128x128xbf16, #tpu.memory_space<vmem>>, %arg3: memref<1x128xf32, #tpu.memory_space<vmem>>, %arg4: memref<1x128xf32, #tpu.memory_space<vmem>>, %arg5: memref<256x128xbf16, #tpu.memory_space<vmem>>, %arg6: memref<128x128xbf16, #tpu.memory_space<vmem>>, %arg7: memref<1x128xf32, #tpu.memory_space<vmem>>, %arg8: memref<1x128xf32, #tpu.memory_space<vmem>>, %arg9: memref<256x128xf32, #tpu.memory_space<vmem>>, %arg10: memref<256x128xbf16, #tpu.memory_space<vmem>>, %arg11: memref<128x128xbf16, #tpu.memory_space<vmem>>, %arg12: memref<1x128xf32, #tpu.memory_space<vmem>>, %arg13: memref<1x128xf32, #tpu.memory_space<vmem>>, %arg14: memref<256x128xf32, #tpu.memory_space<vmem>>) attributes {dimension_semantics = [#tpu.dimension_semantics<parallel>], iteration_bounds = array<i64: 2>, scalar_prefetch = 0 : i64, scratch_operands = 0 : i64, tpu.core_type = #tpu.core_type<tc>, window_params = [{transform_indices = @transform_0, window_bounds = array<i64: 256, 128>}, {pipeline_mode = #tpu.pipeline_mode<synchronous>, transform_indices = @transform_1, window_bounds = array<i64: 128, 128>}, {pipeline_mode = #tpu.pipeline_mode<synchronous>, transform_indices = @transform_2, window_bounds = array<i64: 1, 128>}, {pipeline_mode = #tpu.pipeline_mode<synchronous>, transform_indices = @transform_3, window_bounds = array<i64: 1, 128>}, {transform_indices = @transform_4, window_bounds = array<i64: 256, 128>}, {pipeline_mode = #tpu.pipeline_mode<synchronous>, transform_indices = @transform_5, window_bounds = array<i64: 128, 128>}, {pipeline_mode = #tpu.pipeline_mode<synchronous>, transform_indices = @transform_6, window_bounds = array<i64: 1, 128>}, {pipeline_mode = #tpu.pipeline_mode<synchronous>, transform_indices = @transform_7, window_bounds = array<i64: 1, 128>}, {transform_indices = @transform_8, window_bounds = array<i64: 256, 128>}, {transform_indices = @transform_9, window_bounds = array<i64: 256, 128>}, {pipeline_mode = #tpu.pipeline_mode<synchronous>, transform_indices = @transform_10, window_bounds = array<i64: 128, 128>}, {pipeline_mode = #tpu.pipeline_mode<synchronous>, transform_indices = @transform_11, window_bounds = array<i64: 1, 128>}, {pipeline_mode = #tpu.pipeline_mode<synchronous>, transform_indices = @transform_12, window_bounds = array<i64: 1, 128>}, {transform_indices = @transform_13, window_bounds = array<i64: 256, 128>}]} {
    %c0 = arith.constant 0 : index
    %c0_0 = arith.constant 0 : index
    %0 = vector.load %arg1[%c0, %c0_0] : memref<256x128xbf16, #tpu.memory_space<vmem>>, vector<256x128xbf16>
    %c0_1 = arith.constant 0 : index
    %c0_2 = arith.constant 0 : index
    %1 = vector.load %arg2[%c0_1, %c0_2] : memref<128x128xbf16, #tpu.memory_space<vmem>>, vector<128x128xbf16>
    %cst = arith.constant dense<0.000000e+00> : vector<256x128xf32>
    %2 = tpu.matmul %0, %1, %cst {dimension_numbers = #tpu.dot_dimension_numbers<[1], [0], [0], [1], [0, 0, 1, 1], [], []>} : vector<256x128xbf16>, vector<128x128xbf16>, vector<256x128xf32> -> vector<256x128xf32>
    %c0_3 = arith.constant 0 : index
    %c0_4 = arith.constant 0 : index
    %3 = vector.load %arg5[%c0_3, %c0_4] : memref<256x128xbf16, #tpu.memory_space<vmem>>, vector<256x128xbf16>
    %c0_5 = arith.constant 0 : index
    %c0_6 = arith.constant 0 : index
    %4 = vector.load %arg6[%c0_5, %c0_6] : memref<128x128xbf16, #tpu.memory_space<vmem>>, vector<128x128xbf16>
    %cst_7 = arith.constant dense<0.000000e+00> : vector<256x128xf32>
    %5 = tpu.matmul %3, %4, %cst_7 {dimension_numbers = #tpu.dot_dimension_numbers<[1], [0], [0], [1], [0, 0, 1, 1], [], []>} : vector<256x128xbf16>, vector<128x128xbf16>, vector<256x128xf32> -> vector<256x128xf32>
    %c0_8 = arith.constant 0 : index
    %c0_9 = arith.constant 0 : index
    %6 = vector.load %arg10[%c0_8, %c0_9] : memref<256x128xbf16, #tpu.memory_space<vmem>>, vector<256x128xbf16>
    %c0_10 = arith.constant 0 : index
    %c0_11 = arith.constant 0 : index
    %7 = vector.load %arg11[%c0_10, %c0_11] : memref<128x128xbf16, #tpu.memory_space<vmem>>, vector<128x128xbf16>
    %cst_12 = arith.constant dense<0.000000e+00> : vector<256x128xf32>
    %8 = tpu.matmul %6, %7, %cst_12 {dimension_numbers = #tpu.dot_dimension_numbers<[1], [0], [0], [1], [0, 0, 1, 1], [], []>} : vector<256x128xbf16>, vector<128x128xbf16>, vector<256x128xf32> -> vector<256x128xf32>
    %c0_13 = arith.constant 0 : index
    %c0_14 = arith.constant 0 : index
    %9 = vector.load %arg3[%c0_13, %c0_14] : memref<1x128xf32, #tpu.memory_space<vmem>>, vector<1x128xf32>
    %10 = vector.broadcast %9 : vector<1x128xf32> to vector<256x128xf32>
    %11 = arith.mulf %2, %10 : vector<256x128xf32>
    %c0_15 = arith.constant 0 : index
    %c0_16 = arith.constant 0 : index
    %12 = vector.load %arg4[%c0_15, %c0_16] : memref<1x128xf32, #tpu.memory_space<vmem>>, vector<1x128xf32>
    %13 = vector.broadcast %12 : vector<1x128xf32> to vector<256x128xf32>
    %14 = arith.addf %11, %13 : vector<256x128xf32>
    %c0_17 = arith.constant 0 : index
    %c0_18 = arith.constant 0 : index
    %15 = vector.load %arg7[%c0_17, %c0_18] : memref<1x128xf32, #tpu.memory_space<vmem>>, vector<1x128xf32>
    %16 = vector.broadcast %15 : vector<1x128xf32> to vector<256x128xf32>
    %17 = arith.mulf %5, %16 : vector<256x128xf32>
    %c0_19 = arith.constant 0 : index
    %c0_20 = arith.constant 0 : index
    %18 = vector.load %arg8[%c0_19, %c0_20] : memref<1x128xf32, #tpu.memory_space<vmem>>, vector<1x128xf32>
    %19 = vector.broadcast %18 : vector<1x128xf32> to vector<256x128xf32>
    %20 = arith.addf %17, %19 : vector<256x128xf32>
    %c0_21 = arith.constant 0 : index
    %c0_22 = arith.constant 0 : index
    %21 = vector.load %arg12[%c0_21, %c0_22] : memref<1x128xf32, #tpu.memory_space<vmem>>, vector<1x128xf32>
    %22 = vector.broadcast %21 : vector<1x128xf32> to vector<256x128xf32>
    %23 = arith.mulf %8, %22 : vector<256x128xf32>
    %c0_23 = arith.constant 0 : index
    %c0_24 = arith.constant 0 : index
    %24 = vector.load %arg13[%c0_23, %c0_24] : memref<1x128xf32, #tpu.memory_space<vmem>>, vector<1x128xf32>
    %25 = vector.broadcast %24 : vector<1x128xf32> to vector<256x128xf32>
    %26 = arith.addf %23, %25 : vector<256x128xf32>
    %27 = arith.mulf %14, %20 : vector<256x128xf32>
    %c0_25 = arith.constant 0 : index
    %c0_26 = arith.constant 0 : index
    %28 = vector.load %arg9[%c0_25, %c0_26] : memref<256x128xf32, #tpu.memory_space<vmem>>, vector<256x128xf32>
    %29 = arith.mulf %27, %28 : vector<256x128xf32>
    %30 = arith.addf %29, %26 : vector<256x128xf32>
    %c0_27 = arith.constant 0 : index
    %c0_28 = arith.constant 0 : index
    %31 = vector.load %arg14[%c0_27, %c0_28] : memref<256x128xf32, #tpu.memory_space<vmem>>, vector<256x128xf32>
    tpu.vector_store %arg14[%c0_27, %c0_28], %30 {strides = array<i32>} : memref<256x128xf32, #tpu.memory_space<vmem>>, vector<256x128xf32>,
    return
  }
  func.func @transform_0(%arg0: i32) -> (i32, i32) {
    %c0_i32 = arith.constant 0 : i32
    %c0_i32_0 = arith.constant 0 : i32
    return %arg0, %c0_i32 : i32, i32
  }
  func.func @transform_1(%arg0: i32) -> (i32, i32) {
    %c0_i32 = arith.constant 0 : i32
    %c0_i32_0 = arith.constant 0 : i32
    %c0_i32_1 = arith.constant 0 : i32
    return %c0_i32, %c0_i32_0 : i32, i32
  }
  func.func @transform_2(%arg0: i32) -> (i32, i32) {
    %c0_i32 = arith.constant 0 : i32
    %c0_i32_0 = arith.constant 0 : i32
    %c0_i32_1 = arith.constant 0 : i32
    return %c0_i32, %c0_i32_0 : i32, i32
  }
  func.func @transform_3(%arg0: i32) -> (i32, i32) {
    %c0_i32 = arith.constant 0 : i32
    %c0_i32_0 = arith.constant 0 : i32
    %c0_i32_1 = arith.constant 0 : i32
    return %c0_i32, %c0_i32_0 : i32, i32
  }
  func.func @transform_4(%arg0: i32) -> (i32, i32) {
    %c0_i32 = arith.constant 0 : i32
    %c0_i32_0 = arith.constant 0 : i32
    return %arg0, %c0_i32 : i32, i32
  }
  func.func @transform_5(%arg0: i32) -> (i32, i32) {
    %c0_i32 = arith.constant 0 : i32
    %c0_i32_0 = arith.constant 0 : i32
    %c0_i32_1 = arith.constant 0 : i32
    return %c0_i32, %c0_i32_0 : i32, i32
  }
  func.func @transform_6(%arg0: i32) -> (i32, i32) {
    %c0_i32 = arith.constant 0 : i32
    %c0_i32_0 = arith.constant 0 : i32
    %c0_i32_1 = arith.constant 0 : i32
    return %c0_i32, %c0_i32_0 : i32, i32
  }
  func.func @transform_7(%arg0: i32) -> (i32, i32) {
    %c0_i32 = arith.constant 0 : i32
    %c0_i32_0 = arith.constant 0 : i32
    %c0_i32_1 = arith.constant 0 : i32
    return %c0_i32, %c0_i32_0 : i32, i32
  }
  func.func @transform_8(%arg0: i32) -> (i32, i32) {
    %c0_i32 = arith.constant 0 : i32
    %c0_i32_0 = arith.constant 0 : i32
    return %arg0, %c0_i32 : i32, i32
  }
  func.func @transform_9(%arg0: i32) -> (i32, i32) {
    %c0_i32 = arith.constant 0 : i32
    %c0_i32_0 = arith.constant 0 : i32
    return %arg0, %c0_i32 : i32, i32
  }
  func.func @transform_10(%arg0: i32) -> (i32, i32) {
    %c0_i32 = arith.constant 0 : i32
    %c0_i32_0 = arith.constant 0 : i32
    %c0_i32_1 = arith.constant 0 : i32
    return %c0_i32, %c0_i32_0 : i32, i32
  }
  func.func @transform_11(%arg0: i32) -> (i32, i32) {
    %c0_i32 = arith.constant 0 : i32
    %c0_i32_0 = arith.constant 0 : i32
    %c0_i32_1 = arith.constant 0 : i32
    return %c0_i32, %c0_i32_0 : i32, i32
  }
  func.func @transform_12(%arg0: i32) -> (i32, i32) {
    %c0_i32 = arith.constant 0 : i32
    %c0_i32_0 = arith.constant 0 : i32
    %c0_i32_1 = arith.constant 0 : i32
    return %c0_i32, %c0_i32_0 : i32, i32
  }
  func.func @transform_13(%arg0: i32) -> (i32, i32) {
    %c0_i32 = arith.constant 0 : i32
    %c0_i32_0 = arith.constant 0 : i32
    return %arg0, %c0_i32 : i32, i32
  }
}

module attributes {stable_mosaic.version = 11 : i64} {
  func.func @_conv_head_kernel(%arg0: i32, %arg1: memref<256x128xbf16, #tpu.memory_space<vmem>>, %arg2: memref<128x128xbf16, #tpu.memory_space<vmem>>, %arg3: memref<1x128xf32, #tpu.memory_space<vmem>>, %arg4: memref<1x128xf32, #tpu.memory_space<vmem>>, %arg5: memref<1x128xf32, #tpu.memory_space<vmem>>, %arg6: memref<1x1xf32, #tpu.memory_space<vmem>>, %arg7: memref<256x128xf32, #tpu.memory_space<vmem>>, %arg8: memref<256x1xf32, #tpu.memory_space<vmem>>) attributes {dimension_semantics = [#tpu.dimension_semantics<parallel>], iteration_bounds = array<i64: 2>, scalar_prefetch = 0 : i64, scratch_operands = 0 : i64, tpu.core_type = #tpu.core_type<tc>, window_params = [{transform_indices = @transform_0, window_bounds = array<i64: 256, 128>}, {pipeline_mode = #tpu.pipeline_mode<synchronous>, transform_indices = @transform_1, window_bounds = array<i64: 128, 128>}, {pipeline_mode = #tpu.pipeline_mode<synchronous>, transform_indices = @transform_2, window_bounds = array<i64: 1, 128>}, {pipeline_mode = #tpu.pipeline_mode<synchronous>, transform_indices = @transform_3, window_bounds = array<i64: 1, 128>}, {pipeline_mode = #tpu.pipeline_mode<synchronous>, transform_indices = @transform_4, window_bounds = array<i64: 1, 128>}, {pipeline_mode = #tpu.pipeline_mode<synchronous>, transform_indices = @transform_5, window_bounds = array<i64: 1, 1>}, {transform_indices = @transform_6, window_bounds = array<i64: 256, 128>}, {transform_indices = @transform_7, window_bounds = array<i64: 256, 1>}]} {
    %c0 = arith.constant 0 : index
    %c0_0 = arith.constant 0 : index
    %0 = vector.load %arg1[%c0, %c0_0] : memref<256x128xbf16, #tpu.memory_space<vmem>>, vector<256x128xbf16>
    %c0_1 = arith.constant 0 : index
    %c0_2 = arith.constant 0 : index
    %1 = vector.load %arg2[%c0_1, %c0_2] : memref<128x128xbf16, #tpu.memory_space<vmem>>, vector<128x128xbf16>
    %cst = arith.constant dense<0.000000e+00> : vector<256x128xf32>
    %2 = tpu.matmul %0, %1, %cst {dimension_numbers = #tpu.dot_dimension_numbers<[1], [0], [0], [1], [0, 0, 1, 1], [], []>} : vector<256x128xbf16>, vector<128x128xbf16>, vector<256x128xf32> -> vector<256x128xf32>
    %c0_3 = arith.constant 0 : index
    %c0_4 = arith.constant 0 : index
    %3 = vector.load %arg3[%c0_3, %c0_4] : memref<1x128xf32, #tpu.memory_space<vmem>>, vector<1x128xf32>
    %4 = vector.broadcast %3 : vector<1x128xf32> to vector<256x128xf32>
    %5 = arith.mulf %2, %4 : vector<256x128xf32>
    %c0_5 = arith.constant 0 : index
    %c0_6 = arith.constant 0 : index
    %6 = vector.load %arg4[%c0_5, %c0_6] : memref<1x128xf32, #tpu.memory_space<vmem>>, vector<1x128xf32>
    %7 = vector.broadcast %6 : vector<1x128xf32> to vector<256x128xf32>
    %8 = arith.addf %5, %7 : vector<256x128xf32>
    %c0_7 = arith.constant 0 : index
    %c0_8 = arith.constant 0 : index
    %9 = vector.load %arg7[%c0_7, %c0_8] : memref<256x128xf32, #tpu.memory_space<vmem>>, vector<256x128xf32>
    tpu.vector_store %arg7[%c0_7, %c0_8], %8 {strides = array<i32>} : memref<256x128xf32, #tpu.memory_space<vmem>>, vector<256x128xf32>,
    %c0_9 = arith.constant 0 : index
    %c0_10 = arith.constant 0 : index
    %10 = vector.load %arg5[%c0_9, %c0_10] : memref<1x128xf32, #tpu.memory_space<vmem>>, vector<1x128xf32>
    %11 = vector.broadcast %10 : vector<1x128xf32> to vector<256x128xf32>
    %12 = arith.mulf %8, %11 : vector<256x128xf32>
    %cst_11 = arith.constant dense<0.000000e+00> : vector<256xf32>
    %13 = vector.multi_reduction <add>, %12, %cst_11 [1] : vector<256x128xf32> to vector<256xf32>
    %14 = vector.shape_cast %13 : vector<256xf32> to vector<256x1xf32>
    %c0_12 = arith.constant 0 : index
    %c0_13 = arith.constant 0 : index
    %15 = vector.load %arg6[%c0_12, %c0_13] : memref<1x1xf32, #tpu.memory_space<vmem>>, vector<1x1xf32>
    %16 = vector.broadcast %15 : vector<1x1xf32> to vector<256x1xf32>
    %17 = arith.addf %14, %16 : vector<256x1xf32>
    %c0_14 = arith.constant 0 : index
    %c0_15 = arith.constant 0 : index
    %18 = vector.load %arg8[%c0_14, %c0_15] : memref<256x1xf32, #tpu.memory_space<vmem>>, vector<256x1xf32>
    tpu.vector_store %arg8[%c0_14, %c0_15], %17 {strides = array<i32>} : memref<256x1xf32, #tpu.memory_space<vmem>>, vector<256x1xf32>,
    return
  }
  func.func @transform_0(%arg0: i32) -> (i32, i32) {
    %c0_i32 = arith.constant 0 : i32
    %c0_i32_0 = arith.constant 0 : i32
    return %arg0, %c0_i32 : i32, i32
  }
  func.func @transform_1(%arg0: i32) -> (i32, i32) {
    %c0_i32 = arith.constant 0 : i32
    %c0_i32_0 = arith.constant 0 : i32
    %c0_i32_1 = arith.constant 0 : i32
    return %c0_i32, %c0_i32_0 : i32, i32
  }
  func.func @transform_2(%arg0: i32) -> (i32, i32) {
    %c0_i32 = arith.constant 0 : i32
    %c0_i32_0 = arith.constant 0 : i32
    %c0_i32_1 = arith.constant 0 : i32
    return %c0_i32, %c0_i32_0 : i32, i32
  }
  func.func @transform_3(%arg0: i32) -> (i32, i32) {
    %c0_i32 = arith.constant 0 : i32
    %c0_i32_0 = arith.constant 0 : i32
    %c0_i32_1 = arith.constant 0 : i32
    return %c0_i32, %c0_i32_0 : i32, i32
  }
  func.func @transform_4(%arg0: i32) -> (i32, i32) {
    %c0_i32 = arith.constant 0 : i32
    %c0_i32_0 = arith.constant 0 : i32
    %c0_i32_1 = arith.constant 0 : i32
    return %c0_i32, %c0_i32_0 : i32, i32
  }
  func.func @transform_5(%arg0: i32) -> (i32, i32) {
    %c0_i32 = arith.constant 0 : i32
    %c0_i32_0 = arith.constant 0 : i32
    %c0_i32_1 = arith.constant 0 : i32
    return %c0_i32, %c0_i32_0 : i32, i32
  }
  func.func @transform_6(%arg0: i32) -> (i32, i32) {
    %c0_i32 = arith.constant 0 : i32
    %c0_i32_0 = arith.constant 0 : i32
    return %arg0, %c0_i32 : i32, i32
  }
  func.func @transform_7(%arg0: i32) -> (i32, i32) {
    %c0_i32 = arith.constant 0 : i32
    %c0_i32_0 = arith.constant 0 : i32
    return %arg0, %c0_i32 : i32, i32
  }
}

module attributes {stable_mosaic.version = 11 : i64} {
  func.func @_conv_kernel(%arg0: i32, %arg1: memref<256x128xbf16, #tpu.memory_space<vmem>>, %arg2: memref<128x128xbf16, #tpu.memory_space<vmem>>, %arg3: memref<1x128xf32, #tpu.memory_space<vmem>>, %arg4: memref<1x128xf32, #tpu.memory_space<vmem>>, %arg5: memref<256x128xf32, #tpu.memory_space<vmem>>) attributes {dimension_semantics = [#tpu.dimension_semantics<parallel>], iteration_bounds = array<i64: 2>, scalar_prefetch = 0 : i64, scratch_operands = 0 : i64, tpu.core_type = #tpu.core_type<tc>, window_params = [{transform_indices = @transform_0, window_bounds = array<i64: 256, 128>}, {pipeline_mode = #tpu.pipeline_mode<synchronous>, transform_indices = @transform_1, window_bounds = array<i64: 128, 128>}, {pipeline_mode = #tpu.pipeline_mode<synchronous>, transform_indices = @transform_2, window_bounds = array<i64: 1, 128>}, {pipeline_mode = #tpu.pipeline_mode<synchronous>, transform_indices = @transform_3, window_bounds = array<i64: 1, 128>}, {transform_indices = @transform_4, window_bounds = array<i64: 256, 128>}]} {
    %c0 = arith.constant 0 : index
    %c0_0 = arith.constant 0 : index
    %0 = vector.load %arg1[%c0, %c0_0] : memref<256x128xbf16, #tpu.memory_space<vmem>>, vector<256x128xbf16>
    %c0_1 = arith.constant 0 : index
    %c0_2 = arith.constant 0 : index
    %1 = vector.load %arg2[%c0_1, %c0_2] : memref<128x128xbf16, #tpu.memory_space<vmem>>, vector<128x128xbf16>
    %cst = arith.constant dense<0.000000e+00> : vector<256x128xf32>
    %2 = tpu.matmul %0, %1, %cst {dimension_numbers = #tpu.dot_dimension_numbers<[1], [0], [0], [1], [0, 0, 1, 1], [], []>} : vector<256x128xbf16>, vector<128x128xbf16>, vector<256x128xf32> -> vector<256x128xf32>
    %c0_3 = arith.constant 0 : index
    %c0_4 = arith.constant 0 : index
    %3 = vector.load %arg3[%c0_3, %c0_4] : memref<1x128xf32, #tpu.memory_space<vmem>>, vector<1x128xf32>
    %4 = vector.broadcast %3 : vector<1x128xf32> to vector<256x128xf32>
    %5 = arith.mulf %2, %4 : vector<256x128xf32>
    %c0_5 = arith.constant 0 : index
    %c0_6 = arith.constant 0 : index
    %6 = vector.load %arg4[%c0_5, %c0_6] : memref<1x128xf32, #tpu.memory_space<vmem>>, vector<1x128xf32>
    %7 = vector.broadcast %6 : vector<1x128xf32> to vector<256x128xf32>
    %8 = arith.addf %5, %7 : vector<256x128xf32>
    %c0_7 = arith.constant 0 : index
    %c0_8 = arith.constant 0 : index
    %9 = vector.load %arg5[%c0_7, %c0_8] : memref<256x128xf32, #tpu.memory_space<vmem>>, vector<256x128xf32>
    tpu.vector_store %arg5[%c0_7, %c0_8], %8 {strides = array<i32>} : memref<256x128xf32, #tpu.memory_space<vmem>>, vector<256x128xf32>,
    return
  }
  func.func @transform_0(%arg0: i32) -> (i32, i32) {
    %c0_i32 = arith.constant 0 : i32
    %c0_i32_0 = arith.constant 0 : i32
    return %arg0, %c0_i32 : i32, i32
  }
  func.func @transform_1(%arg0: i32) -> (i32, i32) {
    %c0_i32 = arith.constant 0 : i32
    %c0_i32_0 = arith.constant 0 : i32
    %c0_i32_1 = arith.constant 0 : i32
    return %c0_i32, %c0_i32_0 : i32, i32
  }
  func.func @transform_2(%arg0: i32) -> (i32, i32) {
    %c0_i32 = arith.constant 0 : i32
    %c0_i32_0 = arith.constant 0 : i32
    %c0_i32_1 = arith.constant 0 : i32
    return %c0_i32, %c0_i32_0 : i32, i32
  }
  func.func @transform_3(%arg0: i32) -> (i32, i32) {
    %c0_i32 = arith.constant 0 : i32
    %c0_i32_0 = arith.constant 0 : i32
    %c0_i32_1 = arith.constant 0 : i32
    return %c0_i32, %c0_i32_0 : i32, i32
  }
  func.func @transform_4(%arg0: i32) -> (i32, i32) {
    %c0_i32 = arith.constant 0 : i32
    %c0_i32_0 = arith.constant 0 : i32
    return %arg0, %c0_i32 : i32, i32
  }
}

</mosaic_0001>

<llo_original>
// kernel: ppd_forward.5
$region0: #{ppd_forward.5}
  #allocation0 [shape = 'u32[]', space=smem, size = 0x4, offset = 0x4, fixed_abs, tag = 'smem constant byte address 0x4 - core index']
  #allocation1 [shape = 'u32[72,128]{1,0:T(1,128)}', space=vmem, size = 0x9000, scoped, tag = 'internal scratch']
  %s0 = inlined_call_operand.vmem [shape: bf16[128,128], index: 0, kind: input, shape index: {}]
  %s1 = inlined_call_operand.vmem [shape: bf16[128,128], index: 1, kind: input, shape index: {}]
  %s2 = inlined_call_operand.vmem [shape: f32[1,128], index: 2, kind: input, shape index: {}]
  %s3 = inlined_call_operand.vmem [shape: f32[1,128], index: 3, kind: input, shape index: {}]
  %s4 = inlined_call_operand.vmem [shape: f32[128,128], index: 4, kind: input, shape index: {}]
  %s5 = inlined_call_operand.vmem [shape: f32[128,128], index: 5, kind: output, shape index: {}]
  %s6 = sld [smem:[#allocation0]]
  $region53: #{ppd_forward.5} parent=0
    _
  %s8 = ssub.s32 1, %s6
  %s9 = scalar_select 0, %s8, %s6
  loop: start=0, step=1, limit=4
  $region2: #{ppd_forward.5} parent=0 // loop_pre_header
    _
  $region3: #{ppd_forward.5} parent=0 // loop_header
    %s11 = sphi 0, %s15
    %p12 = scmp.ge.s32.totalorder %s11, 4
    %s21 = sphi 0, %s23
    %s24 = sphi 0, %s21
    %s25 = sphi 0, %s24
    %s41 = sphi 0, %s25
    %s45 = sphi 0, %s45
    %s47 = sphi 0, %s45
    %s48 = sphi 0, %s47
    %s62 = sphi 0, %s48
    %s66 = sphi 0, %s66
    %s68 = sphi 0, %s66
    %s69 = sphi 0, %s68
    %s83 = sphi 0, %s69
    %s87 = sphi 0, %s87
    %s89 = sphi 0, %s87
    %s90 = sphi 0, %s89
    %s104 = sphi 0, %s90
    %s110 = sphi 0, %s112
    %s113 = sphi 0, %s110
    %s114 = sphi 0, %s113
    %s130 = sphi 0, %s114
    %s136 = sphi 0, %s138
    %s139 = sphi 0, %s136
    %s140 = sphi 0, %s139
    %s156 = sphi 0, %s140
  $region4: #{ppd_forward.5} parent=0 // loop_header_branch
    %14 = sbr.rel (%p12) target = $region8
  $region5: #{ppd_forward.5} parent=0 // loop_body
    %s16 = ssub.s32 %s11, 1
    %s17 = ssub.s32 %s11, 2
    %s18 = sadd.s32 %s11, 1
    %s19 = ssub.s32 %s11, %s18
    %p20 = scmp.eq.s32.totalorder %s19, 0
    %s22 = sadd.s32 %s21, 1
    %s23 = scalar_select %p20, %s21, %s22
    %p26 = pneg %p20
    %p27 = scmp.eq.s32.totalorder %s11, 1
    %p28 = por %p26, %p27
    %p29 = scmp.ne.s32.totalorder %s21, %s24
    %p30 = scmp.eq.s32.totalorder %s11, 0
    %p31 = por %p29, %p30
    %p32 = scmp.ne.s32.totalorder %s21, %s24
    %p33 = scmp.eq.s32.totalorder %s16, 1
    %p34 = por %p32, %p33
    %p35 = scmp.ne.s32.totalorder %s24, %s25
    %p36 = scmp.eq.s32.totalorder %s16, 0
    %p37 = por %p35, %p36
    %p38 = scmp.ne.s32.totalorder %s24, %s25
    %p39 = scmp.eq.s32.totalorder %s17, 1
    %p40 = por %p38, %p39
    %p42 = scmp.ne.s32.totalorder %s25, %s41
    %p43 = scmp.eq.s32.totalorder %s17, 0
    %p44 = por %p42, %p43
    %s46 = sadd.s32 %s45, 1
    %p49 = scmp.eq.s32.totalorder %s11, 1
    %p50 = scmp.ne.s32.totalorder %s45, %s47
    %p51 = scmp.eq.s32.totalorder %s11, 0
    %p52 = por %p50, %p51
    %p53 = scmp.ne.s32.totalorder %s45, %s47
    %p54 = scmp.eq.s32.totalorder %s16, 1
    %p55 = por %p53, %p54
    %p56 = scmp.ne.s32.totalorder %s47, %s48
    %p57 = scmp.eq.s32.totalorder %s16, 0
    %p58 = por %p56, %p57
    %p59 = scmp.ne.s32.totalorder %s47, %s48
    %p60 = scmp.eq.s32.totalorder %s17, 1
    %p61 = por %p59, %p60
    %p63 = scmp.ne.s32.totalorder %s48, %s62
    %p64 = scmp.eq.s32.totalorder %s17, 0
    %p65 = por %p63, %p64
    %s67 = sadd.s32 %s66, 1
    %p70 = scmp.eq.s32.totalorder %s11, 1
    %p71 = scmp.ne.s32.totalorder %s66, %s68
    %p72 = scmp.eq.s32.totalorder %s11, 0
    %p73 = por %p71, %p72
    %p74 = scmp.ne.s32.totalorder %s66, %s68
    %p75 = scmp.eq.s32.totalorder %s16, 1
    %p76 = por %p74, %p75
    %p77 = scmp.ne.s32.totalorder %s68, %s69
    %p78 = scmp.eq.s32.totalorder %s16, 0
    %p79 = por %p77, %p78
    %p80 = scmp.ne.s32.totalorder %s68, %s69
    %p81 = scmp.eq.s32.totalorder %s17, 1
    %p82 = por %p80, %p81
    %p84 = scmp.ne.s32.totalorder %s69, %s83
    %p85 = scmp.eq.s32.totalorder %s17, 0
    %p86 = por %p84, %p85
    %s88 = sadd.s32 %s87, 1
    %p91 = scmp.eq.s32.totalorder %s11, 1
    %p92 = scmp.ne.s32.totalorder %s87, %s89
    %p93 = scmp.eq.s32.totalorder %s11, 0
    %p94 = por %p92, %p93
    %p95 = scmp.ne.s32.totalorder %s87, %s89
    %p96 = scmp.eq.s32.totalorder %s16, 1
    %p97 = por %p95, %p96
    %p98 = scmp.ne.s32.totalorder %s89, %s90
    %p99 = scmp.eq.s32.totalorder %s16, 0
    %p100 = por %p98, %p99
    %p101 = scmp.ne.s32.totalorder %s89, %s90
    %p102 = scmp.eq.s32.totalorder %s17, 1
    %p103 = por %p101, %p102
    %p105 = scmp.ne.s32.totalorder %s90, %s104
    %p106 = scmp.eq.s32.totalorder %s17, 0
    %p107 = por %p105, %p106
    %s108 = ssub.s32 %s11, %s18
    %p109 = scmp.eq.s32.totalorder %s108, 0
    %s111 = sadd.s32 %s110, 1
    %s112 = scalar_select %p109, %s110, %s111
    %p115 = pneg %p109
    %p116 = scmp.eq.s32.totalorder %s11, 1
    %p117 = por %p115, %p116
    %p118 = scmp.ne.s32.totalorder %s110, %s113
    %p119 = scmp.eq.s32.totalorder %s11, 0
    %p120 = por %p118, %p119
    %p121 = scmp.ne.s32.totalorder %s110, %s113
    %p122 = scmp.eq.s32.totalorder %s16, 1
    %p123 = por %p121, %p122
    %p124 = scmp.ne.s32.totalorder %s113, %s114
    %p125 = scmp.eq.s32.totalorder %s16, 0
    %p126 = por %p124, %p125
    %p127 = scmp.ne.s32.totalorder %s113, %s114
    %p128 = scmp.eq.s32.totalorder %s17, 1
    %p129 = por %p127, %p128
    %p131 = scmp.ne.s32.totalorder %s114, %s130
    %p132 = scmp.eq.s32.totalorder %s17, 0
    %p133 = por %p131, %p132
    %s134 = ssub.s32 %s11, %s18
    %p135 = scmp.eq.s32.totalorder %s134, 0
    %s137 = sadd.s32 %s136, 1
    %s138 = scalar_select %p135, %s136, %s137
    %p141 = pneg %p135
    %p142 = scmp.eq.s32.totalorder %s11, 1
    %p143 = por %p141, %p142
    %p144 = scmp.ne.s32.totalorder %s136, %s139
    %p145 = scmp.eq.s32.totalorder %s11, 0
    %p146 = por %p144, %p145
    %p147 = scmp.ne.s32.totalorder %s136, %s139
    %p148 = scmp.eq.s32.totalorder %s16, 1
    %p149 = por %p147, %p148
    %p150 = scmp.ne.s32.totalorder %s139, %s140
    %p151 = scmp.eq.s32.totalorder %s16, 0
    %p152 = por %p150, %p151
    %p153 = scmp.ne.s32.totalorder %s139, %s140
    %p154 = scmp.eq.s32.totalorder %s17, 1
    %p155 = por %p153, %p154
    %p157 = scmp.ne.s32.totalorder %s140, %s156
    %p158 = scmp.eq.s32.totalorder %s17, 0
    %p159 = por %p157, %p158
    %p160 = scmp.le.s32.totalorder 1, %s11
    %p161 = scmp.lt.s32.totalorder %s11, 3
    %p162 = pnand %p160, %p161
    %p163 = pneg %p162
    // Predicated region
    $region9: #{ppd_forward.5} parent=5 // pred_check
      _
    $region10: #{ppd_forward.5} parent=5 // pred_check_branch
      %165 = sbr.rel (%p162) target = $region12
    $region11: #{ppd_forward.5} parent=5 // pred_region
      %s166 = ssub.s32 %s11, 1
      // Predicated region
      $region13: #{ppd_forward.5} parent=11 // pred_check
        %p167 = pneg %p58
      $region14: #{ppd_forward.5} parent=11 // pred_check_branch
        %169 = sbr.rel (%p167) target = $region16
      $region15: #{ppd_forward.5} parent=11 // pred_region
        _
      $region16: #{ppd_forward.5} parent=11 // pred_fallthru
        _
      // Predicated region
      $region17: #{ppd_forward.5} parent=11 // pred_check
        %p170 = pneg %p79
      $region18: #{ppd_forward.5} parent=11 // pred_check_branch
        %172 = sbr.rel (%p170) target = $region20
      $region19: #{ppd_forward.5} parent=11 // pred_region
        _
      $region20: #{ppd_forward.5} parent=11 // pred_fallthru
        _
      // Predicated region
      $region21: #{ppd_forward.5} parent=11 // pred_check
        %p173 = pneg %p100
      $region22: #{ppd_forward.5} parent=11 // pred_check_branch
        %175 = sbr.rel (%p173) target = $region24
      $region23: #{ppd_forward.5} parent=11 // pred_region
        _
      $region24: #{ppd_forward.5} parent=11 // pred_fallthru
        _
    $region12: #{ppd_forward.5} parent=5 // pred_fallthru
      _
    %p176 = scmp.lt.s32.totalorder %s11, 2
    // Predicated region
    $region25: #{ppd_forward.5} parent=5 // pred_check
      %p177 = pneg %p176
    $region26: #{ppd_forward.5} parent=5 // pred_check_branch
      %179 = sbr.rel (%p177) target = $region28
    $region27: #{ppd_forward.5} parent=5 // pred_region
      // Predicated region
      $region29: #{ppd_forward.5} parent=27 // pred_check
        %p180 = pneg %p31
      $region30: #{ppd_forward.5} parent=27 // pred_check_branch
        %182 = sbr.rel (%p180) target = $region32
      $region31: #{ppd_forward.5} parent=27 // pred_region
        %s183 = smul.u32 8, %s11
        %p184 = scmp.lt.s32.totalorder %s183, 15
        %s185 = scalar_select %p184, %s183, 15
        %s186 = smul.addr %s185, 4
        %s187 = scalar_lea.vmem %s0, %s186
        %s188 = smul.u32 8, %s11
      $region32: #{ppd_forward.5} parent=27 // pred_fallthru
        _
      // Predicated region
      $region33: #{ppd_forward.5} parent=27 // pred_check
        %p189 = pneg %p120
      $region34: #{ppd_forward.5} parent=27 // pred_check_branch
        %191 = sbr.rel (%p189) target = $region36
      $region35: #{ppd_forward.5} parent=27 // pred_region
        %s192 = smul.u32 8, %s11
        %p193 = scmp.lt.s32.totalorder %s192, 15
        %s194 = scalar_select %p193, %s192, 15
        %s195 = smul.addr %s194, 8
        %s196 = scalar_lea.vmem %s4, %s195
        %s197 = smul.u32 8, %s11
      $region36: #{ppd_forward.5} parent=27 // pred_fallthru
        _
    $region28: #{ppd_forward.5} parent=5 // pred_fallthru
      _
    %p198 = scmp.le.s32.totalorder 1, %s11
    %p199 = scmp.lt.s32.totalorder %s11, 3
    %p200 = pnand %p198, %p199
    %p201 = pneg %p200
    // Predicated region
    $region37: #{ppd_forward.5} parent=5 // pred_check
      _
    $region38: #{ppd_forward.5} parent=5 // pred_check_branch
      %203 = sbr.rel (%p200) target = $region40
    $region39: #{ppd_forward.5} parent=5 // pred_region
      %s204 = ssub.s32 %s11, 1
      %s205 = smul.u32 8, %s16
      %p206 = scmp.lt.s32.totalorder %s205, 15
      %s207 = scalar_select %p206, %s205, 15
      %s208 = smul.addr %s207, 4
      %s209 = scalar_lea.vmem %s0, %s208
      %p210 = pneg %p37
      %p211 = pneg %p34
      %p212 = pneg %p58
      %p213 = pneg %p55
      %p214 = pneg %p79
      %p215 = pneg %p76
      %p216 = pneg %p100
      %p217 = pneg %p97
      %s218 = smul.u32 8, %s16
      %p219 = scmp.lt.s32.totalorder %s218, 15
      %s220 = scalar_select %p219, %s218, 15
      %s221 = smul.addr %s220, 8
      %s222 = scalar_lea.vmem %s4, %s221
      %p223 = pneg %p126
      %p224 = pneg %p123
      %p225 = pneg %p152
      %p226 = pneg %p149
      %s227 = smul.u32 8, %s16
      %p228 = scmp.lt.s32.totalorder %s227, 15
      %s229 = scalar_select %p228, %s227, 15
      %s230 = smul.addr %s229, 8
      %s231 = scalar_lea.vmem %s5, %s230
      %s232 = smul.u32 8, %s16
      %p233 = scmp.lt.s32.totalorder %s232, 15
      %s234 = scalar_select %p233, %s232, 15
      %s235 = smul.addr %s234, 4
      %s236 = scalar_lea.vmem %s0, %s235
      %s237 = smul.u32 8, %s16
      %s238 = smul.u32 8, %s16
      %p239 = scmp.lt.s32.totalorder %s238, 15
      %s240 = scalar_select %p239, %s238, 15
      %s241 = smul.addr %s240, 8
      %s242 = scalar_lea.vmem %s4, %s241
      %s243 = smul.u32 8, %s16
      %s244 = smul.u32 8, %s16
      %p245 = scmp.lt.s32.totalorder %s244, 15
      %s246 = scalar_select %p245, %s244, 15
      %s247 = smul.addr %s246, 8
      %s248 = scalar_lea.vmem %s5, %s247
      %s249 = smul.u32 8, %s16
      %v250 = vld [vmem:[%s236] sm:$0xf]
      %v251 = vld [vmem:[%s236 + $0x4] sm:$0xf]
      %v252 = vld [vmem:[%s236 + $0x8] sm:$0xf]
      %v253 = vld [vmem:[%s236 + $0xc] sm:$0xf]
      %v254 = vld [vmem:[%s236 + $0x10] sm:$0xf]
      %v255 = vld [vmem:[%s236 + $0x14] sm:$0xf]
      %v256 = vld [vmem:[%s236 + $0x18] sm:$0xf]
      %v257 = vld [vmem:[%s236 + $0x1c] sm:$0xf]
      %v258 = vld [vmem:[%s1] sm:$0xf]
      %v259 = vld [vmem:[%s1 + $0x4] sm:$0xf]
      %v260 = vld [vmem:[%s1 + $0x8] sm:$0xf]
      %v261 = vld [vmem:[%s1 + $0xc] sm:$0xf]
      %v262 = vld [vmem:[%s1 + $0x10] sm:$0xf]
      %v263 = vld [vmem:[%s1 + $0x14] sm:$0xf]
      %v264 = vld [vmem:[%s1 + $0x18] sm:$0xf]
      %v265 = vld [vmem:[%s1 + $0x1c] sm:$0xf]
      %v266 = vld [vmem:[%s1 + $0x20] sm:$0xf]
      %v267 = vld [vmem:[%s1 + $0x24] sm:$0xf]
      %v268 = vld [vmem:[%s1 + $0x28] sm:$0xf]
      %v269 = vld [vmem:[%s1 + $0x2c] sm:$0xf]
      %v270 = vld [vmem:[%s1 + $0x30] sm:$0xf]
      %v271 = vld [vmem:[%s1 + $0x34] sm:$0xf]
      %v272 = vld [vmem:[%s1 + $0x38] sm:$0xf]
      %v273 = vld [vmem:[%s1 + $0x3c] sm:$0xf]
      %v282 = vunpack.c.l.b16 %v250
      %v283 = vunpack.c.l.b16 %v251
      %v284 = vunpack.c.l.b16 %v252
      %v285 = vunpack.c.l.b16 %v253
      %v286 = vunpack.c.l.b16 %v254
      %v287 = vunpack.c.l.b16 %v255
      %v288 = vunpack.c.l.b16 %v256
      %v289 = vunpack.c.l.b16 %v257
      %v290 = vpack.c.b16 %v283, %v282
      %v291 = vpack.c.b16 %v285, %v284
      %v292 = vpack.c.b16 %v287, %v286
      %v293 = vpack.c.b16 %v289, %v288
      %v314 = vunpack.c.l.b16 %v258
      %v315 = vunpack.c.l.b16 %v259
      %v316 = vunpack.c.l.b16 %v260
      %v317 = vunpack.c.l.b16 %v261
      %v318 = vunpack.c.l.b16 %v262
      %v319 = vunpack.c.l.b16 %v263
      %v320 = vunpack.c.l.b16 %v264
      %v321 = vunpack.c.l.b16 %v265
      %v322 = vunpack.c.l.b16 %v266
      %v323 = vunpack.c.l.b16 %v267
      %v324 = vunpack.c.l.b16 %v268
      %v325 = vunpack.c.l.b16 %v269
      %v326 = vunpack.c.l.b16 %v270
      %v327 = vunpack.c.l.b16 %v271
      %v328 = vunpack.c.l.b16 %v272
      %v329 = vunpack.c.l.b16 %v273
      %v330 = vpack.c.b16 %v315, %v314
      %v331 = vpack.c.b16 %v317, %v316
      %v332 = vpack.c.b16 %v319, %v318
      %v333 = vpack.c.b16 %v321, %v320
      %v334 = vpack.c.b16 %v323, %v322
      %v335 = vpack.c.b16 %v325, %v324
      %v336 = vpack.c.b16 %v327, %v326
      %v337 = vpack.c.b16 %v329, %v328
      %346 = vmatpush.bf16.msra.mxu0 %v337
      %347 = vmatpush.bf16.msra.mxu0 %v336
      %348 = vmatpush.bf16.msra.mxu0 %v335
      %349 = vmatpush.bf16.msra.mxu0 %v334
      %350 = vmatpush.bf16.msra.mxu0 %v333
      %351 = vmatpush.bf16.msra.mxu0 %v332
      %352 = vmatpush.bf16.msra.mxu0 %v331
      %353 = vmatpush.bf16.msra.mxu0 %v330
      %354 = vmatmul.bf16.gmra.mxu0 %v290
      %v355 = vpop.f32.mrf.mxu0
      %v356 = vadd.f32 0.0, %v355
      %v357 = vpop.f32.mrf.mxu0
      %v358 = vadd.f32 0.0, %v357
      %359 = vmatmul.bf16.gmra.mxu0 %v291
      %v360 = vpop.f32.mrf.mxu0
      %v361 = vadd.f32 0.0, %v360
      %v362 = vpop.f32.mrf.mxu0
      %v363 = vadd.f32 0.0, %v362
      %364 = vmatmul.bf16.gmra.mxu0 %v292
      %v365 = vpop.f32.mrf.mxu0
      %v366 = vadd.f32 0.0, %v365
      %v367 = vpop.f32.mrf.mxu0
      %v368 = vadd.f32 0.0, %v367
      %369 = vmatmul.bf16.gmra.mxu0 %v293
      %v370 = vpop.f32.mrf.mxu0
      %v371 = vadd.f32 0.0, %v370
      %v372 = vpop.f32.mrf.mxu0
      %v373 = vadd.f32 0.0, %v372
      %374 = vdwg.mxu0
      %v375 = vld [vmem:[%s2] sm:$0x1]
      %v377 = vperm.slane %v375, 0
      %v379 = vmul.f32 %v356, %v377
      %v380 = vmul.f32 %v358, %v377
      %v381 = vmul.f32 %v361, %v377
      %v382 = vmul.f32 %v363, %v377
      %v383 = vmul.f32 %v366, %v377
      %v384 = vmul.f32 %v368, %v377
      %v385 = vmul.f32 %v371, %v377
      %v386 = vmul.f32 %v373, %v377
      %v387 = vld [vmem:[%s3] sm:$0x1]
      %v389 = vperm.slane %v387, 0
      %v391 = vadd.f32 %v379, %v389
      %v392 = vadd.f32 %v380, %v389
      %v393 = vadd.f32 %v381, %v389
      %v394 = vadd.f32 %v382, %v389
      %v395 = vadd.f32 %v383, %v389
      %v396 = vadd.f32 %v384, %v389
      %v397 = vadd.f32 %v385, %v389
      %v398 = vadd.f32 %v386, %v389
      %v399 = vlaneseq
      %v400 = vand.u32 %v399, 127
      %vm401 = vcmp.lt.s32.totalorder %v400, 4
      %v402 = vld [vmem:[%s242] sm:$0xff]
      %v403 = vld [vmem:[%s242 + $0x8] sm:$0xff]
      %v404 = vld [vmem:[%s242 + $0x10] sm:$0xff]
      %v405 = vld [vmem:[%s242 + $0x18] sm:$0xff]
      %v406 = vld [vmem:[%s242 + $0x20] sm:$0xff]
      %v407 = vld [vmem:[%s242 + $0x28] sm:$0xff]
      %v408 = vld [vmem:[%s242 + $0x30] sm:$0xff]
      %v409 = vld [vmem:[%s242 + $0x38] sm:$0xff]
      %v410 = vsel %vm401, %v402, 1.0
      %v411 = vsel %vm401, %v403, 1.0
      %v412 = vsel %vm401, %v404, 1.0
      %v413 = vsel %vm401, %v405, 1.0
      %v414 = vsel %vm401, %v406, 1.0
      %v415 = vsel %vm401, %v407, 1.0
      %v416 = vsel %vm401, %v408, 1.0
      %v417 = vsel %vm401, %v409, 1.0
      %v418 = vmul.f32 %v391, %v410
      %v419 = vmul.f32 %v392, %v411
      %v420 = vmul.f32 %v393, %v412
      %v421 = vmul.f32 %v394, %v413
      %v422 = vmul.f32 %v395, %v414
      %v423 = vmul.f32 %v396, %v415
      %v424 = vmul.f32 %v397, %v416
      %v425 = vmul.f32 %v398, %v417
      %426 = vst [vmem:[%s248] sm:$0xff] %v418
      %427 = vst [vmem:[%s248 + $0x8] sm:$0xff] %v419
      %428 = vst [vmem:[%s248 + $0x10] sm:$0xff] %v420
      %429 = vst [vmem:[%s248 + $0x18] sm:$0xff] %v421
      %430 = vst [vmem:[%s248 + $0x20] sm:$0xff] %v422
      %431 = vst [vmem:[%s248 + $0x28] sm:$0xff] %v423
      %432 = vst [vmem:[%s248 + $0x30] sm:$0xff] %v424
      %433 = vst [vmem:[%s248 + $0x38] sm:$0xff] %v425
      %s434 = smul.u32 8, %s16
      %p435 = scmp.lt.s32.totalorder %s434, 15
      %s436 = scalar_select %p435, %s434, 15
      %s437 = smul.addr %s436, 8
      %s438 = scalar_lea.vmem %s5, %s437
      // Predicated region
      $region41: #{ppd_forward.5} parent=39 // pred_check
        %p439 = pneg %p149
      $region42: #{ppd_forward.5} parent=39 // pred_check_branch
        %441 = sbr.rel (%p439) target = $region44
      $region43: #{ppd_forward.5} parent=39 // pred_region
        %s442 = smul.u32 8, %s16
      $region44: #{ppd_forward.5} parent=39 // pred_fallthru
        _
    $region40: #{ppd_forward.5} parent=5 // pred_fallthru
      _
    %p443 = scmp.le.s32.totalorder 2, %s11
    // Predicated region
    $region45: #{ppd_forward.5} parent=5 // pred_check
      %p444 = pneg %p443
    $region46: #{ppd_forward.5} parent=5 // pred_check_branch
      %446 = sbr.rel (%p444) target = $region48
    $region47: #{ppd_forward.5} parent=5 // pred_region
      %s447 = ssub.s32 %s11, 2
      // Predicated region
      $region49: #{ppd_forward.5} parent=47 // pred_check
        %p448 = pneg %p155
      $region50: #{ppd_forward.5} parent=47 // pred_check_branch
        %450 = sbr.rel (%p448) target = $region52
      $region51: #{ppd_forward.5} parent=47 // pred_region
        %s451 = smul.u32 8, %s17
        %p452 = scmp.lt.s32.totalorder %s451, 15
        %s453 = scalar_select %p452, %s451, 15
        %s454 = smul.addr %s453, 8
        %s455 = scalar_lea.vmem %s5, %s454
      $region52: #{ppd_forward.5} parent=47 // pred_fallthru
        _
    $region48: #{ppd_forward.5} parent=5 // pred_fallthru
      _
  $region6: #{ppd_forward.5} parent=0 // loop_footer
    %s15 = sadd.s32 1, %s11
  $region7: #{ppd_forward.5} parent=0 // loop_footer_branch
    %10 = sbr.rel target = $region3
  $region8: #{ppd_forward.5} parent=0 // loop_exit
    _

// kernel: ppd_forward.6
$region0: #{ppd_forward.6}
  #allocation0 [shape = 'u32[]', space=smem, size = 0x4, offset = 0x4, fixed_abs, tag = 'smem constant byte address 0x4 - core index']
  #allocation1 [shape = 'u32[72,128]{1,0:T(1,128)}', space=vmem, size = 0x9000, scoped, tag = 'internal scratch']
  %s0 = inlined_call_operand.vmem [shape: bf16[128,128], index: 0, kind: input, shape index: {}]
  %s1 = inlined_call_operand.vmem [shape: bf16[128,128], index: 1, kind: input, shape index: {}]
  %s2 = inlined_call_operand.vmem [shape: f32[1,128], index: 2, kind: input, shape index: {}]
  %s3 = inlined_call_operand.vmem [shape: f32[1,128], index: 3, kind: input, shape index: {}]
  %s4 = inlined_call_operand.vmem [shape: f32[128,128], index: 4, kind: output, shape index: {}]
  %s5 = sld [smem:[#allocation0]]
  $region49: #{ppd_forward.6} parent=0
    _
  %s7 = ssub.s32 1, %s5
  %s8 = scalar_select 0, %s7, %s5
  loop: start=0, step=1, limit=4
  $region2: #{ppd_forward.6} parent=0 // loop_pre_header
    _
  $region3: #{ppd_forward.6} parent=0 // loop_header
    %s10 = sphi 0, %s14
    %p11 = scmp.ge.s32.totalorder %s10, 4
    %s20 = sphi 0, %s22
    %s23 = sphi 0, %s20
    %s24 = sphi 0, %s23
    %s40 = sphi 0, %s24
    %s44 = sphi 0, %s44
    %s46 = sphi 0, %s44
    %s47 = sphi 0, %s46
    %s61 = sphi 0, %s47
    %s65 = sphi 0, %s65
    %s67 = sphi 0, %s65
    %s68 = sphi 0, %s67
    %s82 = sphi 0, %s68
    %s86 = sphi 0, %s86
    %s88 = sphi 0, %s86
    %s89 = sphi 0, %s88
    %s103 = sphi 0, %s89
    %s109 = sphi 0, %s111
    %s112 = sphi 0, %s109
    %s113 = sphi 0, %s112
    %s129 = sphi 0, %s113
  $region4: #{ppd_forward.6} parent=0 // loop_header_branch
    %13 = sbr.rel (%p11) target = $region8
  $region5: #{ppd_forward.6} parent=0 // loop_body
    %s15 = ssub.s32 %s10, 1
    %s16 = ssub.s32 %s10, 2
    %s17 = sadd.s32 %s10, 1
    %s18 = ssub.s32 %s10, %s17
    %p19 = scmp.eq.s32.totalorder %s18, 0
    %s21 = sadd.s32 %s20, 1
    %s22 = scalar_select %p19, %s20, %s21
    %p25 = pneg %p19
    %p26 = scmp.eq.s32.totalorder %s10, 1
    %p27 = por %p25, %p26
    %p28 = scmp.ne.s32.totalorder %s20, %s23
    %p29 = scmp.eq.s32.totalorder %s10, 0
    %p30 = por %p28, %p29
    %p31 = scmp.ne.s32.totalorder %s20, %s23
    %p32 = scmp.eq.s32.totalorder %s15, 1
    %p33 = por %p31, %p32
    %p34 = scmp.ne.s32.totalorder %s23, %s24
    %p35 = scmp.eq.s32.totalorder %s15, 0
    %p36 = por %p34, %p35
    %p37 = scmp.ne.s32.totalorder %s23, %s24
    %p38 = scmp.eq.s32.totalorder %s16, 1
    %p39 = por %p37, %p38
    %p41 = scmp.ne.s32.totalorder %s24, %s40
    %p42 = scmp.eq.s32.totalorder %s16, 0
    %p43 = por %p41, %p42
    %s45 = sadd.s32 %s44, 1
    %p48 = scmp.eq.s32.totalorder %s10, 1
    %p49 = scmp.ne.s32.totalorder %s44, %s46
    %p50 = scmp.eq.s32.totalorder %s10, 0
    %p51 = por %p49, %p50
    %p52 = scmp.ne.s32.totalorder %s44, %s46
    %p53 = scmp.eq.s32.totalorder %s15, 1
    %p54 = por %p52, %p53
    %p55 = scmp.ne.s32.totalorder %s46, %s47
    %p56 = scmp.eq.s32.totalorder %s15, 0
    %p57 = por %p55, %p56
    %p58 = scmp.ne.s32.totalorder %s46, %s47
    %p59 = scmp.eq.s32.totalorder %s16, 1
    %p60 = por %p58, %p59
    %p62 = scmp.ne.s32.totalorder %s47, %s61
    %p63 = scmp.eq.s32.totalorder %s16, 0
    %p64 = por %p62, %p63
    %s66 = sadd.s32 %s65, 1
    %p69 = scmp.eq.s32.totalorder %s10, 1
    %p70 = scmp.ne.s32.totalorder %s65, %s67
    %p71 = scmp.eq.s32.totalorder %s10, 0
    %p72 = por %p70, %p71
    %p73 = scmp.ne.s32.totalorder %s65, %s67
    %p74 = scmp.eq.s32.totalorder %s15, 1
    %p75 = por %p73, %p74
    %p76 = scmp.ne.s32.totalorder %s67, %s68
    %p77 = scmp.eq.s32.totalorder %s15, 0
    %p78 = por %p76, %p77
    %p79 = scmp.ne.s32.totalorder %s67, %s68
    %p80 = scmp.eq.s32.totalorder %s16, 1
    %p81 = por %p79, %p80
    %p83 = scmp.ne.s32.totalorder %s68, %s82
    %p84 = scmp.eq.s32.totalorder %s16, 0
    %p85 = por %p83, %p84
    %s87 = sadd.s32 %s86, 1
    %p90 = scmp.eq.s32.totalorder %s10, 1
    %p91 = scmp.ne.s32.totalorder %s86, %s88
    %p92 = scmp.eq.s32.totalorder %s10, 0
    %p93 = por %p91, %p92
    %p94 = scmp.ne.s32.totalorder %s86, %s88
    %p95 = scmp.eq.s32.totalorder %s15, 1
    %p96 = por %p94, %p95
    %p97 = scmp.ne.s32.totalorder %s88, %s89
    %p98 = scmp.eq.s32.totalorder %s15, 0
    %p99 = por %p97, %p98
    %p100 = scmp.ne.s32.totalorder %s88, %s89
    %p101 = scmp.eq.s32.totalorder %s16, 1
    %p102 = por %p100, %p101
    %p104 = scmp.ne.s32.totalorder %s89, %s103
    %p105 = scmp.eq.s32.totalorder %s16, 0
    %p106 = por %p104, %p105
    %s107 = ssub.s32 %s10, %s17
    %p108 = scmp.eq.s32.totalorder %s107, 0
    %s110 = sadd.s32 %s109, 1
    %s111 = scalar_select %p108, %s109, %s110
    %p114 = pneg %p108
    %p115 = scmp.eq.s32.totalorder %s10, 1
    %p116 = por %p114, %p115
    %p117 = scmp.ne.s32.totalorder %s109, %s112
    %p118 = scmp.eq.s32.totalorder %s10, 0
    %p119 = por %p117, %p118
    %p120 = scmp.ne.s32.totalorder %s109, %s112
    %p121 = scmp.eq.s32.totalorder %s15, 1
    %p122 = por %p120, %p121
    %p123 = scmp.ne.s32.totalorder %s112, %s113
    %p124 = scmp.eq.s32.totalorder %s15, 0
    %p125 = por %p123, %p124
    %p126 = scmp.ne.s32.totalorder %s112, %s113
    %p127 = scmp.eq.s32.totalorder %s16, 1
    %p128 = por %p126, %p127
    %p130 = scmp.ne.s32.totalorder %s113, %s129
    %p131 = scmp.eq.s32.totalorder %s16, 0
    %p132 = por %p130, %p131
    %p133 = scmp.le.s32.totalorder 1, %s10
    %p134 = scmp.lt.s32.totalorder %s10, 3
    %p135 = pnand %p133, %p134
    %p136 = pneg %p135
    // Predicated region
    $region9: #{ppd_forward.6} parent=5 // pred_check
      _
    $region10: #{ppd_forward.6} parent=5 // pred_check_branch
      %138 = sbr.rel (%p135) target = $region12
    $region11: #{ppd_forward.6} parent=5 // pred_region
      %s139 = ssub.s32 %s10, 1
      // Predicated region
      $region13: #{ppd_forward.6} parent=11 // pred_check
        %p140 = pneg %p57
      $region14: #{ppd_forward.6} parent=11 // pred_check_branch
        %142 = sbr.rel (%p140) target = $region16
      $region15: #{ppd_forward.6} parent=11 // pred_region
        _
      $region16: #{ppd_forward.6} parent=11 // pred_fallthru
        _
      // Predicated region
      $region17: #{ppd_forward.6} parent=11 // pred_check
        %p143 = pneg %p78
      $region18: #{ppd_forward.6} parent=11 // pred_check_branch
        %145 = sbr.rel (%p143) target = $region20
      $region19: #{ppd_forward.6} parent=11 // pred_region
        _
      $region20: #{ppd_forward.6} parent=11 // pred_fallthru
        _
      // Predicated region
      $region21: #{ppd_forward.6} parent=11 // pred_check
        %p146 = pneg %p99
      $region22: #{ppd_forward.6} parent=11 // pred_check_branch
        %148 = sbr.rel (%p146) target = $region24
      $region23: #{ppd_forward.6} parent=11 // pred_region
        _
      $region24: #{ppd_forward.6} parent=11 // pred_fallthru
        _
    $region12: #{ppd_forward.6} parent=5 // pred_fallthru
      _
    %p149 = scmp.lt.s32.totalorder %s10, 2
    // Predicated region
    $region25: #{ppd_forward.6} parent=5 // pred_check
      %p150 = pneg %p149
    $region26: #{ppd_forward.6} parent=5 // pred_check_branch
      %152 = sbr.rel (%p150) target = $region28
    $region27: #{ppd_forward.6} parent=5 // pred_region
      // Predicated region
      $region29: #{ppd_forward.6} parent=27 // pred_check
        %p153 = pneg %p30
      $region30: #{ppd_forward.6} parent=27 // pred_check_branch
        %155 = sbr.rel (%p153) target = $region32
      $region31: #{ppd_forward.6} parent=27 // pred_region
        %s156 = smul.u32 8, %s10
        %p157 = scmp.lt.s32.totalorder %s156, 15
        %s158 = scalar_select %p157, %s156, 15
        %s159 = smul.addr %s158, 4
        %s160 = scalar_lea.vmem %s0, %s159
        %s161 = smul.u32 8, %s10
      $region32: #{ppd_forward.6} parent=27 // pred_fallthru
        _
    $region28: #{ppd_forward.6} parent=5 // pred_fallthru
      _
    %p162 = scmp.le.s32.totalorder 1, %s10
    %p163 = scmp.lt.s32.totalorder %s10, 3
    %p164 = pnand %p162, %p163
    %p165 = pneg %p164
    // Predicated region
    $region33: #{ppd_forward.6} parent=5 // pred_check
      _
    $region34: #{ppd_forward.6} parent=5 // pred_check_branch
      %167 = sbr.rel (%p164) target = $region36
    $region35: #{ppd_forward.6} parent=5 // pred_region
      %s168 = ssub.s32 %s10, 1
      %s169 = smul.u32 8, %s15
      %p170 = scmp.lt.s32.totalorder %s169, 15
      %s171 = scalar_select %p170, %s169, 15
      %s172 = smul.addr %s171, 4
      %s173 = scalar_lea.vmem %s0, %s172
      %p174 = pneg %p36
      %p175 = pneg %p33
      %p176 = pneg %p57
      %p177 = pneg %p54
      %p178 = pneg %p78
      %p179 = pneg %p75
      %p180 = pneg %p99
      %p181 = pneg %p96
      %p182 = pneg %p125
      %p183 = pneg %p122
      %s184 = smul.u32 8, %s15
      %p185 = scmp.lt.s32.totalorder %s184, 15
      %s186 = scalar_select %p185, %s184, 15
      %s187 = smul.addr %s186, 8
      %s188 = scalar_lea.vmem %s4, %s187
      %s189 = smul.u32 8, %s15
      %p190 = scmp.lt.s32.totalorder %s189, 15
      %s191 = scalar_select %p190, %s189, 15
      %s192 = smul.addr %s191, 4
      %s193 = scalar_lea.vmem %s0, %s192
      %s194 = smul.u32 8, %s15
      %s195 = smul.u32 8, %s15
      %p196 = scmp.lt.s32.totalorder %s195, 15
      %s197 = scalar_select %p196, %s195, 15
      %s198 = smul.addr %s197, 8
      %s199 = scalar_lea.vmem %s4, %s198
      %s200 = smul.u32 8, %s15
      %v201 = vld [vmem:[%s193] sm:$0xf]
      %v202 = vld [vmem:[%s193 + $0x4] sm:$0xf]
      %v203 = vld [vmem:[%s193 + $0x8] sm:$0xf]
      %v204 = vld [vmem:[%s193 + $0xc] sm:$0xf]
      %v205 = vld [vmem:[%s193 + $0x10] sm:$0xf]
      %v206 = vld [vmem:[%s193 + $0x14] sm:$0xf]
      %v207 = vld [vmem:[%s193 + $0x18] sm:$0xf]
      %v208 = vld [vmem:[%s193 + $0x1c] sm:$0xf]
      %v209 = vld [vmem:[%s1] sm:$0xf]
      %v210 = vld [vmem:[%s1 + $0x4] sm:$0xf]
      %v211 = vld [vmem:[%s1 + $0x8] sm:$0xf]
      %v212 = vld [vmem:[%s1 + $0xc] sm:$0xf]
      %v213 = vld [vmem:[%s1 + $0x10] sm:$0xf]
      %v214 = vld [vmem:[%s1 + $0x14] sm:$0xf]
      %v215 = vld [vmem:[%s1 + $0x18] sm:$0xf]
      %v216 = vld [vmem:[%s1 + $0x1c] sm:$0xf]
      %v217 = vld [vmem:[%s1 + $0x20] sm:$0xf]
      %v218 = vld [vmem:[%s1 + $0x24] sm:$0xf]
      %v219 = vld [vmem:[%s1 + $0x28] sm:$0xf]
      %v220 = vld [vmem:[%s1 + $0x2c] sm:$0xf]
      %v221 = vld [vmem:[%s1 + $0x30] sm:$0xf]
      %v222 = vld [vmem:[%s1 + $0x34] sm:$0xf]
      %v223 = vld [vmem:[%s1 + $0x38] sm:$0xf]
      %v224 = vld [vmem:[%s1 + $0x3c] sm:$0xf]
      %v233 = vunpack.c.l.b16 %v201
      %v234 = vunpack.c.l.b16 %v202
      %v235 = vunpack.c.l.b16 %v203
      %v236 = vunpack.c.l.b16 %v204
      %v237 = vunpack.c.l.b16 %v205
      %v238 = vunpack.c.l.b16 %v206
      %v239 = vunpack.c.l.b16 %v207
      %v240 = vunpack.c.l.b16 %v208
      %v241 = vpack.c.b16 %v234, %v233
      %v242 = vpack.c.b16 %v236, %v235
      %v243 = vpack.c.b16 %v238, %v237
      %v244 = vpack.c.b16 %v240, %v239
      %v265 = vunpack.c.l.b16 %v209
      %v266 = vunpack.c.l.b16 %v210
      %v267 = vunpack.c.l.b16 %v211
      %v268 = vunpack.c.l.b16 %v212
      %v269 = vunpack.c.l.b16 %v213
      %v270 = vunpack.c.l.b16 %v214
      %v271 = vunpack.c.l.b16 %v215
      %v272 = vunpack.c.l.b16 %v216
      %v273 = vunpack.c.l.b16 %v217
      %v274 = vunpack.c.l.b16 %v218
      %v275 = vunpack.c.l.b16 %v219
      %v276 = vunpack.c.l.b16 %v220
      %v277 = vunpack.c.l.b16 %v221
      %v278 = vunpack.c.l.b16 %v222
      %v279 = vunpack.c.l.b16 %v223
      %v280 = vunpack.c.l.b16 %v224
      %v281 = vpack.c.b16 %v266, %v265
      %v282 = vpack.c.b16 %v268, %v267
      %v283 = vpack.c.b16 %v270, %v269
      %v284 = vpack.c.b16 %v272, %v271
      %v285 = vpack.c.b16 %v274, %v273
      %v286 = vpack.c.b16 %v276, %v275
      %v287 = vpack.c.b16 %v278, %v277
      %v288 = vpack.c.b16 %v280, %v279
      %297 = vmatpush.bf16.msra.mxu0 %v288
      %298 = vmatpush.bf16.msra.mxu0 %v287
      %299 = vmatpush.bf16.msra.mxu0 %v286
      %300 = vmatpush.bf16.msra.mxu0 %v285
      %301 = vmatpush.bf16.msra.mxu0 %v284
      %302 = vmatpush.bf16.msra.mxu0 %v283
      %303 = vmatpush.bf16.msra.mxu0 %v282
      %304 = vmatpush.bf16.msra.mxu0 %v281
      %305 = vmatmul.bf16.gmra.mxu0 %v241
      %v306 = vpop.f32.mrf.mxu0
      %v307 = vadd.f32 0.0, %v306
      %v308 = vpop.f32.mrf.mxu0
      %v309 = vadd.f32 0.0, %v308
      %310 = vmatmul.bf16.gmra.mxu0 %v242
      %v311 = vpop.f32.mrf.mxu0
      %v312 = vadd.f32 0.0, %v311
      %v313 = vpop.f32.mrf.mxu0
      %v314 = vadd.f32 0.0, %v313
      %315 = vmatmul.bf16.gmra.mxu0 %v243
      %v316 = vpop.f32.mrf.mxu0
      %v317 = vadd.f32 0.0, %v316
      %v318 = vpop.f32.mrf.mxu0
      %v319 = vadd.f32 0.0, %v318
      %320 = vmatmul.bf16.gmra.mxu0 %v244
      %v321 = vpop.f32.mrf.mxu0
      %v322 = vadd.f32 0.0, %v321
      %v323 = vpop.f32.mrf.mxu0
      %v324 = vadd.f32 0.0, %v323
      %325 = vdwg.mxu0
      %v326 = vld [vmem:[%s2] sm:$0x1]
      %v328 = vperm.slane %v326, 0
      %v330 = vmul.f32 %v307, %v328
      %v331 = vmul.f32 %v309, %v328
      %v332 = vmul.f32 %v312, %v328
      %v333 = vmul.f32 %v314, %v328
      %v334 = vmul.f32 %v317, %v328
      %v335 = vmul.f32 %v319, %v328
      %v336 = vmul.f32 %v322, %v328
      %v337 = vmul.f32 %v324, %v328
      %v338 = vld [vmem:[%s3] sm:$0x1]
      %v340 = vperm.slane %v338, 0
      %v342 = vadd.f32 %v330, %v340
      %v343 = vadd.f32 %v331, %v340
      %v344 = vadd.f32 %v332, %v340
      %v345 = vadd.f32 %v333, %v340
      %v346 = vadd.f32 %v334, %v340
      %v347 = vadd.f32 %v335, %v340
      %v348 = vadd.f32 %v336, %v340
      %v349 = vadd.f32 %v337, %v340
      %350 = vst [vmem:[%s199] sm:$0xff] %v342
      %351 = vst [vmem:[%s199 + $0x8] sm:$0xff] %v343
      %352 = vst [vmem:[%s199 + $0x10] sm:$0xff] %v344
      %353 = vst [vmem:[%s199 + $0x18] sm:$0xff] %v345
      %354 = vst [vmem:[%s199 + $0x20] sm:$0xff] %v346
      %355 = vst [vmem:[%s199 + $0x28] sm:$0xff] %v347
      %356 = vst [vmem:[%s199 + $0x30] sm:$0xff] %v348
      %357 = vst [vmem:[%s199 + $0x38] sm:$0xff] %v349
      %s358 = smul.u32 8, %s15
      %p359 = scmp.lt.s32.totalorder %s358, 15
      %s360 = scalar_select %p359, %s358, 15
      %s361 = smul.addr %s360, 8
      %s362 = scalar_lea.vmem %s4, %s361
      // Predicated region
      $region37: #{ppd_forward.6} parent=35 // pred_check
        %p363 = pneg %p122
      $region38: #{ppd_forward.6} parent=35 // pred_check_branch
        %365 = sbr.rel (%p363) target = $region40
      $region39: #{ppd_forward.6} parent=35 // pred_region
        %s366 = smul.u32 8, %s15
      $region40: #{ppd_forward.6} parent=35 // pred_fallthru
        _
    $region36: #{ppd_forward.6} parent=5 // pred_fallthru
      _
    %p367 = scmp.le.s32.totalorder 2, %s10
    // Predicated region
    $region41: #{ppd_forward.6} parent=5 // pred_check
      %p368 = pneg %p367
    $region42: #{ppd_forward.6} parent=5 // pred_check_branch
      %370 = sbr.rel (%p368) target = $region44
    $region43: #{ppd_forward.6} parent=5 // pred_region
      %s371 = ssub.s32 %s10, 2
      // Predicated region
      $region45: #{ppd_forward.6} parent=43 // pred_check
        %p372 = pneg %p128
      $region46: #{ppd_forward.6} parent=43 // pred_check_branch
        %374 = sbr.rel (%p372) target = $region48
      $region47: #{ppd_forward.6} parent=43 // pred_region
        %s375 = smul.u32 8, %s16
        %p376 = scmp.lt.s32.totalorder %s375, 15
        %s377 = scalar_select %p376, %s375, 15
        %s378 = smul.addr %s377, 8
        %s379 = scalar_lea.vmem %s4, %s378
      $region48: #{ppd_forward.6} parent=43 // pred_fallthru
        _
    $region44: #{ppd_forward.6} parent=5 // pred_fallthru
      _
  $region6: #{ppd_forward.6} parent=0 // loop_footer
    %s14 = sadd.s32 1, %s10
  $region7: #{ppd_forward.6} parent=0 // loop_footer_branch
    %9 = sbr.rel target = $region3
  $region8: #{ppd_forward.6} parent=0 // loop_exit
    _

// kernel: ppd_forward.7
$region0: #{ppd_forward.7}
  #allocation0 [shape = 'u32[]', space=smem, size = 0x4, offset = 0x4, fixed_abs, tag = 'smem constant byte address 0x4 - core index']
  #allocation1 [shape = 'u32[72,128]{1,0:T(1,128)}', space=vmem, size = 0x9000, scoped, tag = 'internal scratch']
  %s0 = inlined_call_operand.vmem [shape: bf16[512,128], index: 0, kind: input, shape index: {}]
  %s1 = inlined_call_operand.vmem [shape: bf16[128,128], index: 1, kind: input, shape index: {}]
  %s2 = inlined_call_operand.vmem [shape: f32[1,128], index: 2, kind: input, shape index: {}]
  %s3 = inlined_call_operand.vmem [shape: f32[1,128], index: 3, kind: input, shape index: {}]
  %s4 = inlined_call_operand.vmem [shape: bf16[512,128], index: 4, kind: input, shape index: {}]
  %s5 = inlined_call_operand.vmem [shape: bf16[128,128], index: 5, kind: input, shape index: {}]
  %s6 = inlined_call_operand.vmem [shape: f32[1,128], index: 6, kind: input, shape index: {}]
  %s7 = inlined_call_operand.vmem [shape: f32[1,128], index: 7, kind: input, shape index: {}]
  %s8 = inlined_call_operand.vmem [shape: f32[512,128], index: 8, kind: input, shape index: {}]
  %s9 = inlined_call_operand.vmem [shape: bf16[512,128], index: 9, kind: input, shape index: {}]
  %s10 = inlined_call_operand.vmem [shape: bf16[128,128], index: 10, kind: input, shape index: {}]
  %s11 = inlined_call_operand.vmem [shape: f32[1,128], index: 11, kind: input, shape index: {}]
  %s12 = inlined_call_operand.vmem [shape: f32[1,128], index: 12, kind: input, shape index: {}]
  %s13 = inlined_call_operand.vmem [shape: f32[512,128], index: 13, kind: output, shape index: {}]
  %s14 = sld [smem:[#allocation0]]
  $region85: #{ppd_forward.7} parent=0
    _
  %s16 = ssub.s32 1, %s14
  %s17 = scalar_select 0, %s16, %s14
  loop: start=0, step=1, limit=4
  $region2: #{ppd_forward.7} parent=0 // loop_pre_header
    _
  $region3: #{ppd_forward.7} parent=0 // loop_header
    %s19 = sphi 0, %s23
    %p20 = scmp.ge.s32.totalorder %s19, 4
    %s29 = sphi 0, %s31
    %s32 = sphi 0, %s29
    %s33 = sphi 0, %s32
    %s49 = sphi 0, %s33
    %s53 = sphi 0, %s53
    %s55 = sphi 0, %s53
    %s56 = sphi 0, %s55
    %s70 = sphi 0, %s56
    %s74 = sphi 0, %s74
    %s76 = sphi 0, %s74
    %s77 = sphi 0, %s76
    %s91 = sphi 0, %s77
    %s95 = sphi 0, %s95
    %s97 = sphi 0, %s95
    %s98 = sphi 0, %s97
    %s112 = sphi 0, %s98
    %s118 = sphi 0, %s120
    %s121 = sphi 0, %s118
    %s122 = sphi 0, %s121
    %s138 = sphi 0, %s122
    %s142 = sphi 0, %s142
    %s144 = sphi 0, %s142
    %s145 = sphi 0, %s144
    %s159 = sphi 0, %s145
    %s163 = sphi 0, %s163
    %s165 = sphi 0, %s163
    %s166 = sphi 0, %s165
    %s180 = sphi 0, %s166
    %s184 = sphi 0, %s184
    %s186 = sphi 0, %s184
    %s187 = sphi 0, %s186
    %s201 = sphi 0, %s187
    %s207 = sphi 0, %s209
    %s210 = sphi 0, %s207
    %s211 = sphi 0, %s210
    %s227 = sphi 0, %s211
    %s233 = sphi 0, %s235
    %s236 = sphi 0, %s233
    %s237 = sphi 0, %s236
    %s253 = sphi 0, %s237
    %s257 = sphi 0, %s257
    %s259 = sphi 0, %s257
    %s260 = sphi 0, %s259
    %s274 = sphi 0, %s260
    %s278 = sphi 0, %s278
    %s280 = sphi 0, %s278
    %s281 = sphi 0, %s280
    %s295 = sphi 0, %s281
    %s299 = sphi 0, %s299
    %s301 = sphi 0, %s299
    %s302 = sphi 0, %s301
    %s316 = sphi 0, %s302
    %s322 = sphi 0, %s324
    %s325 = sphi 0, %s322
    %s326 = sphi 0, %s325
    %s342 = sphi 0, %s326
  $region4: #{ppd_forward.7} parent=0 // loop_header_branch
    %22 = sbr.rel (%p20) target = $region8
  $region5: #{ppd_forward.7} parent=0 // loop_body
    %s24 = ssub.s32 %s19, 1
    %s25 = ssub.s32 %s19, 2
    %s26 = sadd.s32 %s19, 1
    %s27 = ssub.s32 %s19, %s26
    %p28 = scmp.eq.s32.totalorder %s27, 0
    %s30 = sadd.s32 %s29, 1
    %s31 = scalar_select %p28, %s29, %s30
    %p34 = pneg %p28
    %p35 = scmp.eq.s32.totalorder %s19, 1
    %p36 = por %p34, %p35
    %p37 = scmp.ne.s32.totalorder %s29, %s32
    %p38 = scmp.eq.s32.totalorder %s19, 0
    %p39 = por %p37, %p38
    %p40 = scmp.ne.s32.totalorder %s29, %s32
    %p41 = scmp.eq.s32.totalorder %s24, 1
    %p42 = por %p40, %p41
    %p43 = scmp.ne.s32.totalorder %s32, %s33
    %p44 = scmp.eq.s32.totalorder %s24, 0
    %p45 = por %p43, %p44
    %p46 = scmp.ne.s32.totalorder %s32, %s33
    %p47 = scmp.eq.s32.totalorder %s25, 1
    %p48 = por %p46, %p47
    %p50 = scmp.ne.s32.totalorder %s33, %s49
    %p51 = scmp.eq.s32.totalorder %s25, 0
    %p52 = por %p50, %p51
    %s54 = sadd.s32 %s53, 1
    %p57 = scmp.eq.s32.totalorder %s19, 1
    %p58 = scmp.ne.s32.totalorder %s53, %s55
    %p59 = scmp.eq.s32.totalorder %s19, 0
    %p60 = por %p58, %p59
    %p61 = scmp.ne.s32.totalorder %s53, %s55
    %p62 = scmp.eq.s32.totalorder %s24, 1
    %p63 = por %p61, %p62
    %p64 = scmp.ne.s32.totalorder %s55, %s56
    %p65 = scmp.eq.s32.totalorder %s24, 0
    %p66 = por %p64, %p65
    %p67 = scmp.ne.s32.totalorder %s55, %s56
    %p68 = scmp.eq.s32.totalorder %s25, 1
    %p69 = por %p67, %p68
    %p71 = scmp.ne.s32.totalorder %s56, %s70
    %p72 = scmp.eq.s32.totalorder %s25, 0
    %p73 = por %p71, %p72
    %s75 = sadd.s32 %s74, 1
    %p78 = scmp.eq.s32.totalorder %s19, 1
    %p79 = scmp.ne.s32.totalorder %s74, %s76
    %p80 = scmp.eq.s32.totalorder %s19, 0
    %p81 = por %p79, %p80
    %p82 = scmp.ne.s32.totalorder %s74, %s76
    %p83 = scmp.eq.s32.totalorder %s24, 1
    %p84 = por %p82, %p83
    %p85 = scmp.ne.s32.totalorder %s76, %s77
    %p86 = scmp.eq.s32.totalorder %s24, 0
    %p87 = por %p85, %p86
    %p88 = scmp.ne.s32.totalorder %s76, %s77
    %p89 = scmp.eq.s32.totalorder %s25, 1
    %p90 = por %p88, %p89
    %p92 = scmp.ne.s32.totalorder %s77, %s91
    %p93 = scmp.eq.s32.totalorder %s25, 0
    %p94 = por %p92, %p93
    %s96 = sadd.s32 %s95, 1
    %p99 = scmp.eq.s32.totalorder %s19, 1
    %p100 = scmp.ne.s32.totalorder %s95, %s97
    %p101 = scmp.eq.s32.totalorder %s19, 0
    %p102 = por %p100, %p101
    %p103 = scmp.ne.s32.totalorder %s95, %s97
    %p104 = scmp.eq.s32.totalorder %s24, 1
    %p105 = por %p103, %p104
    %p106 = scmp.ne.s32.totalorder %s97, %s98
    %p107 = scmp.eq.s32.totalorder %s24, 0
    %p108 = por %p106, %p107
    %p109 = scmp.ne.s32.totalorder %s97, %s98
    %p110 = scmp.eq.s32.totalorder %s25, 1
    %p111 = por %p109, %p110
    %p113 = scmp.ne.s32.totalorder %s98, %s112
    %p114 = scmp.eq.s32.totalorder %s25, 0
    %p115 = por %p113, %p114
    %s116 = ssub.s32 %s19, %s26
    %p117 = scmp.eq.s32.totalorder %s116, 0
    %s119 = sadd.s32 %s118, 1
    %s120 = scalar_select %p117, %s118, %s119
    %p123 = pneg %p117
    %p124 = scmp.eq.s32.totalorder %s19, 1
    %p125 = por %p123, %p124
    %p126 = scmp.ne.s32.totalorder %s118, %s121
    %p127 = scmp.eq.s32.totalorder %s19, 0
    %p128 = por %p126, %p127
    %p129 = scmp.ne.s32.totalorder %s118, %s121
    %p130 = scmp.eq.s32.totalorder %s24, 1
    %p131 = por %p129, %p130
    %p132 = scmp.ne.s32.totalorder %s121, %s122
    %p133 = scmp.eq.s32.totalorder %s24, 0
    %p134 = por %p132, %p133
    %p135 = scmp.ne.s32.totalorder %s121, %s122
    %p136 = scmp.eq.s32.totalorder %s25, 1
    %p137 = por %p135, %p136
    %p139 = scmp.ne.s32.totalorder %s122, %s138
    %p140 = scmp.eq.s32.totalorder %s25, 0
    %p141 = por %p139, %p140
    %s143 = sadd.s32 %s142, 1
    %p146 = scmp.eq.s32.totalorder %s19, 1
    %p147 = scmp.ne.s32.totalorder %s142, %s144
    %p148 = scmp.eq.s32.totalorder %s19, 0
    %p149 = por %p147, %p148
    %p150 = scmp.ne.s32.totalorder %s142, %s144
    %p151 = scmp.eq.s32.totalorder %s24, 1
    %p152 = por %p150, %p151
    %p153 = scmp.ne.s32.totalorder %s144, %s145
    %p154 = scmp.eq.s32.totalorder %s24, 0
    %p155 = por %p153, %p154
    %p156 = scmp.ne.s32.totalorder %s144, %s145
    %p157 = scmp.eq.s32.totalorder %s25, 1
    %p158 = por %p156, %p157
    %p160 = scmp.ne.s32.totalorder %s145, %s159
    %p161 = scmp.eq.s32.totalorder %s25, 0
    %p162 = por %p160, %p161
    %s164 = sadd.s32 %s163, 1
    %p167 = scmp.eq.s32.totalorder %s19, 1
    %p168 = scmp.ne.s32.totalorder %s163, %s165
    %p169 = scmp.eq.s32.totalorder %s19, 0
    %p170 = por %p168, %p169
    %p171 = scmp.ne.s32.totalorder %s163, %s165
    %p172 = scmp.eq.s32.totalorder %s24, 1
    %p173 = por %p171, %p172
    %p174 = scmp.ne.s32.totalorder %s165, %s166
    %p175 = scmp.eq.s32.totalorder %s24, 0
    %p176 = por %p174, %p175
    %p177 = scmp.ne.s32.totalorder %s165, %s166
    %p178 = scmp.eq.s32.totalorder %s25, 1
    %p179 = por %p177, %p178
    %p181 = scmp.ne.s32.totalorder %s166, %s180
    %p182 = scmp.eq.s32.totalorder %s25, 0
    %p183 = por %p181, %p182
    %s185 = sadd.s32 %s184, 1
    %p188 = scmp.eq.s32.totalorder %s19, 1
    %p189 = scmp.ne.s32.totalorder %s184, %s186
    %p190 = scmp.eq.s32.totalorder %s19, 0
    %p191 = por %p189, %p190
    %p192 = scmp.ne.s32.totalorder %s184, %s186
    %p193 = scmp.eq.s32.totalorder %s24, 1
    %p194 = por %p192, %p193
    %p195 = scmp.ne.s32.totalorder %s186, %s187
    %p196 = scmp.eq.s32.totalorder %s24, 0
    %p197 = por %p195, %p196
    %p198 = scmp.ne.s32.totalorder %s186, %s187
    %p199 = scmp.eq.s32.totalorder %s25, 1
    %p200 = por %p198, %p199
    %p202 = scmp.ne.s32.totalorder %s187, %s201
    %p203 = scmp.eq.s32.totalorder %s25, 0
    %p204 = por %p202, %p203
    %s205 = ssub.s32 %s19, %s26
    %p206 = scmp.eq.s32.totalorder %s205, 0
    %s208 = sadd.s32 %s207, 1
    %s209 = scalar_select %p206, %s207, %s208
    %p212 = pneg %p206
    %p213 = scmp.eq.s32.totalorder %s19, 1
    %p214 = por %p212, %p213
    %p215 = scmp.ne.s32.totalorder %s207, %s210
    %p216 = scmp.eq.s32.totalorder %s19, 0
    %p217 = por %p215, %p216
    %p218 = scmp.ne.s32.totalorder %s207, %s210
    %p219 = scmp.eq.s32.totalorder %s24, 1
    %p220 = por %p218, %p219
    %p221 = scmp.ne.s32.totalorder %s210, %s211
    %p222 = scmp.eq.s32.totalorder %s24, 0
    %p223 = por %p221, %p222
    %p224 = scmp.ne.s32.totalorder %s210, %s211
    %p225 = scmp.eq.s32.totalorder %s25, 1
    %p226 = por %p224, %p225
    %p228 = scmp.ne.s32.totalorder %s211, %s227
    %p229 = scmp.eq.s32.totalorder %s25, 0
    %p230 = por %p228, %p229
    %s231 = ssub.s32 %s19, %s26
    %p232 = scmp.eq.s32.totalorder %s231, 0
    %s234 = sadd.s32 %s233, 1
    %s235 = scalar_select %p232, %s233, %s234
    %p238 = pneg %p232
    %p239 = scmp.eq.s32.totalorder %s19, 1
    %p240 = por %p238, %p239
    %p241 = scmp.ne.s32.totalorder %s233, %s236
    %p242 = scmp.eq.s32.totalorder %s19, 0
    %p243 = por %p241, %p242
    %p244 = scmp.ne.s32.totalorder %s233, %s236
    %p245 = scmp.eq.s32.totalorder %s24, 1
    %p246 = por %p244, %p245
    %p247 = scmp.ne.s32.totalorder %s236, %s237
    %p248 = scmp.eq.s32.totalorder %s24, 0
    %p249 = por %p247, %p248
    %p250 = scmp.ne.s32.totalorder %s236, %s237
    %p251 = scmp.eq.s32.totalorder %s25, 1
    %p252 = por %p250, %p251
    %p254 = scmp.ne.s32.totalorder %s237, %s253
    %p255 = scmp.eq.s32.totalorder %s25, 0
    %p256 = por %p254, %p255
    %s258 = sadd.s32 %s257, 1
    %p261 = scmp.eq.s32.totalorder %s19, 1
    %p262 = scmp.ne.s32.totalorder %s257, %s259
    %p263 = scmp.eq.s32.totalorder %s19, 0
    %p264 = por %p262, %p263
    %p265 = scmp.ne.s32.totalorder %s257, %s259
    %p266 = scmp.eq.s32.totalorder %s24, 1
    %p267 = por %p265, %p266
    %p268 = scmp.ne.s32.totalorder %s259, %s260
    %p269 = scmp.eq.s32.totalorder %s24, 0
    %p270 = por %p268, %p269
    %p271 = scmp.ne.s32.totalorder %s259, %s260
    %p272 = scmp.eq.s32.totalorder %s25, 1
    %p273 = por %p271, %p272
    %p275 = scmp.ne.s32.totalorder %s260, %s274
    %p276 = scmp.eq.s32.totalorder %s25, 0
    %p277 = por %p275, %p276
    %s279 = sadd.s32 %s278, 1
    %p282 = scmp.eq.s32.totalorder %s19, 1
    %p283 = scmp.ne.s32.totalorder %s278, %s280
    %p284 = scmp.eq.s32.totalorder %s19, 0
    %p285 = por %p283, %p284
    %p286 = scmp.ne.s32.totalorder %s278, %s280
    %p287 = scmp.eq.s32.totalorder %s24, 1
    %p288 = por %p286, %p287
    %p289 = scmp.ne.s32.totalorder %s280, %s281
    %p290 = scmp.eq.s32.totalorder %s24, 0
    %p291 = por %p289, %p290
    %p292 = scmp.ne.s32.totalorder %s280, %s281
    %p293 = scmp.eq.s32.totalorder %s25, 1
    %p294 = por %p292, %p293
    %p296 = scmp.ne.s32.totalorder %s281, %s295
    %p297 = scmp.eq.s32.totalorder %s25, 0
    %p298 = por %p296, %p297
    %s300 = sadd.s32 %s299, 1
    %p303 = scmp.eq.s32.totalorder %s19, 1
    %p304 = scmp.ne.s32.totalorder %s299, %s301
    %p305 = scmp.eq.s32.totalorder %s19, 0
    %p306 = por %p304, %p305
    %p307 = scmp.ne.s32.totalorder %s299, %s301
    %p308 = scmp.eq.s32.totalorder %s24, 1
    %p309 = por %p307, %p308
    %p310 = scmp.ne.s32.totalorder %s301, %s302
    %p311 = scmp.eq.s32.totalorder %s24, 0
    %p312 = por %p310, %p311
    %p313 = scmp.ne.s32.totalorder %s301, %s302
    %p314 = scmp.eq.s32.totalorder %s25, 1
    %p315 = por %p313, %p314
    %p317 = scmp.ne.s32.totalorder %s302, %s316
    %p318 = scmp.eq.s32.totalorder %s25, 0
    %p319 = por %p317, %p318
    %s320 = ssub.s32 %s19, %s26
    %p321 = scmp.eq.s32.totalorder %s320, 0
    %s323 = sadd.s32 %s322, 1
    %s324 = scalar_select %p321, %s322, %s323
    %p327 = pneg %p321
    %p328 = scmp.eq.s32.totalorder %s19, 1
    %p329 = por %p327, %p328
    %p330 = scmp.ne.s32.totalorder %s322, %s325
    %p331 = scmp.eq.s32.totalorder %s19, 0
    %p332 = por %p330, %p331
    %p333 = scmp.ne.s32.totalorder %s322, %s325
    %p334 = scmp.eq.s32.totalorder %s24, 1
    %p335 = por %p333, %p334
    %p336 = scmp.ne.s32.totalorder %s325, %s326
    %p337 = scmp.eq.s32.totalorder %s24, 0
    %p338 = por %p336, %p337
    %p339 = scmp.ne.s32.totalorder %s325, %s326
    %p340 = scmp.eq.s32.totalorder %s25, 1
    %p341 = por %p339, %p340
    %p343 = scmp.ne.s32.totalorder %s326, %s342
    %p344 = scmp.eq.s32.totalorder %s25, 0
    %p345 = por %p343, %p344
    %p346 = scmp.le.s32.totalorder 1, %s19
    %p347 = scmp.lt.s32.totalorder %s19, 3
    %p348 = pnand %p346, %p347
    %p349 = pneg %p348
    // Predicated region
    $region9: #{ppd_forward.7} parent=5 // pred_check
      _
    $region10: #{ppd_forward.7} parent=5 // pred_check_branch
      %351 = sbr.rel (%p348) target = $region12
    $region11: #{ppd_forward.7} parent=5 // pred_region
      %s352 = ssub.s32 %s19, 1
      // Predicated region
      $region13: #{ppd_forward.7} parent=11 // pred_check
        %p353 = pneg %p66
      $region14: #{ppd_forward.7} parent=11 // pred_check_branch
        %355 = sbr.rel (%p353) target = $region16
      $region15: #{ppd_forward.7} parent=11 // pred_region
        _
      $region16: #{ppd_forward.7} parent=11 // pred_fallthru
        _
      // Predicated region
      $region17: #{ppd_forward.7} parent=11 // pred_check
        %p356 = pneg %p87
      $region18: #{ppd_forward.7} parent=11 // pred_check_branch
        %358 = sbr.rel (%p356) target = $region20
      $region19: #{ppd_forward.7} parent=11 // pred_region
        _
      $region20: #{ppd_forward.7} parent=11 // pred_fallthru
        _
      // Predicated region
      $region21: #{ppd_forward.7} parent=11 // pred_check
        %p359 = pneg %p108
      $region22: #{ppd_forward.7} parent=11 // pred_check_branch
        %361 = sbr.rel (%p359) target = $region24
      $region23: #{ppd_forward.7} parent=11 // pred_region
        _
      $region24: #{ppd_forward.7} parent=11 // pred_fallthru
        _
      // Predicated region
      $region25: #{ppd_forward.7} parent=11 // pred_check
        %p362 = pneg %p155
      $region26: #{ppd_forward.7} parent=11 // pred_check_branch
        %364 = sbr.rel (%p362) target = $region28
      $region27: #{ppd_forward.7} parent=11 // pred_region
        _
      $region28: #{ppd_forward.7} parent=11 // pred_fallthru
        _
      // Predicated region
      $region29: #{ppd_forward.7} parent=11 // pred_check
        %p365 = pneg %p176
      $region30: #{ppd_forward.7} parent=11 // pred_check_branch
        %367 = sbr.rel (%p365) target = $region32
      $region31: #{ppd_forward.7} parent=11 // pred_region
        _
      $region32: #{ppd_forward.7} parent=11 // pred_fallthru
        _
      // Predicated region
      $region33: #{ppd_forward.7} parent=11 // pred_check
        %p368 = pneg %p197
      $region34: #{ppd_forward.7} parent=11 // pred_check_branch
        %370 = sbr.rel (%p368) target = $region36
      $region35: #{ppd_forward.7} parent=11 // pred_region
        _
      $region36: #{ppd_forward.7} parent=11 // pred_fallthru
        _
      // Predicated region
      $region37: #{ppd_forward.7} parent=11 // pred_check
        %p371 = pneg %p270
      $region38: #{ppd_forward.7} parent=11 // pred_check_branch
        %373 = sbr.rel (%p371) target = $region40
      $region39: #{ppd_forward.7} parent=11 // pred_region
        _
      $region40: #{ppd_forward.7} parent=11 // pred_fallthru
        _
      // Predicated region
      $region41: #{ppd_forward.7} parent=11 // pred_check
        %p374 = pneg %p291
      $region42: #{ppd_forward.7} parent=11 // pred_check_branch
        %376 = sbr.rel (%p374) target = $region44
      $region43: #{ppd_forward.7} parent=11 // pred_region
        _
      $region44: #{ppd_forward.7} parent=11 // pred_fallthru
        _
      // Predicated region
      $region45: #{ppd_forward.7} parent=11 // pred_check
        %p377 = pneg %p312
      $region46: #{ppd_forward.7} parent=11 // pred_check_branch
        %379 = sbr.rel (%p377) target = $region48
      $region47: #{ppd_forward.7} parent=11 // pred_region
        _
      $region48: #{ppd_forward.7} parent=11 // pred_fallthru
        _
    $region12: #{ppd_forward.7} parent=5 // pred_fallthru
      _
    %p380 = scmp.lt.s32.totalorder %s19, 2
    // Predicated region
    $region49: #{ppd_forward.7} parent=5 // pred_check
      %p381 = pneg %p380
    $region50: #{ppd_forward.7} parent=5 // pred_check_branch
      %383 = sbr.rel (%p381) target = $region52
    $region51: #{ppd_forward.7} parent=5 // pred_region
      // Predicated region
      $region53: #{ppd_forward.7} parent=51 // pred_check
        %p384 = pneg %p39
      $region54: #{ppd_forward.7} parent=51 // pred_check_branch
        %386 = sbr.rel (%p384) target = $region56
      $region55: #{ppd_forward.7} parent=51 // pred_region
        %s387 = smul.u32 32, %s19
        %p388 = scmp.lt.s32.totalorder %s387, 63
        %s389 = scalar_select %p388, %s387, 63
        %s390 = smul.addr %s389, 4
        %s391 = scalar_lea.vmem %s0, %s390
        %s392 = smul.u32 32, %s19
      $region56: #{ppd_forward.7} parent=51 // pred_fallthru
        _
      // Predicated region
      $region57: #{ppd_forward.7} parent=51 // pred_check
        %p393 = pneg %p128
      $region58: #{ppd_forward.7} parent=51 // pred_check_branch
        %395 = sbr.rel (%p393) target = $region60
      $region59: #{ppd_forward.7} parent=51 // pred_region
        %s396 = smul.u32 32, %s19
        %p397 = scmp.lt.s32.totalorder %s396, 63
        %s398 = scalar_select %p397, %s396, 63
        %s399 = smul.addr %s398, 4
        %s400 = scalar_lea.vmem %s4, %s399
        %s401 = smul.u32 32, %s19
      $region60: #{ppd_forward.7} parent=51 // pred_fallthru
        _
      // Predicated region
      $region61: #{ppd_forward.7} parent=51 // pred_check
        %p402 = pneg %p217
      $region62: #{ppd_forward.7} parent=51 // pred_check_branch
        %404 = sbr.rel (%p402) target = $region64
      $region63: #{ppd_forward.7} parent=51 // pred_region
        %s405 = smul.u32 32, %s19
        %p406 = scmp.lt.s32.totalorder %s405, 63
        %s407 = scalar_select %p406, %s405, 63
        %s408 = smul.addr %s407, 8
        %s409 = scalar_lea.vmem %s8, %s408
        %s410 = smul.u32 32, %s19
      $region64: #{ppd_forward.7} parent=51 // pred_fallthru
        _
      // Predicated region
      $region65: #{ppd_forward.7} parent=51 // pred_check
        %p411 = pneg %p243
      $region66: #{ppd_forward.7} parent=51 // pred_check_branch
        %413 = sbr.rel (%p411) target = $region68
      $region67: #{ppd_forward.7} parent=51 // pred_region
        %s414 = smul.u32 32, %s19
        %p415 = scmp.lt.s32.totalorder %s414, 63
        %s416 = scalar_select %p415, %s414, 63
        %s417 = smul.addr %s416, 4
        %s418 = scalar_lea.vmem %s9, %s417
        %s419 = smul.u32 32, %s19
      $region68: #{ppd_forward.7} parent=51 // pred_fallthru
        _
    $region52: #{ppd_forward.7} parent=5 // pred_fallthru
      _
    %p420 = scmp.le.s32.totalorder 1, %s19
    %p421 = scmp.lt.s32.totalorder %s19, 3
    %p422 = pnand %p420, %p421
    %p423 = pneg %p422
    // Predicated region
    $region69: #{ppd_forward.7} parent=5 // pred_check
      _
    $region70: #{ppd_forward.7} parent=5 // pred_check_branch
      %425 = sbr.rel (%p422) target = $region72
    $region71: #{ppd_forward.7} parent=5 // pred_region
      %s426 = ssub.s32 %s19, 1
      %s427 = smul.u32 32, %s24
      %p428 = scmp.lt.s32.totalorder %s427, 63
      %s429 = scalar_select %p428, %s427, 63
      %s430 = smul.addr %s429, 4
      %s431 = scalar_lea.vmem %s0, %s430
      %p432 = pneg %p45
      %p433 = pneg %p42
      %p434 = pneg %p66
      %p435 = pneg %p63
      %p436 = pneg %p87
      %p437 = pneg %p84
      %p438 = pneg %p108
      %p439 = pneg %p105
      %s440 = smul.u32 32, %s24
      %p441 = scmp.lt.s32.totalorder %s440, 63
      %s442 = scalar_select %p441, %s440, 63
      %s443 = smul.addr %s442, 4
      %s444 = scalar_lea.vmem %s4, %s443
      %p445 = pneg %p134
      %p446 = pneg %p131
      %p447 = pneg %p155
      %p448 = pneg %p152
      %p449 = pneg %p176
      %p450 = pneg %p173
      %p451 = pneg %p197
      %p452 = pneg %p194
      %s453 = smul.u32 32, %s24
      %p454 = scmp.lt.s32.totalorder %s453, 63
      %s455 = scalar_select %p454, %s453, 63
      %s456 = smul.addr %s455, 8
      %s457 = scalar_lea.vmem %s8, %s456
      %p458 = pneg %p223
      %p459 = pneg %p220
      %s460 = smul.u32 32, %s24
      %p461 = scmp.lt.s32.totalorder %s460, 63
      %s462 = scalar_select %p461, %s460, 63
      %s463 = smul.addr %s462, 4
      %s464 = scalar_lea.vmem %s9, %s463
      %p465 = pneg %p249
      %p466 = pneg %p246
      %p467 = pneg %p270
      %p468 = pneg %p267
      %p469 = pneg %p291
      %p470 = pneg %p288
      %p471 = pneg %p312
      %p472 = pneg %p309
      %p473 = pneg %p338
      %p474 = pneg %p335
      %s475 = smul.u32 32, %s24
      %p476 = scmp.lt.s32.totalorder %s475, 63
      %s477 = scalar_select %p476, %s475, 63
      %s478 = smul.addr %s477, 8
      %s479 = scalar_lea.vmem %s13, %s478
      %s480 = smul.u32 32, %s24
      %p481 = scmp.lt.s32.totalorder %s480, 63
      %s482 = scalar_select %p481, %s480, 63
      %s483 = smul.addr %s482, 4
      %s484 = scalar_lea.vmem %s0, %s483
      %s485 = smul.u32 32, %s24
      %s486 = smul.u32 32, %s24
      %p487 = scmp.lt.s32.totalorder %s486, 63
      %s488 = scalar_select %p487, %s486, 63
      %s489 = smul.addr %s488, 4
      %s490 = scalar_lea.vmem %s4, %s489
      %s491 = smul.u32 32, %s24
      %s492 = smul.u32 32, %s24
      %p493 = scmp.lt.s32.totalorder %s492, 63
      %s494 = scalar_select %p493, %s492, 63
      %s495 = smul.addr %s494, 8
      %s496 = scalar_lea.vmem %s8, %s495
      %s497 = smul.u32 32, %s24
      %s498 = smul.u32 32, %s24
      %p499 = scmp.lt.s32.totalorder %s498, 63
      %s500 = scalar_select %p499, %s498, 63
      %s501 = smul.addr %s500, 4
      %s502 = scalar_lea.vmem %s9, %s501
      %s503 = smul.u32 32, %s24
      %s504 = smul.u32 32, %s24
      %p505 = scmp.lt.s32.totalorder %s504, 63
      %s506 = scalar_select %p505, %s504, 63
      %s507 = smul.addr %s506, 8
      %s508 = scalar_lea.vmem %s13, %s507
      %s509 = smul.u32 32, %s24
      %v510 = vld [vmem:[%s484] sm:$0xf]
      %v511 = vld [vmem:[%s484 + $0x4] sm:$0xf]
      %v512 = vld [vmem:[%s484 + $0x8] sm:$0xf]
      %v513 = vld [vmem:[%s484 + $0xc] sm:$0xf]
      %v514 = vld [vmem:[%s484 + $0x10] sm:$0xf]
      %v515 = vld [vmem:[%s484 + $0x14] sm:$0xf]
      %v516 = vld [vmem:[%s484 + $0x18] sm:$0xf]
      %v517 = vld [vmem:[%s484 + $0x1c] sm:$0xf]
      %v518 = vld [vmem:[%s484 + $0x20] sm:$0xf]
      %v519 = vld [vmem:[%s484 + $0x24] sm:$0xf]
      %v520 = vld [vmem:[%s484 + $0x28] sm:$0xf]
      %v521 = vld [vmem:[%s484 + $0x2c] sm:$0xf]
      %v522 = vld [vmem:[%s484 + $0x30] sm:$0xf]
      %v523 = vld [vmem:[%s484 + $0x34] sm:$0xf]
      %v524 = vld [vmem:[%s484 + $0x38] sm:$0xf]
      %v525 = vld [vmem:[%s484 + $0x3c] sm:$0xf]
      %v526 = vld [vmem:[%s484 + $0x40] sm:$0xf]
      %v527 = vld [vmem:[%s484 + $0x44] sm:$0xf]
      %v528 = vld [vmem:[%s484 + $0x48] sm:$0xf]
      %v529 = vld [vmem:[%s484 + $0x4c] sm:$0xf]
      %v530 = vld [vmem:[%s484 + $0x50] sm:$0xf]
      %v531 = vld [vmem:[%s484 + $0x54] sm:$0xf]
      %v532 = vld [vmem:[%s484 + $0x58] sm:$0xf]
      %v533 = vld [vmem:[%s484 + $0x5c] sm:$0xf]
      %v534 = vld [vmem:[%s484 + $0x60] sm:$0xf]
      %v535 = vld [vmem:[%s484 + $0x64] sm:$0xf]
      %v536 = vld [vmem:[%s484 + $0x68] sm:$0xf]
      %v537 = vld [vmem:[%s484 + $0x6c] sm:$0xf]
      %v538 = vld [vmem:[%s484 + $0x70] sm:$0xf]
      %v539 = vld [vmem:[%s484 + $0x74] sm:$0xf]
      %v540 = vld [vmem:[%s484 + $0x78] sm:$0xf]
      %v541 = vld [vmem:[%s484 + $0x7c] sm:$0xf]
      %v542 = vld [vmem:[%s1] sm:$0xf]
      %v543 = vld [vmem:[%s1 + $0x4] sm:$0xf]
      %v544 = vld [vmem:[%s1 + $0x8] sm:$0xf]
      %v545 = vld [vmem:[%s1 + $0xc] sm:$0xf]
      %v546 = vld [vmem:[%s1 + $0x10] sm:$0xf]
      %v547 = vld [vmem:[%s1 + $0x14] sm:$0xf]
      %v548 = vld [vmem:[%s1 + $0x18] sm:$0xf]
      %v549 = vld [vmem:[%s1 + $0x1c] sm:$0xf]
      %v550 = vld [vmem:[%s1 + $0x20] sm:$0xf]
      %v551 = vld [vmem:[%s1 + $0x24] sm:$0xf]
      %v552 = vld [vmem:[%s1 + $0x28] sm:$0xf]
      %v553 = vld [vmem:[%s1 + $0x2c] sm:$0xf]
      %v554 = vld [vmem:[%s1 + $0x30] sm:$0xf]
      %v555 = vld [vmem:[%s1 + $0x34] sm:$0xf]
      %v556 = vld [vmem:[%s1 + $0x38] sm:$0xf]
      %v557 = vld [vmem:[%s1 + $0x3c] sm:$0xf]
      %v590 = vunpack.c.l.b16 %v510
      %v591 = vunpack.c.l.b16 %v511
      %v592 = vunpack.c.l.b16 %v512
      %v593 = vunpack.c.l.b16 %v513
      %v594 = vunpack.c.l.b16 %v514
      %v595 = vunpack.c.l.b16 %v515
      %v596 = vunpack.c.l.b16 %v516
      %v597 = vunpack.c.l.b16 %v517
      %v598 = vunpack.c.l.b16 %v518
      %v599 = vunpack.c.l.b16 %v519
      %v600 = vunpack.c.l.b16 %v520
      %v601 = vunpack.c.l.b16 %v521
      %v602 = vunpack.c.l.b16 %v522
      %v603 = vunpack.c.l.b16 %v523
      %v604 = vunpack.c.l.b16 %v524
      %v605 = vunpack.c.l.b16 %v525
      %v606 = vunpack.c.l.b16 %v526
      %v607 = vunpack.c.l.b16 %v527
      %v608 = vunpack.c.l.b16 %v528
      %v609 = vunpack.c.l.b16 %v529
      %v610 = vunpack.c.l.b16 %v530
      %v611 = vunpack.c.l.b16 %v531
      %v612 = vunpack.c.l.b16 %v532
      %v613 = vunpack.c.l.b16 %v533
      %v614 = vunpack.c.l.b16 %v534
      %v615 = vunpack.c.l.b16 %v535
      %v616 = vunpack.c.l.b16 %v536
      %v617 = vunpack.c.l.b16 %v537
      %v618 = vunpack.c.l.b16 %v538
      %v619 = vunpack.c.l.b16 %v539
      %v620 = vunpack.c.l.b16 %v540
      %v621 = vunpack.c.l.b16 %v541
      %v622 = vpack.c.b16 %v591, %v590
      %v623 = vpack.c.b16 %v593, %v592
      %v624 = vpack.c.b16 %v595, %v594
      %v625 = vpack.c.b16 %v597, %v596
      %v626 = vpack.c.b16 %v599, %v598
      %v627 = vpack.c.b16 %v601, %v600
      %v628 = vpack.c.b16 %v603, %v602
      %v629 = vpack.c.b16 %v605, %v604
      %v630 = vpack.c.b16 %v607, %v606
      %v631 = vpack.c.b16 %v609, %v608
      %v632 = vpack.c.b16 %v611, %v610
      %v633 = vpack.c.b16 %v613, %v612
      %v634 = vpack.c.b16 %v615, %v614
      %v635 = vpack.c.b16 %v617, %v616
      %v636 = vpack.c.b16 %v619, %v618
      %v637 = vpack.c.b16 %v621, %v620
      %v670 = vunpack.c.l.b16 %v542
      %v671 = vunpack.c.l.b16 %v543
      %v672 = vunpack.c.l.b16 %v544
      %v673 = vunpack.c.l.b16 %v545
      %v674 = vunpack.c.l.b16 %v546
      %v675 = vunpack.c.l.b16 %v547
      %v676 = vunpack.c.l.b16 %v548
      %v677 = vunpack.c.l.b16 %v549
      %v678 = vunpack.c.l.b16 %v550
      %v679 = vunpack.c.l.b16 %v551
      %v680 = vunpack.c.l.b16 %v552
      %v681 = vunpack.c.l.b16 %v553
      %v682 = vunpack.c.l.b16 %v554
      %v683 = vunpack.c.l.b16 %v555
      %v684 = vunpack.c.l.b16 %v556
      %v685 = vunpack.c.l.b16 %v557
      %v686 = vpack.c.b16 %v671, %v670
      %v687 = vpack.c.b16 %v673, %v672
      %v688 = vpack.c.b16 %v675, %v674
      %v689 = vpack.c.b16 %v677, %v676
      %v690 = vpack.c.b16 %v679, %v678
      %v691 = vpack.c.b16 %v681, %v680
      %v692 = vpack.c.b16 %v683, %v682
      %v693 = vpack.c.b16 %v685, %v684
      %702 = vmatpush.bf16.msra.mxu0 %v693
      %703 = vmatpush.bf16.msra.mxu0 %v692
      %704 = vmatpush.bf16.msra.mxu0 %v691
      %705 = vmatpush.bf16.msra.mxu0 %v690
      %706 = vmatpush.bf16.msra.mxu0 %v689
      %707 = vmatpush.bf16.msra.mxu0 %v688
      %708 = vmatpush.bf16.msra.mxu0 %v687
      %709 = vmatpush.bf16.msra.mxu0 %v686
      %710 = vmatmul.bf16.gmra.mxu0 %v622
      %v711 = vpop.f32.mrf.mxu0
      %v712 = vadd.f32 0.0, %v711
      %v713 = vpop.f32.mrf.mxu0
      %v714 = vadd.f32 0.0, %v713
      %715 = vmatmul.bf16.gmra.mxu0 %v623
      %v716 = vpop.f32.mrf.mxu0
      %v717 = vadd.f32 0.0, %v716
      %v718 = vpop.f32.mrf.mxu0
      %v719 = vadd.f32 0.0, %v718
      %720 = vmatmul.bf16.gmra.mxu0 %v624
      %v721 = vpop.f32.mrf.mxu0
      %v722 = vadd.f32 0.0, %v721
      %v723 = vpop.f32.mrf.mxu0
      %v724 = vadd.f32 0.0, %v723
      %725 = vmatmul.bf16.gmra.mxu0 %v625
      %v726 = vpop.f32.mrf.mxu0
      %v727 = vadd.f32 0.0, %v726
      %v728 = vpop.f32.mrf.mxu0
      %v729 = vadd.f32 0.0, %v728
      %730 = vmatmul.bf16.gmra.mxu0 %v626
      %v731 = vpop.f32.mrf.mxu0
      %v732 = vadd.f32 0.0, %v731
      %v733 = vpop.f32.mrf.mxu0
      %v734 = vadd.f32 0.0, %v733
      %735 = vmatmul.bf16.gmra.mxu0 %v627
      %v736 = vpop.f32.mrf.mxu0
      %v737 = vadd.f32 0.0, %v736
      %v738 = vpop.f32.mrf.mxu0
      %v739 = vadd.f32 0.0, %v738
      %740 = vmatmul.bf16.gmra.mxu0 %v628
      %v741 = vpop.f32.mrf.mxu0
      %v742 = vadd.f32 0.0, %v741
      %v743 = vpop.f32.mrf.mxu0
      %v744 = vadd.f32 0.0, %v743
      %745 = vmatmul.bf16.gmra.mxu0 %v629
      %v746 = vpop.f32.mrf.mxu0
      %v747 = vadd.f32 0.0, %v746
      %v748 = vpop.f32.mrf.mxu0
      %v749 = vadd.f32 0.0, %v748
      %750 = vmatmul.bf16.gmra.mxu0 %v630
      %v751 = vpop.f32.mrf.mxu0
      %v752 = vadd.f32 0.0, %v751
      %v753 = vpop.f32.mrf.mxu0
      %v754 = vadd.f32 0.0, %v753
      %755 = vmatmul.bf16.gmra.mxu0 %v631
      %v756 = vpop.f32.mrf.mxu0
      %v757 = vadd.f32 0.0, %v756
      %v758 = vpop.f32.mrf.mxu0
      %v759 = vadd.f32 0.0, %v758
      %760 = vmatmul.bf16.gmra.mxu0 %v632
      %v761 = vpop.f32.mrf.mxu0
      %v762 = vadd.f32 0.0, %v761
      %v763 = vpop.f32.mrf.mxu0
      %v764 = vadd.f32 0.0, %v763
      %765 = vmatmul.bf16.gmra.mxu0 %v633
      %v766 = vpop.f32.mrf.mxu0
      %v767 = vadd.f32 0.0, %v766
      %v768 = vpop.f32.mrf.mxu0
      %v769 = vadd.f32 0.0, %v768
      %770 = vmatmul.bf16.gmra.mxu0 %v634
      %v771 = vpop.f32.mrf.mxu0
      %v772 = vadd.f32 0.0, %v771
      %v773 = vpop.f32.mrf.mxu0
      %v774 = vadd.f32 0.0, %v773
      %775 = vmatmul.bf16.gmra.mxu0 %v635
      %v776 = vpop.f32.mrf.mxu0
      %v777 = vadd.f32 0.0, %v776
      %v778 = vpop.f32.mrf.mxu0
      %v779 = vadd.f32 0.0, %v778
      %780 = vmatmul.bf16.gmra.mxu0 %v636
      %v781 = vpop.f32.mrf.mxu0
      %v782 = vadd.f32 0.0, %v781
      %v783 = vpop.f32.mrf.mxu0
      %v784 = vadd.f32 0.0, %v783
      %785 = vmatmul.bf16.gmra.mxu0 %v637
      %v786 = vpop.f32.mrf.mxu0
      %v787 = vadd.f32 0.0, %v786
      %v788 = vpop.f32.mrf.mxu0
      %v789 = vadd.f32 0.0, %v788
      %790 = vdwg.mxu0
      %v791 = vld [vmem:[%s490] sm:$0xf]
      %v792 = vld [vmem:[%s490 + $0x4] sm:$0xf]
      %v793 = vld [vmem:[%s490 + $0x8] sm:$0xf]
      %v794 = vld [vmem:[%s490 + $0xc] sm:$0xf]
      %v795 = vld [vmem:[%s490 + $0x10] sm:$0xf]
      %v796 = vld [vmem:[%s490 + $0x14] sm:$0xf]
      %v797 = vld [vmem:[%s490 + $0x18] sm:$0xf]
      %v798 = vld [vmem:[%s490 + $0x1c] sm:$0xf]
      %v799 = vld [vmem:[%s490 + $0x20] sm:$0xf]
      %v800 = vld [vmem:[%s490 + $0x24] sm:$0xf]
      %v801 = vld [vmem:[%s490 + $0x28] sm:$0xf]
      %v802 = vld [vmem:[%s490 + $0x2c] sm:$0xf]
      %v803 = vld [vmem:[%s490 + $0x30] sm:$0xf]
      %v804 = vld [vmem:[%s490 + $0x34] sm:$0xf]
      %v805 = vld [vmem:[%s490 + $0x38] sm:$0xf]
      %v806 = vld [vmem:[%s490 + $0x3c] sm:$0xf]
      %v807 = vld [vmem:[%s490 + $0x40] sm:$0xf]
      %v808 = vld [vmem:[%s490 + $0x44] sm:$0xf]
      %v809 = vld [vmem:[%s490 + $0x48] sm:$0xf]
      %v810 = vld [vmem:[%s490 + $0x4c] sm:$0xf]
      %v811 = vld [vmem:[%s490 + $0x50] sm:$0xf]
      %v812 = vld [vmem:[%s490 + $0x54] sm:$0xf]
      %v813 = vld [vmem:[%s490 + $0x58] sm:$0xf]
      %v814 = vld [vmem:[%s490 + $0x5c] sm:$0xf]
      %v815 = vld [vmem:[%s490 + $0x60] sm:$0xf]
      %v816 = vld [vmem:[%s490 + $0x64] sm:$0xf]
      %v817 = vld [vmem:[%s490 + $0x68] sm:$0xf]
      %v818 = vld [vmem:[%s490 + $0x6c] sm:$0xf]
      %v819 = vld [vmem:[%s490 + $0x70] sm:$0xf]
      %v820 = vld [vmem:[%s490 + $0x74] sm:$0xf]
      %v821 = vld [vmem:[%s490 + $0x78] sm:$0xf]
      %v822 = vld [vmem:[%s490 + $0x7c] sm:$0xf]
      %v823 = vld [vmem:[%s5] sm:$0xf]
      %v824 = vld [vmem:[%s5 + $0x4] sm:$0xf]
      %v825 = vld [vmem:[%s5 + $0x8] sm:$0xf]
      %v826 = vld [vmem:[%s5 + $0xc] sm:$0xf]
      %v827 = vld [vmem:[%s5 + $0x10] sm:$0xf]
      %v828 = vld [vmem:[%s5 + $0x14] sm:$0xf]
      %v829 = vld [vmem:[%s5 + $0x18] sm:$0xf]
      %v830 = vld [vmem:[%s5 + $0x1c] sm:$0xf]
      %v831 = vld [vmem:[%s5 + $0x20] sm:$0xf]
      %v832 = vld [vmem:[%s5 + $0x24] sm:$0xf]
      %v833 = vld [vmem:[%s5 + $0x28] sm:$0xf]
      %v834 = vld [vmem:[%s5 + $0x2c] sm:$0xf]
      %v835 = vld [vmem:[%s5 + $0x30] sm:$0xf]
      %v836 = vld [vmem:[%s5 + $0x34] sm:$0xf]
      %v837 = vld [vmem:[%s5 + $0x38] sm:$0xf]
      %v838 = vld [vmem:[%s5 + $0x3c] sm:$0xf]
      %v871 = vunpack.c.l.b16 %v791
      %v872 = vunpack.c.l.b16 %v792
      %v873 = vunpack.c.l.b16 %v793
      %v874 = vunpack.c.l.b16 %v794
      %v875 = vunpack.c.l.b16 %v795
      %v876 = vunpack.c.l.b16 %v796
      %v877 = vunpack.c.l.b16 %v797
      %v878 = vunpack.c.l.b16 %v798
      %v879 = vunpack.c.l.b16 %v799
      %v880 = vunpack.c.l.b16 %v800
      %v881 = vunpack.c.l.b16 %v801
      %v882 = vunpack.c.l.b16 %v802
      %v883 = vunpack.c.l.b16 %v803
      %v884 = vunpack.c.l.b16 %v804
      %v885 = vunpack.c.l.b16 %v805
      %v886 = vunpack.c.l.b16 %v806
      %v887 = vunpack.c.l.b16 %v807
      %v888 = vunpack.c.l.b16 %v808
      %v889 = vunpack.c.l.b16 %v809
      %v890 = vunpack.c.l.b16 %v810
      %v891 = vunpack.c.l.b16 %v811
      %v892 = vunpack.c.l.b16 %v812
      %v893 = vunpack.c.l.b16 %v813
      %v894 = vunpack.c.l.b16 %v814
      %v895 = vunpack.c.l.b16 %v815
      %v896 = vunpack.c.l.b16 %v816
      %v897 = vunpack.c.l.b16 %v817
      %v898 = vunpack.c.l.b16 %v818
      %v899 = vunpack.c.l.b16 %v819
      %v900 = vunpack.c.l.b16 %v820
      %v901 = vunpack.c.l.b16 %v821
      %v902 = vunpack.c.l.b16 %v822
      %v903 = vpack.c.b16 %v872, %v871
      %v904 = vpack.c.b16 %v874, %v873
      %v905 = vpack.c.b16 %v876, %v875
      %v906 = vpack.c.b16 %v878, %v877
      %v907 = vpack.c.b16 %v880, %v879
      %v908 = vpack.c.b16 %v882, %v881
      %v909 = vpack.c.b16 %v884, %v883
      %v910 = vpack.c.b16 %v886, %v885
      %v911 = vpack.c.b16 %v888, %v887
      %v912 = vpack.c.b16 %v890, %v889
      %v913 = vpack.c.b16 %v892, %v891
      %v914 = vpack.c.b16 %v894, %v893
      %v915 = vpack.c.b16 %v896, %v895
      %v916 = vpack.c.b16 %v898, %v897
      %v917 = vpack.c.b16 %v900, %v899
      %v918 = vpack.c.b16 %v902, %v901
      %v951 = vunpack.c.l.b16 %v823
      %v952 = vunpack.c.l.b16 %v824
      %v953 = vunpack.c.l.b16 %v825
      %v954 = vunpack.c.l.b16 %v826
      %v955 = vunpack.c.l.b16 %v827
      %v956 = vunpack.c.l.b16 %v828
      %v957 = vunpack.c.l.b16 %v829
      %v958 = vunpack.c.l.b16 %v830
      %v959 = vunpack.c.l.b16 %v831
      %v960 = vunpack.c.l.b16 %v832
      %v961 = vunpack.c.l.b16 %v833
      %v962 = vunpack.c.l.b16 %v834
      %v963 = vunpack.c.l.b16 %v835
      %v964 = vunpack.c.l.b16 %v836
      %v965 = vunpack.c.l.b16 %v837
      %v966 = vunpack.c.l.b16 %v838
      %v967 = vpack.c.b16 %v952, %v951
      %v968 = vpack.c.b16 %v954, %v953
      %v969 = vpack.c.b16 %v956, %v955
      %v970 = vpack.c.b16 %v958, %v957
      %v971 = vpack.c.b16 %v960, %v959
      %v972 = vpack.c.b16 %v962, %v961
      %v973 = vpack.c.b16 %v964, %v963
      %v974 = vpack.c.b16 %v966, %v965
      %983 = vmatpush.bf16.msra.mxu0 %v974
      %984 = vmatpush.bf16.msra.mxu0 %v973
      %985 = vmatpush.bf16.msra.mxu0 %v972
      %986 = vmatpush.bf16.msra.mxu0 %v971
      %987 = vmatpush.bf16.msra.mxu0 %v970
      %988 = vmatpush.bf16.msra.mxu0 %v969
      %989 = vmatpush.bf16.msra.mxu0 %v968
      %990 = vmatpush.bf16.msra.mxu0 %v967
      %991 = vmatmul.bf16.gmra.mxu0 %v903
      %v992 = vpop.f32.mrf.mxu0
      %v993 = vadd.f32 0.0, %v992
      %v994 = vpop.f32.mrf.mxu0
      %v995 = vadd.f32 0.0, %v994
      %996 = vmatmul.bf16.gmra.mxu0 %v904
      %v997 = vpop.f32.mrf.mxu0
      %v998 = vadd.f32 0.0, %v997
      %v999 = vpop.f32.mrf.mxu0
      %v1000 = vadd.f32 0.0, %v999
      %1001 = vmatmul.bf16.gmra.mxu0 %v905
      %v1002 = vpop.f32.mrf.mxu0
      %v1003 = vadd.f32 0.0, %v1002
      %v1004 = vpop.f32.mrf.mxu0
      %v1005 = vadd.f32 0.0, %v1004
      %1006 = vmatmul.bf16.gmra.mxu0 %v906
      %v1007 = vpop.f32.mrf.mxu0
      %v1008 = vadd.f32 0.0, %v1007
      %v1009 = vpop.f32.mrf.mxu0
      %v1010 = vadd.f32 0.0, %v1009
      %1011 = vmatmul.bf16.gmra.mxu0 %v907
      %v1012 = vpop.f32.mrf.mxu0
      %v1013 = vadd.f32 0.0, %v1012
      %v1014 = vpop.f32.mrf.mxu0
      %v1015 = vadd.f32 0.0, %v1014
      %1016 = vmatmul.bf16.gmra.mxu0 %v908
      %v1017 = vpop.f32.mrf.mxu0
      %v1018 = vadd.f32 0.0, %v1017
      %v1019 = vpop.f32.mrf.mxu0
      %v1020 = vadd.f32 0.0, %v1019
      %1021 = vmatmul.bf16.gmra.mxu0 %v909
      %v1022 = vpop.f32.mrf.mxu0
      %v1023 = vadd.f32 0.0, %v1022
      %v1024 = vpop.f32.mrf.mxu0
      %v1025 = vadd.f32 0.0, %v1024
      %1026 = vmatmul.bf16.gmra.mxu0 %v910
      %v1027 = vpop.f32.mrf.mxu0
      %v1028 = vadd.f32 0.0, %v1027
      %v1029 = vpop.f32.mrf.mxu0
      %v1030 = vadd.f32 0.0, %v1029
      %1031 = vmatmul.bf16.gmra.mxu0 %v911
      %v1032 = vpop.f32.mrf.mxu0
      %v1033 = vadd.f32 0.0, %v1032
      %v1034 = vpop.f32.mrf.mxu0
      %v1035 = vadd.f32 0.0, %v1034
      %1036 = vmatmul.bf16.gmra.mxu0 %v912
      %v1037 = vpop.f32.mrf.mxu0
      %v1038 = vadd.f32 0.0, %v1037
      %v1039 = vpop.f32.mrf.mxu0
      %v1040 = vadd.f32 0.0, %v1039
      %1041 = vmatmul.bf16.gmra.mxu0 %v913
      %v1042 = vpop.f32.mrf.mxu0
      %v1043 = vadd.f32 0.0, %v1042
      %v1044 = vpop.f32.mrf.mxu0
      %v1045 = vadd.f32 0.0, %v1044
      %1046 = vmatmul.bf16.gmra.mxu0 %v914
      %v1047 = vpop.f32.mrf.mxu0
      %v1048 = vadd.f32 0.0, %v1047
      %v1049 = vpop.f32.mrf.mxu0
      %v1050 = vadd.f32 0.0, %v1049
      %1051 = vmatmul.bf16.gmra.mxu0 %v915
      %v1052 = vpop.f32.mrf.mxu0
      %v1053 = vadd.f32 0.0, %v1052
      %v1054 = vpop.f32.mrf.mxu0
      %v1055 = vadd.f32 0.0, %v1054
      %1056 = vmatmul.bf16.gmra.mxu0 %v916
      %v1057 = vpop.f32.mrf.mxu0
      %v1058 = vadd.f32 0.0, %v1057
      %v1059 = vpop.f32.mrf.mxu0
      %v1060 = vadd.f32 0.0, %v1059
      %1061 = vmatmul.bf16.gmra.mxu0 %v917
      %v1062 = vpop.f32.mrf.mxu0
      %v1063 = vadd.f32 0.0, %v1062
      %v1064 = vpop.f32.mrf.mxu0
      %v1065 = vadd.f32 0.0, %v1064
      %1066 = vmatmul.bf16.gmra.mxu0 %v918
      %v1067 = vpop.f32.mrf.mxu0
      %v1068 = vadd.f32 0.0, %v1067
      %v1069 = vpop.f32.mrf.mxu0
      %v1070 = vadd.f32 0.0, %v1069
      %1071 = vdwg.mxu0
      %v1072 = vld [vmem:[%s502] sm:$0xf]
      %v1073 = vld [vmem:[%s502 + $0x4] sm:$0xf]
      %v1074 = vld [vmem:[%s502 + $0x8] sm:$0xf]
      %v1075 = vld [vmem:[%s502 + $0xc] sm:$0xf]
      %v1076 = vld [vmem:[%s502 + $0x10] sm:$0xf]
      %v1077 = vld [vmem:[%s502 + $0x14] sm:$0xf]
      %v1078 = vld [vmem:[%s502 + $0x18] sm:$0xf]
      %v1079 = vld [vmem:[%s502 + $0x1c] sm:$0xf]
      %v1080 = vld [vmem:[%s502 + $0x20] sm:$0xf]
      %v1081 = vld [vmem:[%s502 + $0x24] sm:$0xf]
      %v1082 = vld [vmem:[%s502 + $0x28] sm:$0xf]
      %v1083 = vld [vmem:[%s502 + $0x2c] sm:$0xf]
      %v1084 = vld [vmem:[%s502 + $0x30] sm:$0xf]
      %v1085 = vld [vmem:[%s502 + $0x34] sm:$0xf]
      %v1086 = vld [vmem:[%s502 + $0x38] sm:$0xf]
      %v1087 = vld [vmem:[%s502 + $0x3c] sm:$0xf]
      %v1088 = vld [vmem:[%s502 + $0x40] sm:$0xf]
      %v1089 = vld [vmem:[%s502 + $0x44] sm:$0xf]
      %v1090 = vld [vmem:[%s502 + $0x48] sm:$0xf]
      %v1091 = vld [vmem:[%s502 + $0x4c] sm:$0xf]
      %v1092 = vld [vmem:[%s502 + $0x50] sm:$0xf]
      %v1093 = vld [vmem:[%s502 + $0x54] sm:$0xf]
      %v1094 = vld [vmem:[%s502 + $0x58] sm:$0xf]
      %v1095 = vld [vmem:[%s502 + $0x5c] sm:$0xf]
      %v1096 = vld [vmem:[%s502 + $0x60] sm:$0xf]
      %v1097 = vld [vmem:[%s502 + $0x64] sm:$0xf]
      %v1098 = vld [vmem:[%s502 + $0x68] sm:$0xf]
      %v1099 = vld [vmem:[%s502 + $0x6c] sm:$0xf]
      %v1100 = vld [vmem:[%s502 + $0x70] sm:$0xf]
      %v1101 = vld [vmem:[%s502 + $0x74] sm:$0xf]
      %v1102 = vld [vmem:[%s502 + $0x78] sm:$0xf]
      %v1103 = vld [vmem:[%s502 + $0x7c] sm:$0xf]
      %v1104 = vld [vmem:[%s10] sm:$0xf]
      %v1105 = vld [vmem:[%s10 + $0x4] sm:$0xf]
      %v1106 = vld [vmem:[%s10 + $0x8] sm:$0xf]
      %v1107 = vld [vmem:[%s10 + $0xc] sm:$0xf]
      %v1108 = vld [vmem:[%s10 + $0x10] sm:$0xf]
      %v1109 = vld [vmem:[%s10 + $0x14] sm:$0xf]
      %v1110 = vld [vmem:[%s10 + $0x18] sm:$0xf]
      %v1111 = vld [vmem:[%s10 + $0x1c] sm:$0xf]
      %v1112 = vld [vmem:[%s10 + $0x20] sm:$0xf]
      %v1113 = vld [vmem:[%s10 + $0x24] sm:$0xf]
      %v1114 = vld [vmem:[%s10 + $0x28] sm:$0xf]
      %v1115 = vld [vmem:[%s10 + $0x2c] sm:$0xf]
      %v1116 = vld [vmem:[%s10 + $0x30] sm:$0xf]
      %v1117 = vld [vmem:[%s10 + $0x34] sm:$0xf]
      %v1118 = vld [vmem:[%s10 + $0x38] sm:$0xf]
      %v1119 = vld [vmem:[%s10 + $0x3c] sm:$0xf]
      %v1152 = vunpack.c.l.b16 %v1072
      %v1153 = vunpack.c.l.b16 %v1073
      %v1154 = vunpack.c.l.b16 %v1074
      %v1155 = vunpack.c.l.b16 %v1075
      %v1156 = vunpack.c.l.b16 %v1076
      %v1157 = vunpack.c.l.b16 %v1077
      %v1158 = vunpack.c.l.b16 %v1078
      %v1159 = vunpack.c.l.b16 %v1079
      %v1160 = vunpack.c.l.b16 %v1080
      %v1161 = vunpack.c.l.b16 %v1081
      %v1162 = vunpack.c.l.b16 %v1082
      %v1163 = vunpack.c.l.b16 %v1083
      %v1164 = vunpack.c.l.b16 %v1084
      %v1165 = vunpack.c.l.b16 %v1085
      %v1166 = vunpack.c.l.b16 %v1086
      %v1167 = vunpack.c.l.b16 %v1087
      %v1168 = vunpack.c.l.b16 %v1088
      %v1169 = vunpack.c.l.b16 %v1089
      %v1170 = vunpack.c.l.b16 %v1090
      %v1171 = vunpack.c.l.b16 %v1091
      %v1172 = vunpack.c.l.b16 %v1092
      %v1173 = vunpack.c.l.b16 %v1093
      %v1174 = vunpack.c.l.b16 %v1094
      %v1175 = vunpack.c.l.b16 %v1095
      %v1176 = vunpack.c.l.b16 %v1096
      %v1177 = vunpack.c.l.b16 %v1097
      %v1178 = vunpack.c.l.b16 %v1098
      %v1179 = vunpack.c.l.b16 %v1099
      %v1180 = vunpack.c.l.b16 %v1100
      %v1181 = vunpack.c.l.b16 %v1101
      %v1182 = vunpack.c.l.b16 %v1102
      %v1183 = vunpack.c.l.b16 %v1103
      %v1184 = vpack.c.b16 %v1153, %v1152
      %v1185 = vpack.c.b16 %v1155, %v1154
      %v1186 = vpack.c.b16 %v1157, %v1156
      %v1187 = vpack.c.b16 %v1159, %v1158
      %v1188 = vpack.c.b16 %v1161, %v1160
      %v1189 = vpack.c.b16 %v1163, %v1162
      %v1190 = vpack.c.b16 %v1165, %v1164
      %v1191 = vpack.c.b16 %v1167, %v1166
      %v1192 = vpack.c.b16 %v1169, %v1168
      %v1193 = vpack.c.b16 %v1171, %v1170
      %v1194 = vpack.c.b16 %v1173, %v1172
      %v1195 = vpack.c.b16 %v1175, %v1174
      %v1196 = vpack.c.b16 %v1177, %v1176
      %v1197 = vpack.c.b16 %v1179, %v1178
      %v1198 = vpack.c.b16 %v1181, %v1180
      %v1199 = vpack.c.b16 %v1183, %v1182
      %v1232 = vunpack.c.l.b16 %v1104
      %v1233 = vunpack.c.l.b16 %v1105
      %v1234 = vunpack.c.l.b16 %v1106
      %v1235 = vunpack.c.l.b16 %v1107
      %v1236 = vunpack.c.l.b16 %v1108
      %v1237 = vunpack.c.l.b16 %v1109
      %v1238 = vunpack.c.l.b16 %v1110
      %v1239 = vunpack.c.l.b16 %v1111
      %v1240 = vunpack.c.l.b16 %v1112
      %v1241 = vunpack.c.l.b16 %v1113
      %v1242 = vunpack.c.l.b16 %v1114
      %v1243 = vunpack.c.l.b16 %v1115
      %v1244 = vunpack.c.l.b16 %v1116
      %v1245 = vunpack.c.l.b16 %v1117
      %v1246 = vunpack.c.l.b16 %v1118
      %v1247 = vunpack.c.l.b16 %v1119
      %v1248 = vpack.c.b16 %v1233, %v1232
      %v1249 = vpack.c.b16 %v1235, %v1234
      %v1250 = vpack.c.b16 %v1237, %v1236
      %v1251 = vpack.c.b16 %v1239, %v1238
      %v1252 = vpack.c.b16 %v1241, %v1240
      %v1253 = vpack.c.b16 %v1243, %v1242
      %v1254 = vpack.c.b16 %v1245, %v1244
      %v1255 = vpack.c.b16 %v1247, %v1246
      %1264 = vmatpush.bf16.msra.mxu0 %v1255
      %1265 = vmatpush.bf16.msra.mxu0 %v1254
      %1266 = vmatpush.bf16.msra.mxu0 %v1253
      %1267 = vmatpush.bf16.msra.mxu0 %v1252
      %1268 = vmatpush.bf16.msra.mxu0 %v1251
      %1269 = vmatpush.bf16.msra.mxu0 %v1250
      %1270 = vmatpush.bf16.msra.mxu0 %v1249
      %1271 = vmatpush.bf16.msra.mxu0 %v1248
      %1272 = vmatmul.bf16.gmra.mxu0 %v1184
      %v1273 = vpop.f32.mrf.mxu0
      %v1274 = vadd.f32 0.0, %v1273
      %v1275 = vpop.f32.mrf.mxu0
      %v1276 = vadd.f32 0.0, %v1275
      %1277 = vmatmul.bf16.gmra.mxu0 %v1185
      %v1278 = vpop.f32.mrf.mxu0
      %v1279 = vadd.f32 0.0, %v1278
      %v1280 = vpop.f32.mrf.mxu0
      %v1281 = vadd.f32 0.0, %v1280
      %1282 = vmatmul.bf16.gmra.mxu0 %v1186
      %v1283 = vpop.f32.mrf.mxu0
      %v1284 = vadd.f32 0.0, %v1283
      %v1285 = vpop.f32.mrf.mxu0
      %v1286 = vadd.f32 0.0, %v1285
      %1287 = vmatmul.bf16.gmra.mxu0 %v1187
      %v1288 = vpop.f32.mrf.mxu0
      %v1289 = vadd.f32 0.0, %v1288
      %v1290 = vpop.f32.mrf.mxu0
      %v1291 = vadd.f32 0.0, %v1290
      %1292 = vmatmul.bf16.gmra.mxu0 %v1188
      %v1293 = vpop.f32.mrf.mxu0
      %v1294 = vadd.f32 0.0, %v1293
      %v1295 = vpop.f32.mrf.mxu0
      %v1296 = vadd.f32 0.0, %v1295
      %1297 = vmatmul.bf16.gmra.mxu0 %v1189
      %v1298 = vpop.f32.mrf.mxu0
      %v1299 = vadd.f32 0.0, %v1298
      %v1300 = vpop.f32.mrf.mxu0
      %v1301 = vadd.f32 0.0, %v1300
      %1302 = vmatmul.bf16.gmra.mxu0 %v1190
      %v1303 = vpop.f32.mrf.mxu0
      %v1304 = vadd.f32 0.0, %v1303
      %v1305 = vpop.f32.mrf.mxu0
      %v1306 = vadd.f32 0.0, %v1305
      %1307 = vmatmul.bf16.gmra.mxu0 %v1191
      %v1308 = vpop.f32.mrf.mxu0
      %v1309 = vadd.f32 0.0, %v1308
      %v1310 = vpop.f32.mrf.mxu0
      %v1311 = vadd.f32 0.0, %v1310
      %1312 = vmatmul.bf16.gmra.mxu0 %v1192
      %v1313 = vpop.f32.mrf.mxu0
      %v1314 = vadd.f32 0.0, %v1313
      %v1315 = vpop.f32.mrf.mxu0
      %v1316 = vadd.f32 0.0, %v1315
      %1317 = vmatmul.bf16.gmra.mxu0 %v1193
      %v1318 = vpop.f32.mrf.mxu0
      %v1319 = vadd.f32 0.0, %v1318
      %v1320 = vpop.f32.mrf.mxu0
      %v1321 = vadd.f32 0.0, %v1320
      %1322 = vmatmul.bf16.gmra.mxu0 %v1194
      %v1323 = vpop.f32.mrf.mxu0
      %v1324 = vadd.f32 0.0, %v1323
      %v1325 = vpop.f32.mrf.mxu0
      %v1326 = vadd.f32 0.0, %v1325
      %1327 = vmatmul.bf16.gmra.mxu0 %v1195
      %v1328 = vpop.f32.mrf.mxu0
      %v1329 = vadd.f32 0.0, %v1328
      %v1330 = vpop.f32.mrf.mxu0
      %v1331 = vadd.f32 0.0, %v1330
      %1332 = vmatmul.bf16.gmra.mxu0 %v1196
      %v1333 = vpop.f32.mrf.mxu0
      %v1334 = vadd.f32 0.0, %v1333
      %v1335 = vpop.f32.mrf.mxu0
      %v1336 = vadd.f32 0.0, %v1335
      %1337 = vmatmul.bf16.gmra.mxu0 %v1197
      %v1338 = vpop.f32.mrf.mxu0
      %v1339 = vadd.f32 0.0, %v1338
      %v1340 = vpop.f32.mrf.mxu0
      %v1341 = vadd.f32 0.0, %v1340
      %1342 = vmatmul.bf16.gmra.mxu0 %v1198
      %v1343 = vpop.f32.mrf.mxu0
      %v1344 = vadd.f32 0.0, %v1343
      %v1345 = vpop.f32.mrf.mxu0
      %v1346 = vadd.f32 0.0, %v1345
      %1347 = vmatmul.bf16.gmra.mxu0 %v1199
      %v1348 = vpop.f32.mrf.mxu0
      %v1349 = vadd.f32 0.0, %v1348
      %v1350 = vpop.f32.mrf.mxu0
      %v1351 = vadd.f32 0.0, %v1350
      %1352 = vdwg.mxu0
      %v1353 = vld [vmem:[%s2] sm:$0x1]
      %v1355 = vperm.slane %v1353, 0
      %v1357 = vmul.f32 %v712, %v1355
      %v1358 = vmul.f32 %v714, %v1355
      %v1359 = vmul.f32 %v717, %v1355
      %v1360 = vmul.f32 %v719, %v1355
      %v1361 = vmul.f32 %v722, %v1355
      %v1362 = vmul.f32 %v724, %v1355
      %v1363 = vmul.f32 %v727, %v1355
      %v1364 = vmul.f32 %v729, %v1355
      %v1365 = vmul.f32 %v732, %v1355
      %v1366 = vmul.f32 %v734, %v1355
      %v1367 = vmul.f32 %v737, %v1355
      %v1368 = vmul.f32 %v739, %v1355
      %v1369 = vmul.f32 %v742, %v1355
      %v1370 = vmul.f32 %v744, %v1355
      %v1371 = vmul.f32 %v747, %v1355
      %v1372 = vmul.f32 %v749, %v1355
      %v1373 = vmul.f32 %v752, %v1355
      %v1374 = vmul.f32 %v754, %v1355
      %v1375 = vmul.f32 %v757, %v1355
      %v1376 = vmul.f32 %v759, %v1355
      %v1377 = vmul.f32 %v762, %v1355
      %v1378 = vmul.f32 %v764, %v1355
      %v1379 = vmul.f32 %v767, %v1355
      %v1380 = vmul.f32 %v769, %v1355
      %v1381 = vmul.f32 %v772, %v1355
      %v1382 = vmul.f32 %v774, %v1355
      %v1383 = vmul.f32 %v777, %v1355
      %v1384 = vmul.f32 %v779, %v1355
      %v1385 = vmul.f32 %v782, %v1355
      %v1386 = vmul.f32 %v784, %v1355
      %v1387 = vmul.f32 %v787, %v1355
      %v1388 = vmul.f32 %v789, %v1355
      %v1389 = vld [vmem:[%s3] sm:$0x1]
      %v1391 = vperm.slane %v1389, 0
      %v1393 = vadd.f32 %v1357, %v1391
      %v1394 = vadd.f32 %v1358, %v1391
      %v1395 = vadd.f32 %v1359, %v1391
      %v1396 = vadd.f32 %v1360, %v1391
      %v1397 = vadd.f32 %v1361, %v1391
      %v1398 = vadd.f32 %v1362, %v1391
      %v1399 = vadd.f32 %v1363, %v1391
      %v1400 = vadd.f32 %v1364, %v1391
      %v1401 = vadd.f32 %v1365, %v1391
      %v1402 = vadd.f32 %v1366, %v1391
      %v1403 = vadd.f32 %v1367, %v1391
      %v1404 = vadd.f32 %v1368, %v1391
      %v1405 = vadd.f32 %v1369, %v1391
      %v1406 = vadd.f32 %v1370, %v1391
      %v1407 = vadd.f32 %v1371, %v1391
      %v1408 = vadd.f32 %v1372, %v1391
      %v1409 = vadd.f32 %v1373, %v1391
      %v1410 = vadd.f32 %v1374, %v1391
      %v1411 = vadd.f32 %v1375, %v1391
      %v1412 = vadd.f32 %v1376, %v1391
      %v1413 = vadd.f32 %v1377, %v1391
      %v1414 = vadd.f32 %v1378, %v1391
      %v1415 = vadd.f32 %v1379, %v1391
      %v1416 = vadd.f32 %v1380, %v1391
      %v1417 = vadd.f32 %v1381, %v1391
      %v1418 = vadd.f32 %v1382, %v1391
      %v1419 = vadd.f32 %v1383, %v1391
      %v1420 = vadd.f32 %v1384, %v1391
      %v1421 = vadd.f32 %v1385, %v1391
      %v1422 = vadd.f32 %v1386, %v1391
      %v1423 = vadd.f32 %v1387, %v1391
      %v1424 = vadd.f32 %v1388, %v1391
      %v1425 = vld [vmem:[%s6] sm:$0x1]
      %v1427 = vperm.slane %v1425, 0
      %v1429 = vmul.f32 %v993, %v1427
      %v1430 = vmul.f32 %v995, %v1427
      %v1431 = vmul.f32 %v998, %v1427
      %v1432 = vmul.f32 %v1000, %v1427
      %v1433 = vmul.f32 %v1003, %v1427
      %v1434 = vmul.f32 %v1005, %v1427
      %v1435 = vmul.f32 %v1008, %v1427
      %v1436 = vmul.f32 %v1010, %v1427
      %v1437 = vmul.f32 %v1013, %v1427
      %v1438 = vmul.f32 %v1015, %v1427
      %v1439 = vmul.f32 %v1018, %v1427
      %v1440 = vmul.f32 %v1020, %v1427
      %v1441 = vmul.f32 %v1023, %v1427
      %v1442 = vmul.f32 %v1025, %v1427
      %v1443 = vmul.f32 %v1028, %v1427
      %v1444 = vmul.f32 %v1030, %v1427
      %v1445 = vmul.f32 %v1033, %v1427
      %v1446 = vmul.f32 %v1035, %v1427
      %v1447 = vmul.f32 %v1038, %v1427
      %v1448 = vmul.f32 %v1040, %v1427
      %v1449 = vmul.f32 %v1043, %v1427
      %v1450 = vmul.f32 %v1045, %v1427
      %v1451 = vmul.f32 %v1048, %v1427
      %v1452 = vmul.f32 %v1050, %v1427
      %v1453 = vmul.f32 %v1053, %v1427
      %v1454 = vmul.f32 %v1055, %v1427
      %v1455 = vmul.f32 %v1058, %v1427
      %v1456 = vmul.f32 %v1060, %v1427
      %v1457 = vmul.f32 %v1063, %v1427
      %v1458 = vmul.f32 %v1065, %v1427
      %v1459 = vmul.f32 %v1068, %v1427
      %v1460 = vmul.f32 %v1070, %v1427
      %v1461 = vld [vmem:[%s7] sm:$0x1]
      %v1463 = vperm.slane %v1461, 0
      %v1465 = vadd.f32 %v1429, %v1463
      %v1466 = vadd.f32 %v1430, %v1463
      %v1467 = vadd.f32 %v1431, %v1463
      %v1468 = vadd.f32 %v1432, %v1463
      %v1469 = vadd.f32 %v1433, %v1463
      %v1470 = vadd.f32 %v1434, %v1463
      %v1471 = vadd.f32 %v1435, %v1463
      %v1472 = vadd.f32 %v1436, %v1463
      %v1473 = vadd.f32 %v1437, %v1463
      %v1474 = vadd.f32 %v1438, %v1463
      %v1475 = vadd.f32 %v1439, %v1463
      %v1476 = vadd.f32 %v1440, %v1463
      %v1477 = vadd.f32 %v1441, %v1463
      %v1478 = vadd.f32 %v1442, %v1463
      %v1479 = vadd.f32 %v1443, %v1463
      %v1480 = vadd.f32 %v1444, %v1463
      %v1481 = vadd.f32 %v1445, %v1463
      %v1482 = vadd.f32 %v1446, %v1463
      %v1483 = vadd.f32 %v1447, %v1463
      %v1484 = vadd.f32 %v1448, %v1463
      %v1485 = vadd.f32 %v1449, %v1463
      %v1486 = vadd.f32 %v1450, %v1463
      %v1487 = vadd.f32 %v1451, %v1463
      %v1488 = vadd.f32 %v1452, %v1463
      %v1489 = vadd.f32 %v1453, %v1463
      %v1490 = vadd.f32 %v1454, %v1463
      %v1491 = vadd.f32 %v1455, %v1463
      %v1492 = vadd.f32 %v1456, %v1463
      %v1493 = vadd.f32 %v1457, %v1463
      %v1494 = vadd.f32 %v1458, %v1463
      %v1495 = vadd.f32 %v1459, %v1463
      %v1496 = vadd.f32 %v1460, %v1463
      %v1497 = vld [vmem:[%s11] sm:$0x1]
      %v1499 = vperm.slane %v1497, 0
      %v1501 = vmul.f32 %v1274, %v1499
      %v1502 = vmul.f32 %v1276, %v1499
      %v1503 = vmul.f32 %v1279, %v1499
      %v1504 = vmul.f32 %v1281, %v1499
      %v1505 = vmul.f32 %v1284, %v1499
      %v1506 = vmul.f32 %v1286, %v1499
      %v1507 = vmul.f32 %v1289, %v1499
      %v1508 = vmul.f32 %v1291, %v1499
      %v1509 = vmul.f32 %v1294, %v1499
      %v1510 = vmul.f32 %v1296, %v1499
      %v1511 = vmul.f32 %v1299, %v1499
      %v1512 = vmul.f32 %v1301, %v1499
      %v1513 = vmul.f32 %v1304, %v1499
      %v1514 = vmul.f32 %v1306, %v1499
      %v1515 = vmul.f32 %v1309, %v1499
      %v1516 = vmul.f32 %v1311, %v1499
      %v1517 = vmul.f32 %v1314, %v1499
      %v1518 = vmul.f32 %v1316, %v1499
      %v1519 = vmul.f32 %v1319, %v1499
      %v1520 = vmul.f32 %v1321, %v1499
      %v1521 = vmul.f32 %v1324, %v1499
      %v1522 = vmul.f32 %v1326, %v1499
      %v1523 = vmul.f32 %v1329, %v1499
      %v1524 = vmul.f32 %v1331, %v1499
      %v1525 = vmul.f32 %v1334, %v1499
      %v1526 = vmul.f32 %v1336, %v1499
      %v1527 = vmul.f32 %v1339, %v1499
      %v1528 = vmul.f32 %v1341, %v1499
      %v1529 = vmul.f32 %v1344, %v1499
      %v1530 = vmul.f32 %v1346, %v1499
      %v1531 = vmul.f32 %v1349, %v1499
      %v1532 = vmul.f32 %v1351, %v1499
      %v1533 = vld [vmem:[%s12] sm:$0x1]
      %v1535 = vperm.slane %v1533, 0
      %v1537 = vadd.f32 %v1501, %v1535
      %v1538 = vadd.f32 %v1502, %v1535
      %v1539 = vadd.f32 %v1503, %v1535
      %v1540 = vadd.f32 %v1504, %v1535
      %v1541 = vadd.f32 %v1505, %v1535
      %v1542 = vadd.f32 %v1506, %v1535
      %v1543 = vadd.f32 %v1507, %v1535
      %v1544 = vadd.f32 %v1508, %v1535
      %v1545 = vadd.f32 %v1509, %v1535
      %v1546 = vadd.f32 %v1510, %v1535
      %v1547 = vadd.f32 %v1511, %v1535
      %v1548 = vadd.f32 %v1512, %v1535
      %v1549 = vadd.f32 %v1513, %v1535
      %v1550 = vadd.f32 %v1514, %v1535
      %v1551 = vadd.f32 %v1515, %v1535
      %v1552 = vadd.f32 %v1516, %v1535
      %v1553 = vadd.f32 %v1517, %v1535
      %v1554 = vadd.f32 %v1518, %v1535
      %v1555 = vadd.f32 %v1519, %v1535
      %v1556 = vadd.f32 %v1520, %v1535
      %v1557 = vadd.f32 %v1521, %v1535
      %v1558 = vadd.f32 %v1522, %v1535
      %v1559 = vadd.f32 %v1523, %v1535
      %v1560 = vadd.f32 %v1524, %v1535
      %v1561 = vadd.f32 %v1525, %v1535
      %v1562 = vadd.f32 %v1526, %v1535
      %v1563 = vadd.f32 %v1527, %v1535
      %v1564 = vadd.f32 %v1528, %v1535
      %v1565 = vadd.f32 %v1529, %v1535
      %v1566 = vadd.f32 %v1530, %v1535
      %v1567 = vadd.f32 %v1531, %v1535
      %v1568 = vadd.f32 %v1532, %v1535
      %v1569 = vmul.f32 %v1393, %v1465
      %v1570 = vmul.f32 %v1394, %v1466
      %v1571 = vmul.f32 %v1395, %v1467
      %v1572 = vmul.f32 %v1396, %v1468
      %v1573 = vmul.f32 %v1397, %v1469
      %v1574 = vmul.f32 %v1398, %v1470
      %v1575 = vmul.f32 %v1399, %v1471
      %v1576 = vmul.f32 %v1400, %v1472
      %v1577 = vmul.f32 %v1401, %v1473
      %v1578 = vmul.f32 %v1402, %v1474
      %v1579 = vmul.f32 %v1403, %v1475
      %v1580 = vmul.f32 %v1404, %v1476
      %v1581 = vmul.f32 %v1405, %v1477
      %v1582 = vmul.f32 %v1406, %v1478
      %v1583 = vmul.f32 %v1407, %v1479
      %v1584 = vmul.f32 %v1408, %v1480
      %v1585 = vmul.f32 %v1409, %v1481
      %v1586 = vmul.f32 %v1410, %v1482
      %v1587 = vmul.f32 %v1411, %v1483
      %v1588 = vmul.f32 %v1412, %v1484
      %v1589 = vmul.f32 %v1413, %v1485
      %v1590 = vmul.f32 %v1414, %v1486
      %v1591 = vmul.f32 %v1415, %v1487
      %v1592 = vmul.f32 %v1416, %v1488
      %v1593 = vmul.f32 %v1417, %v1489
      %v1594 = vmul.f32 %v1418, %v1490
      %v1595 = vmul.f32 %v1419, %v1491
      %v1596 = vmul.f32 %v1420, %v1492
      %v1597 = vmul.f32 %v1421, %v1493
      %v1598 = vmul.f32 %v1422, %v1494
      %v1599 = vmul.f32 %v1423, %v1495
      %v1600 = vmul.f32 %v1424, %v1496
      %v1601 = vld [vmem:[%s496] sm:$0xff]
      %v1602 = vld [vmem:[%s496 + $0x8] sm:$0xff]
      %v1603 = vld [vmem:[%s496 + $0x10] sm:$0xff]
      %v1604 = vld [vmem:[%s496 + $0x18] sm:$0xff]
      %v1605 = vld [vmem:[%s496 + $0x20] sm:$0xff]
      %v1606 = vld [vmem:[%s496 + $0x28] sm:$0xff]
      %v1607 = vld [vmem:[%s496 + $0x30] sm:$0xff]
      %v1608 = vld [vmem:[%s496 + $0x38] sm:$0xff]
      %v1609 = vld [vmem:[%s496 + $0x40] sm:$0xff]
      %v1610 = vld [vmem:[%s496 + $0x48] sm:$0xff]
      %v1611 = vld [vmem:[%s496 + $0x50] sm:$0xff]
      %v1612 = vld [vmem:[%s496 + $0x58] sm:$0xff]
      %v1613 = vld [vmem:[%s496 + $0x60] sm:$0xff]
      %v1614 = vld [vmem:[%s496 + $0x68] sm:$0xff]
      %v1615 = vld [vmem:[%s496 + $0x70] sm:$0xff]
      %v1616 = vld [vmem:[%s496 + $0x78] sm:$0xff]
      %v1617 = vld [vmem:[%s496 + $0x80] sm:$0xff]
      %v1618 = vld [vmem:[%s496 + $0x88] sm:$0xff]
      %v1619 = vld [vmem:[%s496 + $0x90] sm:$0xff]
      %v1620 = vld [vmem:[%s496 + $0x98] sm:$0xff]
      %v1621 = vld [vmem:[%s496 + $0xa0] sm:$0xff]
      %v1622 = vld [vmem:[%s496 + $0xa8] sm:$0xff]
      %v1623 = vld [vmem:[%s496 + $0xb0] sm:$0xff]
      %v1624 = vld [vmem:[%s496 + $0xb8] sm:$0xff]
      %v1625 = vld [vmem:[%s496 + $0xc0] sm:$0xff]
      %v1626 = vld [vmem:[%s496 + $0xc8] sm:$0xff]
      %v1627 = vld [vmem:[%s496 + $0xd0] sm:$0xff]
      %v1628 = vld [vmem:[%s496 + $0xd8] sm:$0xff]
      %v1629 = vld [vmem:[%s496 + $0xe0] sm:$0xff]
      %v1630 = vld [vmem:[%s496 + $0xe8] sm:$0xff]
      %v1631 = vld [vmem:[%s496 + $0xf0] sm:$0xff]
      %v1632 = vld [vmem:[%s496 + $0xf8] sm:$0xff]
      %v1633 = vmul.f32 %v1569, %v1601
      %v1634 = vmul.f32 %v1570, %v1602
      %v1635 = vmul.f32 %v1571, %v1603
      %v1636 = vmul.f32 %v1572, %v1604
      %v1637 = vmul.f32 %v1573, %v1605
      %v1638 = vmul.f32 %v1574, %v1606
      %v1639 = vmul.f32 %v1575, %v1607
      %v1640 = vmul.f32 %v1576, %v1608
      %v1641 = vmul.f32 %v1577, %v1609
      %v1642 = vmul.f32 %v1578, %v1610
      %v1643 = vmul.f32 %v1579, %v1611
      %v1644 = vmul.f32 %v1580, %v1612
      %v1645 = vmul.f32 %v1581, %v1613
      %v1646 = vmul.f32 %v1582, %v1614
      %v1647 = vmul.f32 %v1583, %v1615
      %v1648 = vmul.f32 %v1584, %v1616
      %v1649 = vmul.f32 %v1585, %v1617
      %v1650 = vmul.f32 %v1586, %v1618
      %v1651 = vmul.f32 %v1587, %v1619
      %v1652 = vmul.f32 %v1588, %v1620
      %v1653 = vmul.f32 %v1589, %v1621
      %v1654 = vmul.f32 %v1590, %v1622
      %v1655 = vmul.f32 %v1591, %v1623
      %v1656 = vmul.f32 %v1592, %v1624
      %v1657 = vmul.f32 %v1593, %v1625
      %v1658 = vmul.f32 %v1594, %v1626
      %v1659 = vmul.f32 %v1595, %v1627
      %v1660 = vmul.f32 %v1596, %v1628
      %v1661 = vmul.f32 %v1597, %v1629
      %v1662 = vmul.f32 %v1598, %v1630
      %v1663 = vmul.f32 %v1599, %v1631
      %v1664 = vmul.f32 %v1600, %v1632
      %v1665 = vadd.f32 %v1633, %v1537
      %v1666 = vadd.f32 %v1634, %v1538
      %v1667 = vadd.f32 %v1635, %v1539
      %v1668 = vadd.f32 %v1636, %v1540
      %v1669 = vadd.f32 %v1637, %v1541
      %v1670 = vadd.f32 %v1638, %v1542
      %v1671 = vadd.f32 %v1639, %v1543
      %v1672 = vadd.f32 %v1640, %v1544
      %v1673 = vadd.f32 %v1641, %v1545
      %v1674 = vadd.f32 %v1642, %v1546
      %v1675 = vadd.f32 %v1643, %v1547
      %v1676 = vadd.f32 %v1644, %v1548
      %v1677 = vadd.f32 %v1645, %v1549
      %v1678 = vadd.f32 %v1646, %v1550
      %v1679 = vadd.f32 %v1647, %v1551
      %v1680 = vadd.f32 %v1648, %v1552
      %v1681 = vadd.f32 %v1649, %v1553
      %v1682 = vadd.f32 %v1650, %v1554
      %v1683 = vadd.f32 %v1651, %v1555
      %v1684 = vadd.f32 %v1652, %v1556
      %v1685 = vadd.f32 %v1653, %v1557
      %v1686 = vadd.f32 %v1654, %v1558
      %v1687 = vadd.f32 %v1655, %v1559
      %v1688 = vadd.f32 %v1656, %v1560
      %v1689 = vadd.f32 %v1657, %v1561
      %v1690 = vadd.f32 %v1658, %v1562
      %v1691 = vadd.f32 %v1659, %v1563
      %v1692 = vadd.f32 %v1660, %v1564
      %v1693 = vadd.f32 %v1661, %v1565
      %v1694 = vadd.f32 %v1662, %v1566
      %v1695 = vadd.f32 %v1663, %v1567
      %v1696 = vadd.f32 %v1664, %v1568
      %1697 = vst [vmem:[%s508] sm:$0xff] %v1665
      %1698 = vst [vmem:[%s508 + $0x8] sm:$0xff] %v1666
      %1699 = vst [vmem:[%s508 + $0x10] sm:$0xff] %v1667
      %1700 = vst [vmem:[%s508 + $0x18] sm:$0xff] %v1668
      %1701 = vst [vmem:[%s508 + $0x20] sm:$0xff] %v1669
      %1702 = vst [vmem:[%s508 + $0x28] sm:$0xff] %v1670
      %1703 = vst [vmem:[%s508 + $0x30] sm:$0xff] %v1671
      %1704 = vst [vmem:[%s508 + $0x38] sm:$0xff] %v1672
      %1705 = vst [vmem:[%s508 + $0x40] sm:$0xff] %v1673
      %1706 = vst [vmem:[%s508 + $0x48] sm:$0xff] %v1674
      %1707 = vst [vmem:[%s508 + $0x50] sm:$0xff] %v1675
      %1708 = vst [vmem:[%s508 + $0x58] sm:$0xff] %v1676
      %1709 = vst [vmem:[%s508 + $0x60] sm:$0xff] %v1677
      %1710 = vst [vmem:[%s508 + $0x68] sm:$0xff] %v1678
      %1711 = vst [vmem:[%s508 + $0x70] sm:$0xff] %v1679
      %1712 = vst [vmem:[%s508 + $0x78] sm:$0xff] %v1680
      %1713 = vst [vmem:[%s508 + $0x80] sm:$0xff] %v1681
      %1714 = vst [vmem:[%s508 + $0x88] sm:$0xff] %v1682
      %1715 = vst [vmem:[%s508 + $0x90] sm:$0xff] %v1683
      %1716 = vst [vmem:[%s508 + $0x98] sm:$0xff] %v1684
      %1717 = vst [vmem:[%s508 + $0xa0] sm:$0xff] %v1685
      %1718 = vst [vmem:[%s508 + $0xa8] sm:$0xff] %v1686
      %1719 = vst [vmem:[%s508 + $0xb0] sm:$0xff] %v1687
      %1720 = vst [vmem:[%s508 + $0xb8] sm:$0xff] %v1688
      %1721 = vst [vmem:[%s508 + $0xc0] sm:$0xff] %v1689
      %1722 = vst [vmem:[%s508 + $0xc8] sm:$0xff] %v1690
      %1723 = vst [vmem:[%s508 + $0xd0] sm:$0xff] %v1691
      %1724 = vst [vmem:[%s508 + $0xd8] sm:$0xff] %v1692
      %1725 = vst [vmem:[%s508 + $0xe0] sm:$0xff] %v1693
      %1726 = vst [vmem:[%s508 + $0xe8] sm:$0xff] %v1694
      %1727 = vst [vmem:[%s508 + $0xf0] sm:$0xff] %v1695
      %1728 = vst [vmem:[%s508 + $0xf8] sm:$0xff] %v1696
      %s1729 = smul.u32 32, %s24
      %p1730 = scmp.lt.s32.totalorder %s1729, 63
      %s1731 = scalar_select %p1730, %s1729, 63
      %s1732 = smul.addr %s1731, 8
      %s1733 = scalar_lea.vmem %s13, %s1732
      // Predicated region
      $region73: #{ppd_forward.7} parent=71 // pred_check
        %p1734 = pneg %p335
      $region74: #{ppd_forward.7} parent=71 // pred_check_branch
        %1736 = sbr.rel (%p1734) target = $region76
      $region75: #{ppd_forward.7} parent=71 // pred_region
        %s1737 = smul.u32 32, %s24
      $region76: #{ppd_forward.7} parent=71 // pred_fallthru
        _
    $region72: #{ppd_forward.7} parent=5 // pred_fallthru
      _
    %p1738 = scmp.le.s32.totalorder 2, %s19
    // Predicated region
    $region77: #{ppd_forward.7} parent=5 // pred_check
      %p1739 = pneg %p1738
    $region78: #{ppd_forward.7} parent=5 // pred_check_branch
      %1741 = sbr.rel (%p1739) target = $region80
    $region79: #{ppd_forward.7} parent=5 // pred_region
      %s1742 = ssub.s32 %s19, 2
      // Predicated region
      $region81: #{ppd_forward.7} parent=79 // pred_check
        %p1743 = pneg %p341
      $region82: #{ppd_forward.7} parent=79 // pred_check_branch
        %1745 = sbr.rel (%p1743) target = $region84
      $region83: #{ppd_forward.7} parent=79 // pred_region
        %s1746 = smul.u32 32, %s25
        %p1747 = scmp.lt.s32.totalorder %s1746, 63
        %s1748 = scalar_select %p1747, %s1746, 63
        %s1749 = smul.addr %s1748, 8
        %s1750 = scalar_lea.vmem %s13, %s1749
      $region84: #{ppd_forward.7} parent=79 // pred_fallthru
        _
    $region80: #{ppd_forward.7} parent=5 // pred_fallthru
      _
  $region6: #{ppd_forward.7} parent=0 // loop_footer
    %s23 = sadd.s32 1, %s19
  $region7: #{ppd_forward.7} parent=0 // loop_footer_branch
    %18 = sbr.rel target = $region3
  $region8: #{ppd_forward.7} parent=0 // loop_exit
    _

// kernel: ppd_forward.9
$region0: #{ppd_forward.9}
  #allocation0 [shape = 'u32[]', space=smem, size = 0x4, offset = 0x4, fixed_abs, tag = 'smem constant byte address 0x4 - core index']
  #allocation1 [shape = 'u32[72,128]{1,0:T(1,128)}', space=vmem, size = 0x9000, scoped, tag = 'internal scratch']
  #allocation2 [shape = 'f32[1,1]{1,0:T(1,128)S(1)}', space=vmem, size = 0x200, scoped, tag = 'scoped memory for ppd_forward.9']
  %s0 = inlined_call_operand.vmem [shape: bf16[512,128], index: 0, kind: input, shape index: {}]
  %s1 = inlined_call_operand.vmem [shape: bf16[128,128], index: 1, kind: input, shape index: {}]
  %s2 = inlined_call_operand.vmem [shape: f32[1,128], index: 2, kind: input, shape index: {}]
  %s3 = inlined_call_operand.vmem [shape: f32[1,128], index: 3, kind: input, shape index: {}]
  %s4 = inlined_call_operand.vmem [shape: f32[1,128], index: 4, kind: input, shape index: {}]
  %s5 = inlined_call_operand.<no memory space> [shape: f32[1,1], index: 5, kind: input, shape index: {}]
  %s6 = inlined_call_operand.vmem [shape: f32[512,128], index: 6, kind: output, shape index: {0}]
  %s7 = inlined_call_operand.vmem [shape: f32[512,1], index: 7, kind: output, shape index: {1}]
  %8 = xla_tuple %s6, %s7
  %s9 = sld [smem:[#allocation0]]
  $region65: #{ppd_forward.9} parent=0
    _
  %s11 = ssub.s32 1, %s9
  %s12 = scalar_select 0, %s11, %s9
  %v13 = vstv %s5
  %14 = vst [vmem:[#allocation2] sm:$0x1] %v13
  loop: start=0, step=1, limit=4
  $region2: #{ppd_forward.9} parent=0 // loop_pre_header
    _
  $region3: #{ppd_forward.9} parent=0 // loop_header
    %s16 = sphi 0, %s20
    %p17 = scmp.ge.s32.totalorder %s16, 4
    %s26 = sphi 0, %s28
    %s29 = sphi 0, %s26
    %s30 = sphi 0, %s29
    %s46 = sphi 0, %s30
    %s50 = sphi 0, %s50
    %s52 = sphi 0, %s50
    %s53 = sphi 0, %s52
    %s67 = sphi 0, %s53
    %s71 = sphi 0, %s71
    %s73 = sphi 0, %s71
    %s74 = sphi 0, %s73
    %s88 = sphi 0, %s74
    %s92 = sphi 0, %s92
    %s94 = sphi 0, %s92
    %s95 = sphi 0, %s94
    %s109 = sphi 0, %s95
    %s113 = sphi 0, %s113
    %s115 = sphi 0, %s113
    %s116 = sphi 0, %s115
    %s130 = sphi 0, %s116
    %s134 = sphi 0, %s134
    %s136 = sphi 0, %s134
    %s137 = sphi 0, %s136
    %s151 = sphi 0, %s137
    %s157 = sphi 0, %s159
    %s160 = sphi 0, %s157
    %s161 = sphi 0, %s160
    %s177 = sphi 0, %s161
    %s183 = sphi 0, %s185
    %s186 = sphi 0, %s183
    %s187 = sphi 0, %s186
    %s203 = sphi 0, %s187
  $region4: #{ppd_forward.9} parent=0 // loop_header_branch
    %19 = sbr.rel (%p17) target = $region8
  $region5: #{ppd_forward.9} parent=0 // loop_body
    %s21 = ssub.s32 %s16, 1
    %s22 = ssub.s32 %s16, 2
    %s23 = sadd.s32 %s16, 1
    %s24 = ssub.s32 %s16, %s23
    %p25 = scmp.eq.s32.totalorder %s24, 0
    %s27 = sadd.s32 %s26, 1
    %s28 = scalar_select %p25, %s26, %s27
    %p31 = pneg %p25
    %p32 = scmp.eq.s32.totalorder %s16, 1
    %p33 = por %p31, %p32
    %p34 = scmp.ne.s32.totalorder %s26, %s29
    %p35 = scmp.eq.s32.totalorder %s16, 0
    %p36 = por %p34, %p35
    %p37 = scmp.ne.s32.totalorder %s26, %s29
    %p38 = scmp.eq.s32.totalorder %s21, 1
    %p39 = por %p37, %p38
    %p40 = scmp.ne.s32.totalorder %s29, %s30
    %p41 = scmp.eq.s32.totalorder %s21, 0
    %p42 = por %p40, %p41
    %p43 = scmp.ne.s32.totalorder %s29, %s30
    %p44 = scmp.eq.s32.totalorder %s22, 1
    %p45 = por %p43, %p44
    %p47 = scmp.ne.s32.totalorder %s30, %s46
    %p48 = scmp.eq.s32.totalorder %s22, 0
    %p49 = por %p47, %p48
    %s51 = sadd.s32 %s50, 1
    %p54 = scmp.eq.s32.totalorder %s16, 1
    %p55 = scmp.ne.s32.totalorder %s50, %s52
    %p56 = scmp.eq.s32.totalorder %s16, 0
    %p57 = por %p55, %p56
    %p58 = scmp.ne.s32.totalorder %s50, %s52
    %p59 = scmp.eq.s32.totalorder %s21, 1
    %p60 = por %p58, %p59
    %p61 = scmp.ne.s32.totalorder %s52, %s53
    %p62 = scmp.eq.s32.totalorder %s21, 0
    %p63 = por %p61, %p62
    %p64 = scmp.ne.s32.totalorder %s52, %s53
    %p65 = scmp.eq.s32.totalorder %s22, 1
    %p66 = por %p64, %p65
    %p68 = scmp.ne.s32.totalorder %s53, %s67
    %p69 = scmp.eq.s32.totalorder %s22, 0
    %p70 = por %p68, %p69
    %s72 = sadd.s32 %s71, 1
    %p75 = scmp.eq.s32.totalorder %s16, 1
    %p76 = scmp.ne.s32.totalorder %s71, %s73
    %p77 = scmp.eq.s32.totalorder %s16, 0
    %p78 = por %p76, %p77
    %p79 = scmp.ne.s32.totalorder %s71, %s73
    %p80 = scmp.eq.s32.totalorder %s21, 1
    %p81 = por %p79, %p80
    %p82 = scmp.ne.s32.totalorder %s73, %s74
    %p83 = scmp.eq.s32.totalorder %s21, 0
    %p84 = por %p82, %p83
    %p85 = scmp.ne.s32.totalorder %s73, %s74
    %p86 = scmp.eq.s32.totalorder %s22, 1
    %p87 = por %p85, %p86
    %p89 = scmp.ne.s32.totalorder %s74, %s88
    %p90 = scmp.eq.s32.totalorder %s22, 0
    %p91 = por %p89, %p90
    %s93 = sadd.s32 %s92, 1
    %p96 = scmp.eq.s32.totalorder %s16, 1
    %p97 = scmp.ne.s32.totalorder %s92, %s94
    %p98 = scmp.eq.s32.totalorder %s16, 0
    %p99 = por %p97, %p98
    %p100 = scmp.ne.s32.totalorder %s92, %s94
    %p101 = scmp.eq.s32.totalorder %s21, 1
    %p102 = por %p100, %p101
    %p103 = scmp.ne.s32.totalorder %s94, %s95
    %p104 = scmp.eq.s32.totalorder %s21, 0
    %p105 = por %p103, %p104
    %p106 = scmp.ne.s32.totalorder %s94, %s95
    %p107 = scmp.eq.s32.totalorder %s22, 1
    %p108 = por %p106, %p107
    %p110 = scmp.ne.s32.totalorder %s95, %s109
    %p111 = scmp.eq.s32.totalorder %s22, 0
    %p112 = por %p110, %p111
    %s114 = sadd.s32 %s113, 1
    %p117 = scmp.eq.s32.totalorder %s16, 1
    %p118 = scmp.ne.s32.totalorder %s113, %s115
    %p119 = scmp.eq.s32.totalorder %s16, 0
    %p120 = por %p118, %p119
    %p121 = scmp.ne.s32.totalorder %s113, %s115
    %p122 = scmp.eq.s32.totalorder %s21, 1
    %p123 = por %p121, %p122
    %p124 = scmp.ne.s32.totalorder %s115, %s116
    %p125 = scmp.eq.s32.totalorder %s21, 0
    %p126 = por %p124, %p125
    %p127 = scmp.ne.s32.totalorder %s115, %s116
    %p128 = scmp.eq.s32.totalorder %s22, 1
    %p129 = por %p127, %p128
    %p131 = scmp.ne.s32.totalorder %s116, %s130
    %p132 = scmp.eq.s32.totalorder %s22, 0
    %p133 = por %p131, %p132
    %s135 = sadd.s32 %s134, 1
    %p138 = scmp.eq.s32.totalorder %s16, 1
    %p139 = scmp.ne.s32.totalorder %s134, %s136
    %p140 = scmp.eq.s32.totalorder %s16, 0
    %p141 = por %p139, %p140
    %p142 = scmp.ne.s32.totalorder %s134, %s136
    %p143 = scmp.eq.s32.totalorder %s21, 1
    %p144 = por %p142, %p143
    %p145 = scmp.ne.s32.totalorder %s136, %s137
    %p146 = scmp.eq.s32.totalorder %s21, 0
    %p147 = por %p145, %p146
    %p148 = scmp.ne.s32.totalorder %s136, %s137
    %p149 = scmp.eq.s32.totalorder %s22, 1
    %p150 = por %p148, %p149
    %p152 = scmp.ne.s32.totalorder %s137, %s151
    %p153 = scmp.eq.s32.totalorder %s22, 0
    %p154 = por %p152, %p153
    %s155 = ssub.s32 %s16, %s23
    %p156 = scmp.eq.s32.totalorder %s155, 0
    %s158 = sadd.s32 %s157, 1
    %s159 = scalar_select %p156, %s157, %s158
    %p162 = pneg %p156
    %p163 = scmp.eq.s32.totalorder %s16, 1
    %p164 = por %p162, %p163
    %p165 = scmp.ne.s32.totalorder %s157, %s160
    %p166 = scmp.eq.s32.totalorder %s16, 0
    %p167 = por %p165, %p166
    %p168 = scmp.ne.s32.totalorder %s157, %s160
    %p169 = scmp.eq.s32.totalorder %s21, 1
    %p170 = por %p168, %p169
    %p171 = scmp.ne.s32.totalorder %s160, %s161
    %p172 = scmp.eq.s32.totalorder %s21, 0
    %p173 = por %p171, %p172
    %p174 = scmp.ne.s32.totalorder %s160, %s161
    %p175 = scmp.eq.s32.totalorder %s22, 1
    %p176 = por %p174, %p175
    %p178 = scmp.ne.s32.totalorder %s161, %s177
    %p179 = scmp.eq.s32.totalorder %s22, 0
    %p180 = por %p178, %p179
    %s181 = ssub.s32 %s16, %s23
    %p182 = scmp.eq.s32.totalorder %s181, 0
    %s184 = sadd.s32 %s183, 1
    %s185 = scalar_select %p182, %s183, %s184
    %p188 = pneg %p182
    %p189 = scmp.eq.s32.totalorder %s16, 1
    %p190 = por %p188, %p189
    %p191 = scmp.ne.s32.totalorder %s183, %s186
    %p192 = scmp.eq.s32.totalorder %s16, 0
    %p193 = por %p191, %p192
    %p194 = scmp.ne.s32.totalorder %s183, %s186
    %p195 = scmp.eq.s32.totalorder %s21, 1
    %p196 = por %p194, %p195
    %p197 = scmp.ne.s32.totalorder %s186, %s187
    %p198 = scmp.eq.s32.totalorder %s21, 0
    %p199 = por %p197, %p198
    %p200 = scmp.ne.s32.totalorder %s186, %s187
    %p201 = scmp.eq.s32.totalorder %s22, 1
    %p202 = por %p200, %p201
    %p204 = scmp.ne.s32.totalorder %s187, %s203
    %p205 = scmp.eq.s32.totalorder %s22, 0
    %p206 = por %p204, %p205
    %p207 = scmp.le.s32.totalorder 1, %s16
    %p208 = scmp.lt.s32.totalorder %s16, 3
    %p209 = pnand %p207, %p208
    %p210 = pneg %p209
    // Predicated region
    $region9: #{ppd_forward.9} parent=5 // pred_check
      _
    $region10: #{ppd_forward.9} parent=5 // pred_check_branch
      %212 = sbr.rel (%p209) target = $region12
    $region11: #{ppd_forward.9} parent=5 // pred_region
      %s213 = ssub.s32 %s16, 1
      // Predicated region
      $region13: #{ppd_forward.9} parent=11 // pred_check
        %p214 = pneg %p63
      $region14: #{ppd_forward.9} parent=11 // pred_check_branch
        %216 = sbr.rel (%p214) target = $region16
      $region15: #{ppd_forward.9} parent=11 // pred_region
        _
      $region16: #{ppd_forward.9} parent=11 // pred_fallthru
        _
      // Predicated region
      $region17: #{ppd_forward.9} parent=11 // pred_check
        %p217 = pneg %p84
      $region18: #{ppd_forward.9} parent=11 // pred_check_branch
        %219 = sbr.rel (%p217) target = $region20
      $region19: #{ppd_forward.9} parent=11 // pred_region
        _
      $region20: #{ppd_forward.9} parent=11 // pred_fallthru
        _
      // Predicated region
      $region21: #{ppd_forward.9} parent=11 // pred_check
        %p220 = pneg %p105
      $region22: #{ppd_forward.9} parent=11 // pred_check_branch
        %222 = sbr.rel (%p220) target = $region24
      $region23: #{ppd_forward.9} parent=11 // pred_region
        _
      $region24: #{ppd_forward.9} parent=11 // pred_fallthru
        _
      // Predicated region
      $region25: #{ppd_forward.9} parent=11 // pred_check
        %p223 = pneg %p126
      $region26: #{ppd_forward.9} parent=11 // pred_check_branch
        %225 = sbr.rel (%p223) target = $region28
      $region27: #{ppd_forward.9} parent=11 // pred_region
        _
      $region28: #{ppd_forward.9} parent=11 // pred_fallthru
        _
      // Predicated region
      $region29: #{ppd_forward.9} parent=11 // pred_check
        %p226 = pneg %p147
      $region30: #{ppd_forward.9} parent=11 // pred_check_branch
        %228 = sbr.rel (%p226) target = $region32
      $region31: #{ppd_forward.9} parent=11 // pred_region
        _
      $region32: #{ppd_forward.9} parent=11 // pred_fallthru
        _
    $region12: #{ppd_forward.9} parent=5 // pred_fallthru
      _
    %p229 = scmp.lt.s32.totalorder %s16, 2
    // Predicated region
    $region33: #{ppd_forward.9} parent=5 // pred_check
      %p230 = pneg %p229
    $region34: #{ppd_forward.9} parent=5 // pred_check_branch
      %232 = sbr.rel (%p230) target = $region36
    $region35: #{ppd_forward.9} parent=5 // pred_region
      // Predicated region
      $region37: #{ppd_forward.9} parent=35 // pred_check
        %p233 = pneg %p36
      $region38: #{ppd_forward.9} parent=35 // pred_check_branch
        %235 = sbr.rel (%p233) target = $region40
      $region39: #{ppd_forward.9} parent=35 // pred_region
        %s236 = smul.u32 32, %s16
        %p237 = scmp.lt.s32.totalorder %s236, 63
        %s238 = scalar_select %p237, %s236, 63
        %s239 = smul.addr %s238, 4
        %s240 = scalar_lea.vmem %s0, %s239
        %s241 = smul.u32 32, %s16
      $region40: #{ppd_forward.9} parent=35 // pred_fallthru
        _
    $region36: #{ppd_forward.9} parent=5 // pred_fallthru
      _
    %p242 = scmp.le.s32.totalorder 1, %s16
    %p243 = scmp.lt.s32.totalorder %s16, 3
    %p244 = pnand %p242, %p243
    %p245 = pneg %p244
    // Predicated region
    $region41: #{ppd_forward.9} parent=5 // pred_check
      _
    $region42: #{ppd_forward.9} parent=5 // pred_check_branch
      %247 = sbr.rel (%p244) target = $region44
    $region43: #{ppd_forward.9} parent=5 // pred_region
      %s248 = ssub.s32 %s16, 1
      %s249 = smul.u32 32, %s21
      %p250 = scmp.lt.s32.totalorder %s249, 63
      %s251 = scalar_select %p250, %s249, 63
      %s252 = smul.addr %s251, 4
      %s253 = scalar_lea.vmem %s0, %s252
      %p254 = pneg %p42
      %p255 = pneg %p39
      %p256 = pneg %p63
      %p257 = pneg %p60
      %p258 = pneg %p84
      %p259 = pneg %p81
      %p260 = pneg %p105
      %p261 = pneg %p102
      %p262 = pneg %p126
      %p263 = pneg %p123
      %p264 = pneg %p147
      %p265 = pneg %p144
      %p266 = pneg %p173
      %p267 = pneg %p170
      %s268 = smul.u32 32, %s21
      %p269 = scmp.lt.s32.totalorder %s268, 63
      %s270 = scalar_select %p269, %s268, 63
      %s271 = smul.addr %s270, 8
      %s272 = scalar_lea.vmem %s6, %s271
      %p273 = pneg %p199
      %p274 = pneg %p196
      %s275 = smul.u32 32, %s21
      %p276 = scmp.lt.s32.totalorder %s275, 63
      %s277 = scalar_select %p276, %s275, 63
      %s278 = smul.addr %s277, 8
      %s279 = scalar_lea.vmem %s7, %s278
      %s280 = smul.u32 32, %s21
      %p281 = scmp.lt.s32.totalorder %s280, 63
      %s282 = scalar_select %p281, %s280, 63
      %s283 = smul.addr %s282, 4
      %s284 = scalar_lea.vmem %s0, %s283
      %s285 = smul.u32 32, %s21
      %s286 = smul.u32 32, %s21
      %p287 = scmp.lt.s32.totalorder %s286, 63
      %s288 = scalar_select %p287, %s286, 63
      %s289 = smul.addr %s288, 8
      %s290 = scalar_lea.vmem %s6, %s289
      %s291 = smul.u32 32, %s21
      %s292 = smul.u32 32, %s21
      %p293 = scmp.lt.s32.totalorder %s292, 63
      %s294 = scalar_select %p293, %s292, 63
      %s295 = smul.addr %s294, 8
      %s296 = scalar_lea.vmem %s7, %s295
      %s297 = smul.u32 32, %s21
      %v298 = vld [vmem:[%s284] sm:$0xf]
      %v299 = vld [vmem:[%s284 + $0x4] sm:$0xf]
      %v300 = vld [vmem:[%s284 + $0x8] sm:$0xf]
      %v301 = vld [vmem:[%s284 + $0xc] sm:$0xf]
      %v302 = vld [vmem:[%s284 + $0x10] sm:$0xf]
      %v303 = vld [vmem:[%s284 + $0x14] sm:$0xf]
      %v304 = vld [vmem:[%s284 + $0x18] sm:$0xf]
      %v305 = vld [vmem:[%s284 + $0x1c] sm:$0xf]
      %v306 = vld [vmem:[%s284 + $0x20] sm:$0xf]
      %v307 = vld [vmem:[%s284 + $0x24] sm:$0xf]
      %v308 = vld [vmem:[%s284 + $0x28] sm:$0xf]
      %v309 = vld [vmem:[%s284 + $0x2c] sm:$0xf]
      %v310 = vld [vmem:[%s284 + $0x30] sm:$0xf]
      %v311 = vld [vmem:[%s284 + $0x34] sm:$0xf]
      %v312 = vld [vmem:[%s284 + $0x38] sm:$0xf]
      %v313 = vld [vmem:[%s284 + $0x3c] sm:$0xf]
      %v314 = vld [vmem:[%s284 + $0x40] sm:$0xf]
      %v315 = vld [vmem:[%s284 + $0x44] sm:$0xf]
      %v316 = vld [vmem:[%s284 + $0x48] sm:$0xf]
      %v317 = vld [vmem:[%s284 + $0x4c] sm:$0xf]
      %v318 = vld [vmem:[%s284 + $0x50] sm:$0xf]
      %v319 = vld [vmem:[%s284 + $0x54] sm:$0xf]
      %v320 = vld [vmem:[%s284 + $0x58] sm:$0xf]
      %v321 = vld [vmem:[%s284 + $0x5c] sm:$0xf]
      %v322 = vld [vmem:[%s284 + $0x60] sm:$0xf]
      %v323 = vld [vmem:[%s284 + $0x64] sm:$0xf]
      %v324 = vld [vmem:[%s284 + $0x68] sm:$0xf]
      %v325 = vld [vmem:[%s284 + $0x6c] sm:$0xf]
      %v326 = vld [vmem:[%s284 + $0x70] sm:$0xf]
      %v327 = vld [vmem:[%s284 + $0x74] sm:$0xf]
      %v328 = vld [vmem:[%s284 + $0x78] sm:$0xf]
      %v329 = vld [vmem:[%s284 + $0x7c] sm:$0xf]
      %v330 = vld [vmem:[%s1] sm:$0xf]
      %v331 = vld [vmem:[%s1 + $0x4] sm:$0xf]
      %v332 = vld [vmem:[%s1 + $0x8] sm:$0xf]
      %v333 = vld [vmem:[%s1 + $0xc] sm:$0xf]
      %v334 = vld [vmem:[%s1 + $0x10] sm:$0xf]
      %v335 = vld [vmem:[%s1 + $0x14] sm:$0xf]
      %v336 = vld [vmem:[%s1 + $0x18] sm:$0xf]
      %v337 = vld [vmem:[%s1 + $0x1c] sm:$0xf]
      %v338 = vld [vmem:[%s1 + $0x20] sm:$0xf]
      %v339 = vld [vmem:[%s1 + $0x24] sm:$0xf]
      %v340 = vld [vmem:[%s1 + $0x28] sm:$0xf]
      %v341 = vld [vmem:[%s1 + $0x2c] sm:$0xf]
      %v342 = vld [vmem:[%s1 + $0x30] sm:$0xf]
      %v343 = vld [vmem:[%s1 + $0x34] sm:$0xf]
      %v344 = vld [vmem:[%s1 + $0x38] sm:$0xf]
      %v345 = vld [vmem:[%s1 + $0x3c] sm:$0xf]
      %v378 = vunpack.c.l.b16 %v298
      %v379 = vunpack.c.l.b16 %v299
      %v380 = vunpack.c.l.b16 %v300
      %v381 = vunpack.c.l.b16 %v301
      %v382 = vunpack.c.l.b16 %v302
      %v383 = vunpack.c.l.b16 %v303
      %v384 = vunpack.c.l.b16 %v304
      %v385 = vunpack.c.l.b16 %v305
      %v386 = vunpack.c.l.b16 %v306
      %v387 = vunpack.c.l.b16 %v307
      %v388 = vunpack.c.l.b16 %v308
      %v389 = vunpack.c.l.b16 %v309
      %v390 = vunpack.c.l.b16 %v310
      %v391 = vunpack.c.l.b16 %v311
      %v392 = vunpack.c.l.b16 %v312
      %v393 = vunpack.c.l.b16 %v313
      %v394 = vunpack.c.l.b16 %v314
      %v395 = vunpack.c.l.b16 %v315
      %v396 = vunpack.c.l.b16 %v316
      %v397 = vunpack.c.l.b16 %v317
      %v398 = vunpack.c.l.b16 %v318
      %v399 = vunpack.c.l.b16 %v319
      %v400 = vunpack.c.l.b16 %v320
      %v401 = vunpack.c.l.b16 %v321
      %v402 = vunpack.c.l.b16 %v322
      %v403 = vunpack.c.l.b16 %v323
      %v404 = vunpack.c.l.b16 %v324
      %v405 = vunpack.c.l.b16 %v325
      %v406 = vunpack.c.l.b16 %v326
      %v407 = vunpack.c.l.b16 %v327
      %v408 = vunpack.c.l.b16 %v328
      %v409 = vunpack.c.l.b16 %v329
      %v410 = vpack.c.b16 %v379, %v378
      %v411 = vpack.c.b16 %v381, %v380
      %v412 = vpack.c.b16 %v383, %v382
      %v413 = vpack.c.b16 %v385, %v384
      %v414 = vpack.c.b16 %v387, %v386
      %v415 = vpack.c.b16 %v389, %v388
      %v416 = vpack.c.b16 %v391, %v390
      %v417 = vpack.c.b16 %v393, %v392
      %v418 = vpack.c.b16 %v395, %v394
      %v419 = vpack.c.b16 %v397, %v396
      %v420 = vpack.c.b16 %v399, %v398
      %v421 = vpack.c.b16 %v401, %v400
      %v422 = vpack.c.b16 %v403, %v402
      %v423 = vpack.c.b16 %v405, %v404
      %v424 = vpack.c.b16 %v407, %v406
      %v425 = vpack.c.b16 %v409, %v408
      %v458 = vunpack.c.l.b16 %v330
      %v459 = vunpack.c.l.b16 %v331
      %v460 = vunpack.c.l.b16 %v332
      %v461 = vunpack.c.l.b16 %v333
      %v462 = vunpack.c.l.b16 %v334
      %v463 = vunpack.c.l.b16 %v335
      %v464 = vunpack.c.l.b16 %v336
      %v465 = vunpack.c.l.b16 %v337
      %v466 = vunpack.c.l.b16 %v338
      %v467 = vunpack.c.l.b16 %v339
      %v468 = vunpack.c.l.b16 %v340
      %v469 = vunpack.c.l.b16 %v341
      %v470 = vunpack.c.l.b16 %v342
      %v471 = vunpack.c.l.b16 %v343
      %v472 = vunpack.c.l.b16 %v344
      %v473 = vunpack.c.l.b16 %v345
      %v474 = vpack.c.b16 %v459, %v458
      %v475 = vpack.c.b16 %v461, %v460
      %v476 = vpack.c.b16 %v463, %v462
      %v477 = vpack.c.b16 %v465, %v464
      %v478 = vpack.c.b16 %v467, %v466
      %v479 = vpack.c.b16 %v469, %v468
      %v480 = vpack.c.b16 %v471, %v470
      %v481 = vpack.c.b16 %v473, %v472
      %490 = vmatpush.bf16.msra.mxu0 %v481
      %491 = vmatpush.bf16.msra.mxu0 %v480
      %492 = vmatpush.bf16.msra.mxu0 %v479
      %493 = vmatpush.bf16.msra.mxu0 %v478
      %494 = vmatpush.bf16.msra.mxu0 %v477
      %495 = vmatpush.bf16.msra.mxu0 %v476
      %496 = vmatpush.bf16.msra.mxu0 %v475
      %497 = vmatpush.bf16.msra.mxu0 %v474
      %498 = vmatmul.bf16.gmra.mxu0 %v410
      %v499 = vpop.f32.mrf.mxu0
      %v500 = vadd.f32 0.0, %v499
      %v501 = vpop.f32.mrf.mxu0
      %v502 = vadd.f32 0.0, %v501
      %503 = vmatmul.bf16.gmra.mxu0 %v411
      %v504 = vpop.f32.mrf.mxu0
      %v505 = vadd.f32 0.0, %v504
      %v506 = vpop.f32.mrf.mxu0
      %v507 = vadd.f32 0.0, %v506
      %508 = vmatmul.bf16.gmra.mxu0 %v412
      %v509 = vpop.f32.mrf.mxu0
      %v510 = vadd.f32 0.0, %v509
      %v511 = vpop.f32.mrf.mxu0
      %v512 = vadd.f32 0.0, %v511
      %513 = vmatmul.bf16.gmra.mxu0 %v413
      %v514 = vpop.f32.mrf.mxu0
      %v515 = vadd.f32 0.0, %v514
      %v516 = vpop.f32.mrf.mxu0
      %v517 = vadd.f32 0.0, %v516
      %518 = vmatmul.bf16.gmra.mxu0 %v414
      %v519 = vpop.f32.mrf.mxu0
      %v520 = vadd.f32 0.0, %v519
      %v521 = vpop.f32.mrf.mxu0
      %v522 = vadd.f32 0.0, %v521
      %523 = vmatmul.bf16.gmra.mxu0 %v415
      %v524 = vpop.f32.mrf.mxu0
      %v525 = vadd.f32 0.0, %v524
      %v526 = vpop.f32.mrf.mxu0
      %v527 = vadd.f32 0.0, %v526
      %528 = vmatmul.bf16.gmra.mxu0 %v416
      %v529 = vpop.f32.mrf.mxu0
      %v530 = vadd.f32 0.0, %v529
      %v531 = vpop.f32.mrf.mxu0
      %v532 = vadd.f32 0.0, %v531
      %533 = vmatmul.bf16.gmra.mxu0 %v417
      %v534 = vpop.f32.mrf.mxu0
      %v535 = vadd.f32 0.0, %v534
      %v536 = vpop.f32.mrf.mxu0
      %v537 = vadd.f32 0.0, %v536
      %538 = vmatmul.bf16.gmra.mxu0 %v418
      %v539 = vpop.f32.mrf.mxu0
      %v540 = vadd.f32 0.0, %v539
      %v541 = vpop.f32.mrf.mxu0
      %v542 = vadd.f32 0.0, %v541
      %543 = vmatmul.bf16.gmra.mxu0 %v419
      %v544 = vpop.f32.mrf.mxu0
      %v545 = vadd.f32 0.0, %v544
      %v546 = vpop.f32.mrf.mxu0
      %v547 = vadd.f32 0.0, %v546
      %548 = vmatmul.bf16.gmra.mxu0 %v420
      %v549 = vpop.f32.mrf.mxu0
      %v550 = vadd.f32 0.0, %v549
      %v551 = vpop.f32.mrf.mxu0
      %v552 = vadd.f32 0.0, %v551
      %553 = vmatmul.bf16.gmra.mxu0 %v421
      %v554 = vpop.f32.mrf.mxu0
      %v555 = vadd.f32 0.0, %v554
      %v556 = vpop.f32.mrf.mxu0
      %v557 = vadd.f32 0.0, %v556
      %558 = vmatmul.bf16.gmra.mxu0 %v422
      %v559 = vpop.f32.mrf.mxu0
      %v560 = vadd.f32 0.0, %v559
      %v561 = vpop.f32.mrf.mxu0
      %v562 = vadd.f32 0.0, %v561
      %563 = vmatmul.bf16.gmra.mxu0 %v423
      %v564 = vpop.f32.mrf.mxu0
      %v565 = vadd.f32 0.0, %v564
      %v566 = vpop.f32.mrf.mxu0
      %v567 = vadd.f32 0.0, %v566
      %568 = vmatmul.bf16.gmra.mxu0 %v424
      %v569 = vpop.f32.mrf.mxu0
      %v570 = vadd.f32 0.0, %v569
      %v571 = vpop.f32.mrf.mxu0
      %v572 = vadd.f32 0.0, %v571
      %573 = vmatmul.bf16.gmra.mxu0 %v425
      %v574 = vpop.f32.mrf.mxu0
      %v575 = vadd.f32 0.0, %v574
      %v576 = vpop.f32.mrf.mxu0
      %v577 = vadd.f32 0.0, %v576
      %578 = vdwg.mxu0
      %v579 = vld [vmem:[%s2] sm:$0x1]
      %v581 = vperm.slane %v579, 0
      %v583 = vmul.f32 %v500, %v581
      %v584 = vmul.f32 %v502, %v581
      %v585 = vmul.f32 %v505, %v581
      %v586 = vmul.f32 %v507, %v581
      %v587 = vmul.f32 %v510, %v581
      %v588 = vmul.f32 %v512, %v581
      %v589 = vmul.f32 %v515, %v581
      %v590 = vmul.f32 %v517, %v581
      %v591 = vmul.f32 %v520, %v581
      %v592 = vmul.f32 %v522, %v581
      %v593 = vmul.f32 %v525, %v581
      %v594 = vmul.f32 %v527, %v581
      %v595 = vmul.f32 %v530, %v581
      %v596 = vmul.f32 %v532, %v581
      %v597 = vmul.f32 %v535, %v581
      %v598 = vmul.f32 %v537, %v581
      %v599 = vmul.f32 %v540, %v581
      %v600 = vmul.f32 %v542, %v581
      %v601 = vmul.f32 %v545, %v581
      %v602 = vmul.f32 %v547, %v581
      %v603 = vmul.f32 %v550, %v581
      %v604 = vmul.f32 %v552, %v581
      %v605 = vmul.f32 %v555, %v581
      %v606 = vmul.f32 %v557, %v581
      %v607 = vmul.f32 %v560, %v581
      %v608 = vmul.f32 %v562, %v581
      %v609 = vmul.f32 %v565, %v581
      %v610 = vmul.f32 %v567, %v581
      %v611 = vmul.f32 %v570, %v581
      %v612 = vmul.f32 %v572, %v581
      %v613 = vmul.f32 %v575, %v581
      %v614 = vmul.f32 %v577, %v581
      %v615 = vld [vmem:[%s3] sm:$0x1]
      %v617 = vperm.slane %v615, 0
      %v619 = vadd.f32 %v583, %v617
      %v620 = vadd.f32 %v584, %v617
      %v621 = vadd.f32 %v585, %v617
      %v622 = vadd.f32 %v586, %v617
      %v623 = vadd.f32 %v587, %v617
      %v624 = vadd.f32 %v588, %v617
      %v625 = vadd.f32 %v589, %v617
      %v626 = vadd.f32 %v590, %v617
      %v627 = vadd.f32 %v591, %v617
      %v628 = vadd.f32 %v592, %v617
      %v629 = vadd.f32 %v593, %v617
      %v630 = vadd.f32 %v594, %v617
      %v631 = vadd.f32 %v595, %v617
      %v632 = vadd.f32 %v596, %v617
      %v633 = vadd.f32 %v597, %v617
      %v634 = vadd.f32 %v598, %v617
      %v635 = vadd.f32 %v599, %v617
      %v636 = vadd.f32 %v600, %v617
      %v637 = vadd.f32 %v601, %v617
      %v638 = vadd.f32 %v602, %v617
      %v639 = vadd.f32 %v603, %v617
      %v640 = vadd.f32 %v604, %v617
      %v641 = vadd.f32 %v605, %v617
      %v642 = vadd.f32 %v606, %v617
      %v643 = vadd.f32 %v607, %v617
      %v644 = vadd.f32 %v608, %v617
      %v645 = vadd.f32 %v609, %v617
      %v646 = vadd.f32 %v610, %v617
      %v647 = vadd.f32 %v611, %v617
      %v648 = vadd.f32 %v612, %v617
      %v649 = vadd.f32 %v613, %v617
      %v650 = vadd.f32 %v614, %v617
      %651 = vst [vmem:[%s290] sm:$0xff] %v619
      %652 = vst [vmem:[%s290 + $0x8] sm:$0xff] %v620
      %653 = vst [vmem:[%s290 + $0x10] sm:$0xff] %v621
      %654 = vst [vmem:[%s290 + $0x18] sm:$0xff] %v622
      %655 = vst [vmem:[%s290 + $0x20] sm:$0xff] %v623
      %656 = vst [vmem:[%s290 + $0x28] sm:$0xff] %v624
      %657 = vst [vmem:[%s290 + $0x30] sm:$0xff] %v625
      %658 = vst [vmem:[%s290 + $0x38] sm:$0xff] %v626
      %659 = vst [vmem:[%s290 + $0x40] sm:$0xff] %v627
      %660 = vst [vmem:[%s290 + $0x48] sm:$0xff] %v628
      %661 = vst [vmem:[%s290 + $0x50] sm:$0xff] %v629
      %662 = vst [vmem:[%s290 + $0x58] sm:$0xff] %v630
      %663 = vst [vmem:[%s290 + $0x60] sm:$0xff] %v631
      %664 = vst [vmem:[%s290 + $0x68] sm:$0xff] %v632
      %665 = vst [vmem:[%s290 + $0x70] sm:$0xff] %v633
      %666 = vst [vmem:[%s290 + $0x78] sm:$0xff] %v634
      %667 = vst [vmem:[%s290 + $0x80] sm:$0xff] %v635
      %668 = vst [vmem:[%s290 + $0x88] sm:$0xff] %v636
      %669 = vst [vmem:[%s290 + $0x90] sm:$0xff] %v637
      %670 = vst [vmem:[%s290 + $0x98] sm:$0xff] %v638
      %671 = vst [vmem:[%s290 + $0xa0] sm:$0xff] %v639
      %672 = vst [vmem:[%s290 + $0xa8] sm:$0xff] %v640
      %673 = vst [vmem:[%s290 + $0xb0] sm:$0xff] %v641
      %674 = vst [vmem:[%s290 + $0xb8] sm:$0xff] %v642
      %675 = vst [vmem:[%s290 + $0xc0] sm:$0xff] %v643
      %676 = vst [vmem:[%s290 + $0xc8] sm:$0xff] %v644
      %677 = vst [vmem:[%s290 + $0xd0] sm:$0xff] %v645
      %678 = vst [vmem:[%s290 + $0xd8] sm:$0xff] %v646
      %679 = vst [vmem:[%s290 + $0xe0] sm:$0xff] %v647
      %680 = vst [vmem:[%s290 + $0xe8] sm:$0xff] %v648
      %681 = vst [vmem:[%s290 + $0xf0] sm:$0xff] %v649
      %682 = vst [vmem:[%s290 + $0xf8] sm:$0xff] %v650
      %v683 = vld [vmem:[%s4] sm:$0x1]
      %v685 = vperm.slane %v683, 0
      %v687 = vmul.f32 %v619, %v685
      %v688 = vmul.f32 %v620, %v685
      %v689 = vmul.f32 %v621, %v685
      %v690 = vmul.f32 %v622, %v685
      %v691 = vmul.f32 %v623, %v685
      %v692 = vmul.f32 %v624, %v685
      %v693 = vmul.f32 %v625, %v685
      %v694 = vmul.f32 %v626, %v685
      %v695 = vmul.f32 %v627, %v685
      %v696 = vmul.f32 %v628, %v685
      %v697 = vmul.f32 %v629, %v685
      %v698 = vmul.f32 %v630, %v685
      %v699 = vmul.f32 %v631, %v685
      %v700 = vmul.f32 %v632, %v685
      %v701 = vmul.f32 %v633, %v685
      %v702 = vmul.f32 %v634, %v685
      %v703 = vmul.f32 %v635, %v685
      %v704 = vmul.f32 %v636, %v685
      %v705 = vmul.f32 %v637, %v685
      %v706 = vmul.f32 %v638, %v685
      %v707 = vmul.f32 %v639, %v685
      %v708 = vmul.f32 %v640, %v685
      %v709 = vmul.f32 %v641, %v685
      %v710 = vmul.f32 %v642, %v685
      %v711 = vmul.f32 %v643, %v685
      %v712 = vmul.f32 %v644, %v685
      %v713 = vmul.f32 %v645, %v685
      %v714 = vmul.f32 %v646, %v685
      %v715 = vmul.f32 %v647, %v685
      %v716 = vmul.f32 %v648, %v685
      %v717 = vmul.f32 %v649, %v685
      %v718 = vmul.f32 %v650, %v685
      %719 = vadd.xlane.f32.xlu0 %v687
      %v720 = vpop.xlane.xlu0 %719
      %721 = vadd.xlane.f32.xlu0 %v688
      %v722 = vpop.xlane.xlu0 %721
      %723 = vadd.xlane.f32.xlu0 %v689
      %v724 = vpop.xlane.xlu0 %723
      %725 = vadd.xlane.f32.xlu0 %v690
      %v726 = vpop.xlane.xlu0 %725
      %727 = vadd.xlane.f32.xlu0 %v691
      %v728 = vpop.xlane.xlu0 %727
      %729 = vadd.xlane.f32.xlu0 %v692
      %v730 = vpop.xlane.xlu0 %729
      %731 = vadd.xlane.f32.xlu0 %v693
      %v732 = vpop.xlane.xlu0 %731
      %733 = vadd.xlane.f32.xlu0 %v694
      %v734 = vpop.xlane.xlu0 %733
      %735 = vadd.xlane.f32.xlu0 %v695
      %v736 = vpop.xlane.xlu0 %735
      %737 = vadd.xlane.f32.xlu0 %v696
      %v738 = vpop.xlane.xlu0 %737
      %739 = vadd.xlane.f32.xlu0 %v697
      %v740 = vpop.xlane.xlu0 %739
      %741 = vadd.xlane.f32.xlu0 %v698
      %v742 = vpop.xlane.xlu0 %741
      %743 = vadd.xlane.f32.xlu0 %v699
      %v744 = vpop.xlane.xlu0 %743
      %745 = vadd.xlane.f32.xlu0 %v700
      %v746 = vpop.xlane.xlu0 %745
      %747 = vadd.xlane.f32.xlu0 %v701
      %v748 = vpop.xlane.xlu0 %747
      %749 = vadd.xlane.f32.xlu0 %v702
      %v750 = vpop.xlane.xlu0 %749
      %751 = vadd.xlane.f32.xlu0 %v703
      %v752 = vpop.xlane.xlu0 %751
      %753 = vadd.xlane.f32.xlu0 %v704
      %v754 = vpop.xlane.xlu0 %753
      %755 = vadd.xlane.f32.xlu0 %v705
      %v756 = vpop.xlane.xlu0 %755
      %757 = vadd.xlane.f32.xlu0 %v706
      %v758 = vpop.xlane.xlu0 %757
      %759 = vadd.xlane.f32.xlu0 %v707
      %v760 = vpop.xlane.xlu0 %759
      %761 = vadd.xlane.f32.xlu0 %v708
      %v762 = vpop.xlane.xlu0 %761
      %763 = vadd.xlane.f32.xlu0 %v709
      %v764 = vpop.xlane.xlu0 %763
      %765 = vadd.xlane.f32.xlu0 %v710
      %v766 = vpop.xlane.xlu0 %765
      %767 = vadd.xlane.f32.xlu0 %v711
      %v768 = vpop.xlane.xlu0 %767
      %769 = vadd.xlane.f32.xlu0 %v712
      %v770 = vpop.xlane.xlu0 %769
      %771 = vadd.xlane.f32.xlu0 %v713
      %v772 = vpop.xlane.xlu0 %771
      %773 = vadd.xlane.f32.xlu0 %v714
      %v774 = vpop.xlane.xlu0 %773
      %775 = vadd.xlane.f32.xlu0 %v715
      %v776 = vpop.xlane.xlu0 %775
      %777 = vadd.xlane.f32.xlu0 %v716
      %v778 = vpop.xlane.xlu0 %777
      %779 = vadd.xlane.f32.xlu0 %v717
      %v780 = vpop.xlane.xlu0 %779
      %781 = vadd.xlane.f32.xlu0 %v718
      %v782 = vpop.xlane.xlu0 %781
      %v783 = vld [vmem:[#allocation2] sm:$0x1]
      %v785 = vperm.slane %v783, 0
      %v787 = vadd.f32 %v720, %v785
      %v788 = vadd.f32 %v722, %v785
      %v789 = vadd.f32 %v724, %v785
      %v790 = vadd.f32 %v726, %v785
      %v791 = vadd.f32 %v728, %v785
      %v792 = vadd.f32 %v730, %v785
      %v793 = vadd.f32 %v732, %v785
      %v794 = vadd.f32 %v734, %v785
      %v795 = vadd.f32 %v736, %v785
      %v796 = vadd.f32 %v738, %v785
      %v797 = vadd.f32 %v740, %v785
      %v798 = vadd.f32 %v742, %v785
      %v799 = vadd.f32 %v744, %v785
      %v800 = vadd.f32 %v746, %v785
      %v801 = vadd.f32 %v748, %v785
      %v802 = vadd.f32 %v750, %v785
      %v803 = vadd.f32 %v752, %v785
      %v804 = vadd.f32 %v754, %v785
      %v805 = vadd.f32 %v756, %v785
      %v806 = vadd.f32 %v758, %v785
      %v807 = vadd.f32 %v760, %v785
      %v808 = vadd.f32 %v762, %v785
      %v809 = vadd.f32 %v764, %v785
      %v810 = vadd.f32 %v766, %v785
      %v811 = vadd.f32 %v768, %v785
      %v812 = vadd.f32 %v770, %v785
      %v813 = vadd.f32 %v772, %v785
      %v814 = vadd.f32 %v774, %v785
      %v815 = vadd.f32 %v776, %v785
      %v816 = vadd.f32 %v778, %v785
      %v817 = vadd.f32 %v780, %v785
      %v818 = vadd.f32 %v782, %v785
      %vm819 = vcmask 7168
      %820 = vst.msk [vmem:[%s296] sm:$0xff] %vm819, %v787
      %821 = vst.msk [vmem:[%s296 + $0x8] sm:$0xff] %vm819, %v788
      %822 = vst.msk [vmem:[%s296 + $0x10] sm:$0xff] %vm819, %v789
      %823 = vst.msk [vmem:[%s296 + $0x18] sm:$0xff] %vm819, %v790
      %824 = vst.msk [vmem:[%s296 + $0x20] sm:$0xff] %vm819, %v791
      %825 = vst.msk [vmem:[%s296 + $0x28] sm:$0xff] %vm819, %v792
      %826 = vst.msk [vmem:[%s296 + $0x30] sm:$0xff] %vm819, %v793
      %827 = vst.msk [vmem:[%s296 + $0x38] sm:$0xff] %vm819, %v794
      %828 = vst.msk [vmem:[%s296 + $0x40] sm:$0xff] %vm819, %v795
      %829 = vst.msk [vmem:[%s296 + $0x48] sm:$0xff] %vm819, %v796
      %830 = vst.msk [vmem:[%s296 + $0x50] sm:$0xff] %vm819, %v797
      %831 = vst.msk [vmem:[%s296 + $0x58] sm:$0xff] %vm819, %v798
      %832 = vst.msk [vmem:[%s296 + $0x60] sm:$0xff] %vm819, %v799
      %833 = vst.msk [vmem:[%s296 + $0x68] sm:$0xff] %vm819, %v800
      %834 = vst.msk [vmem:[%s296 + $0x70] sm:$0xff] %vm819, %v801
      %835 = vst.msk [vmem:[%s296 + $0x78] sm:$0xff] %vm819, %v802
      %836 = vst.msk [vmem:[%s296 + $0x80] sm:$0xff] %vm819, %v803
      %837 = vst.msk [vmem:[%s296 + $0x88] sm:$0xff] %vm819, %v804
      %838 = vst.msk [vmem:[%s296 + $0x90] sm:$0xff] %vm819, %v805
      %839 = vst.msk [vmem:[%s296 + $0x98] sm:$0xff] %vm819, %v806
      %840 = vst.msk [vmem:[%s296 + $0xa0] sm:$0xff] %vm819, %v807
      %841 = vst.msk [vmem:[%s296 + $0xa8] sm:$0xff] %vm819, %v808
      %842 = vst.msk [vmem:[%s296 + $0xb0] sm:$0xff] %vm819, %v809
      %843 = vst.msk [vmem:[%s296 + $0xb8] sm:$0xff] %vm819, %v810
      %844 = vst.msk [vmem:[%s296 + $0xc0] sm:$0xff] %vm819, %v811
      %845 = vst.msk [vmem:[%s296 + $0xc8] sm:$0xff] %vm819, %v812
      %846 = vst.msk [vmem:[%s296 + $0xd0] sm:$0xff] %vm819, %v813
      %847 = vst.msk [vmem:[%s296 + $0xd8] sm:$0xff] %vm819, %v814
      %848 = vst.msk [vmem:[%s296 + $0xe0] sm:$0xff] %vm819, %v815
      %849 = vst.msk [vmem:[%s296 + $0xe8] sm:$0xff] %vm819, %v816
      %850 = vst.msk [vmem:[%s296 + $0xf0] sm:$0xff] %vm819, %v817
      %851 = vst.msk [vmem:[%s296 + $0xf8] sm:$0xff] %vm819, %v818
      %s852 = smul.u32 32, %s21
      %p853 = scmp.lt.s32.totalorder %s852, 63
      %s854 = scalar_select %p853, %s852, 63
      %s855 = smul.addr %s854, 8
      %s856 = scalar_lea.vmem %s6, %s855
      %s857 = smul.u32 32, %s21
      %p858 = scmp.lt.s32.totalorder %s857, 63
      %s859 = scalar_select %p858, %s857, 63
      %s860 = smul.addr %s859, 8
      %s861 = scalar_lea.vmem %s7, %s860
      // Predicated region
      $region45: #{ppd_forward.9} parent=43 // pred_check
        %p862 = pneg %p170
      $region46: #{ppd_forward.9} parent=43 // pred_check_branch
        %864 = sbr.rel (%p862) target = $region48
      $region47: #{ppd_forward.9} parent=43 // pred_region
        %s865 = smul.u32 32, %s21
      $region48: #{ppd_forward.9} parent=43 // pred_fallthru
        _
      // Predicated region
      $region49: #{ppd_forward.9} parent=43 // pred_check
        %p866 = pneg %p196
      $region50: #{ppd_forward.9} parent=43 // pred_check_branch
        %868 = sbr.rel (%p866) target = $region52
      $region51: #{ppd_forward.9} parent=43 // pred_region
        %s869 = smul.u32 32, %s21
      $region52: #{ppd_forward.9} parent=43 // pred_fallthru
        _
    $region44: #{ppd_forward.9} parent=5 // pred_fallthru
      _
    %p870 = scmp.le.s32.totalorder 2, %s16
    // Predicated region
    $region53: #{ppd_forward.9} parent=5 // pred_check
      %p871 = pneg %p870
    $region54: #{ppd_forward.9} parent=5 // pred_check_branch
      %873 = sbr.rel (%p871) target = $region56
    $region55: #{ppd_forward.9} parent=5 // pred_region
      %s874 = ssub.s32 %s16, 2
      // Predicated region
      $region57: #{ppd_forward.9} parent=55 // pred_check
        %p875 = pneg %p176
      $region58: #{ppd_forward.9} parent=55 // pred_check_branch
        %877 = sbr.rel (%p875) target = $region60
      $region59: #{ppd_forward.9} parent=55 // pred_region
        %s878 = smul.u32 32, %s22
        %p879 = scmp.lt.s32.totalorder %s878, 63
        %s880 = scalar_select %p879, %s878, 63
        %s881 = smul.addr %s880, 8
        %s882 = scalar_lea.vmem %s6, %s881
      $region60: #{ppd_forward.9} parent=55 // pred_fallthru
        _
      // Predicated region
      $region61: #{ppd_forward.9} parent=55 // pred_check
        %p883 = pneg %p202
      $region62: #{ppd_forward.9} parent=55 // pred_check_branch
        %885 = sbr.rel (%p883) target = $region64
      $region63: #{ppd_forward.9} parent=55 // pred_region
        %s886 = smul.u32 32, %s22
        %p887 = scmp.lt.s32.totalorder %s886, 63
        %s888 = scalar_select %p887, %s886, 63
        %s889 = smul.addr %s888, 8
        %s890 = scalar_lea.vmem %s7, %s889
      $region64: #{ppd_forward.9} parent=55 // pred_fallthru
        _
    $region56: #{ppd_forward.9} parent=5 // pred_fallthru
      _
  $region6: #{ppd_forward.9} parent=0 // loop_footer
    %s20 = sadd.s32 1, %s16
  $region7: #{ppd_forward.9} parent=0 // loop_footer_branch
    %15 = sbr.rel target = $region3
  $region8: #{ppd_forward.9} parent=0 // loop_exit
    _

// kernel: ppd_forward.8
$region0: #{ppd_forward.8}
  #allocation0 [shape = 'u32[]', space=smem, size = 0x4, offset = 0x4, fixed_abs, tag = 'smem constant byte address 0x4 - core index']
  #allocation1 [shape = 'u32[72,128]{1,0:T(1,128)}', space=vmem, size = 0x9000, scoped, tag = 'internal scratch']
  %s0 = inlined_call_operand.vmem [shape: bf16[512,128], index: 0, kind: input, shape index: {}]
  %s1 = inlined_call_operand.vmem [shape: bf16[128,128], index: 1, kind: input, shape index: {}]
  %s2 = inlined_call_operand.vmem [shape: f32[1,128], index: 2, kind: input, shape index: {}]
  %s3 = inlined_call_operand.vmem [shape: f32[1,128], index: 3, kind: input, shape index: {}]
  %s4 = inlined_call_operand.vmem [shape: f32[512,128], index: 4, kind: output, shape index: {}]
  %s5 = sld [smem:[#allocation0]]
  $region49: #{ppd_forward.8} parent=0
    _
  %s7 = ssub.s32 1, %s5
  %s8 = scalar_select 0, %s7, %s5
  loop: start=0, step=1, limit=4
  $region2: #{ppd_forward.8} parent=0 // loop_pre_header
    _
  $region3: #{ppd_forward.8} parent=0 // loop_header
    %s10 = sphi 0, %s14
    %p11 = scmp.ge.s32.totalorder %s10, 4
    %s20 = sphi 0, %s22
    %s23 = sphi 0, %s20
    %s24 = sphi 0, %s23
    %s40 = sphi 0, %s24
    %s44 = sphi 0, %s44
    %s46 = sphi 0, %s44
    %s47 = sphi 0, %s46
    %s61 = sphi 0, %s47
    %s65 = sphi 0, %s65
    %s67 = sphi 0, %s65
    %s68 = sphi 0, %s67
    %s82 = sphi 0, %s68
    %s86 = sphi 0, %s86
    %s88 = sphi 0, %s86
    %s89 = sphi 0, %s88
    %s103 = sphi 0, %s89
    %s109 = sphi 0, %s111
    %s112 = sphi 0, %s109
    %s113 = sphi 0, %s112
    %s129 = sphi 0, %s113
  $region4: #{ppd_forward.8} parent=0 // loop_header_branch
    %13 = sbr.rel (%p11) target = $region8
  $region5: #{ppd_forward.8} parent=0 // loop_body
    %s15 = ssub.s32 %s10, 1
    %s16 = ssub.s32 %s10, 2
    %s17 = sadd.s32 %s10, 1
    %s18 = ssub.s32 %s10, %s17
    %p19 = scmp.eq.s32.totalorder %s18, 0
    %s21 = sadd.s32 %s20, 1
    %s22 = scalar_select %p19, %s20, %s21
    %p25 = pneg %p19
    %p26 = scmp.eq.s32.totalorder %s10, 1
    %p27 = por %p25, %p26
    %p28 = scmp.ne.s32.totalorder %s20, %s23
    %p29 = scmp.eq.s32.totalorder %s10, 0
    %p30 = por %p28, %p29
    %p31 = scmp.ne.s32.totalorder %s20, %s23
    %p32 = scmp.eq.s32.totalorder %s15, 1
    %p33 = por %p31, %p32
    %p34 = scmp.ne.s32.totalorder %s23, %s24
    %p35 = scmp.eq.s32.totalorder %s15, 0
    %p36 = por %p34, %p35
    %p37 = scmp.ne.s32.totalorder %s23, %s24
    %p38 = scmp.eq.s32.totalorder %s16, 1
    %p39 = por %p37, %p38
    %p41 = scmp.ne.s32.totalorder %s24, %s40
    %p42 = scmp.eq.s32.totalorder %s16, 0
    %p43 = por %p41, %p42
    %s45 = sadd.s32 %s44, 1
    %p48 = scmp.eq.s32.totalorder %s10, 1
    %p49 = scmp.ne.s32.totalorder %s44, %s46
    %p50 = scmp.eq.s32.totalorder %s10, 0
    %p51 = por %p49, %p50
    %p52 = scmp.ne.s32.totalorder %s44, %s46
    %p53 = scmp.eq.s32.totalorder %s15, 1
    %p54 = por %p52, %p53
    %p55 = scmp.ne.s32.totalorder %s46, %s47
    %p56 = scmp.eq.s32.totalorder %s15, 0
    %p57 = por %p55, %p56
    %p58 = scmp.ne.s32.totalorder %s46, %s47
    %p59 = scmp.eq.s32.totalorder %s16, 1
    %p60 = por %p58, %p59
    %p62 = scmp.ne.s32.totalorder %s47, %s61
    %p63 = scmp.eq.s32.totalorder %s16, 0
    %p64 = por %p62, %p63
    %s66 = sadd.s32 %s65, 1
    %p69 = scmp.eq.s32.totalorder %s10, 1
    %p70 = scmp.ne.s32.totalorder %s65, %s67
    %p71 = scmp.eq.s32.totalorder %s10, 0
    %p72 = por %p70, %p71
    %p73 = scmp.ne.s32.totalorder %s65, %s67
    %p74 = scmp.eq.s32.totalorder %s15, 1
    %p75 = por %p73, %p74
    %p76 = scmp.ne.s32.totalorder %s67, %s68
    %p77 = scmp.eq.s32.totalorder %s15, 0
    %p78 = por %p76, %p77
    %p79 = scmp.ne.s32.totalorder %s67, %s68
    %p80 = scmp.eq.s32.totalorder %s16, 1
    %p81 = por %p79, %p80
    %p83 = scmp.ne.s32.totalorder %s68, %s82
    %p84 = scmp.eq.s32.totalorder %s16, 0
    %p85 = por %p83, %p84
    %s87 = sadd.s32 %s86, 1
    %p90 = scmp.eq.s32.totalorder %s10, 1
    %p91 = scmp.ne.s32.totalorder %s86, %s88
    %p92 = scmp.eq.s32.totalorder %s10, 0
    %p93 = por %p91, %p92
    %p94 = scmp.ne.s32.totalorder %s86, %s88
    %p95 = scmp.eq.s32.totalorder %s15, 1
    %p96 = por %p94, %p95
    %p97 = scmp.ne.s32.totalorder %s88, %s89
    %p98 = scmp.eq.s32.totalorder %s15, 0
    %p99 = por %p97, %p98
    %p100 = scmp.ne.s32.totalorder %s88, %s89
    %p101 = scmp.eq.s32.totalorder %s16, 1
    %p102 = por %p100, %p101
    %p104 = scmp.ne.s32.totalorder %s89, %s103
    %p105 = scmp.eq.s32.totalorder %s16, 0
    %p106 = por %p104, %p105
    %s107 = ssub.s32 %s10, %s17
    %p108 = scmp.eq.s32.totalorder %s107, 0
    %s110 = sadd.s32 %s109, 1
    %s111 = scalar_select %p108, %s109, %s110
    %p114 = pneg %p108
    %p115 = scmp.eq.s32.totalorder %s10, 1
    %p116 = por %p114, %p115
    %p117 = scmp.ne.s32.totalorder %s109, %s112
    %p118 = scmp.eq.s32.totalorder %s10, 0
    %p119 = por %p117, %p118
    %p120 = scmp.ne.s32.totalorder %s109, %s112
    %p121 = scmp.eq.s32.totalorder %s15, 1
    %p122 = por %p120, %p121
    %p123 = scmp.ne.s32.totalorder %s112, %s113
    %p124 = scmp.eq.s32.totalorder %s15, 0
    %p125 = por %p123, %p124
    %p126 = scmp.ne.s32.totalorder %s112, %s113
    %p127 = scmp.eq.s32.totalorder %s16, 1
    %p128 = por %p126, %p127
    %p130 = scmp.ne.s32.totalorder %s113, %s129
    %p131 = scmp.eq.s32.totalorder %s16, 0
    %p132 = por %p130, %p131
    %p133 = scmp.le.s32.totalorder 1, %s10
    %p134 = scmp.lt.s32.totalorder %s10, 3
    %p135 = pnand %p133, %p134
    %p136 = pneg %p135
    // Predicated region
    $region9: #{ppd_forward.8} parent=5 // pred_check
      _
    $region10: #{ppd_forward.8} parent=5 // pred_check_branch
      %138 = sbr.rel (%p135) target = $region12
    $region11: #{ppd_forward.8} parent=5 // pred_region
      %s139 = ssub.s32 %s10, 1
      // Predicated region
      $region13: #{ppd_forward.8} parent=11 // pred_check
        %p140 = pneg %p57
      $region14: #{ppd_forward.8} parent=11 // pred_check_branch
        %142 = sbr.rel (%p140) target = $region16
      $region15: #{ppd_forward.8} parent=11 // pred_region
        _
      $region16: #{ppd_forward.8} parent=11 // pred_fallthru
        _
      // Predicated region
      $region17: #{ppd_forward.8} parent=11 // pred_check
        %p143 = pneg %p78
      $region18: #{ppd_forward.8} parent=11 // pred_check_branch
        %145 = sbr.rel (%p143) target = $region20
      $region19: #{ppd_forward.8} parent=11 // pred_region
        _
      $region20: #{ppd_forward.8} parent=11 // pred_fallthru
        _
      // Predicated region
      $region21: #{ppd_forward.8} parent=11 // pred_check
        %p146 = pneg %p99
      $region22: #{ppd_forward.8} parent=11 // pred_check_branch
        %148 = sbr.rel (%p146) target = $region24
      $region23: #{ppd_forward.8} parent=11 // pred_region
        _
      $region24: #{ppd_forward.8} parent=11 // pred_fallthru
        _
    $region12: #{ppd_forward.8} parent=5 // pred_fallthru
      _
    %p149 = scmp.lt.s32.totalorder %s10, 2
    // Predicated region
    $region25: #{ppd_forward.8} parent=5 // pred_check
      %p150 = pneg %p149
    $region26: #{ppd_forward.8} parent=5 // pred_check_branch
      %152 = sbr.rel (%p150) target = $region28
    $region27: #{ppd_forward.8} parent=5 // pred_region
      // Predicated region
      $region29: #{ppd_forward.8} parent=27 // pred_check
        %p153 = pneg %p30
      $region30: #{ppd_forward.8} parent=27 // pred_check_branch
        %155 = sbr.rel (%p153) target = $region32
      $region31: #{ppd_forward.8} parent=27 // pred_region
        %s156 = smul.u32 32, %s10
        %p157 = scmp.lt.s32.totalorder %s156, 63
        %s158 = scalar_select %p157, %s156, 63
        %s159 = smul.addr %s158, 4
        %s160 = scalar_lea.vmem %s0, %s159
        %s161 = smul.u32 32, %s10
      $region32: #{ppd_forward.8} parent=27 // pred_fallthru
        _
    $region28: #{ppd_forward.8} parent=5 // pred_fallthru
      _
    %p162 = scmp.le.s32.totalorder 1, %s10
    %p163 = scmp.lt.s32.totalorder %s10, 3
    %p164 = pnand %p162, %p163
    %p165 = pneg %p164
    // Predicated region
    $region33: #{ppd_forward.8} parent=5 // pred_check
      _
    $region34: #{ppd_forward.8} parent=5 // pred_check_branch
      %167 = sbr.rel (%p164) target = $region36
    $region35: #{ppd_forward.8} parent=5 // pred_region
      %s168 = ssub.s32 %s10, 1
      %s169 = smul.u32 32, %s15
      %p170 = scmp.lt.s32.totalorder %s169, 63
      %s171 = scalar_select %p170, %s169, 63
      %s172 = smul.addr %s171, 4
      %s173 = scalar_lea.vmem %s0, %s172
      %p174 = pneg %p36
      %p175 = pneg %p33
      %p176 = pneg %p57
      %p177 = pneg %p54
      %p178 = pneg %p78
      %p179 = pneg %p75
      %p180 = pneg %p99
      %p181 = pneg %p96
      %p182 = pneg %p125
      %p183 = pneg %p122
      %s184 = smul.u32 32, %s15
      %p185 = scmp.lt.s32.totalorder %s184, 63
      %s186 = scalar_select %p185, %s184, 63
      %s187 = smul.addr %s186, 8
      %s188 = scalar_lea.vmem %s4, %s187
      %s189 = smul.u32 32, %s15
      %p190 = scmp.lt.s32.totalorder %s189, 63
      %s191 = scalar_select %p190, %s189, 63
      %s192 = smul.addr %s191, 4
      %s193 = scalar_lea.vmem %s0, %s192
      %s194 = smul.u32 32, %s15
      %s195 = smul.u32 32, %s15
      %p196 = scmp.lt.s32.totalorder %s195, 63
      %s197 = scalar_select %p196, %s195, 63
      %s198 = smul.addr %s197, 8
      %s199 = scalar_lea.vmem %s4, %s198
      %s200 = smul.u32 32, %s15
      %v201 = vld [vmem:[%s193] sm:$0xf]
      %v202 = vld [vmem:[%s193 + $0x4] sm:$0xf]
      %v203 = vld [vmem:[%s193 + $0x8] sm:$0xf]
      %v204 = vld [vmem:[%s193 + $0xc] sm:$0xf]
      %v205 = vld [vmem:[%s193 + $0x10] sm:$0xf]
      %v206 = vld [vmem:[%s193 + $0x14] sm:$0xf]
      %v207 = vld [vmem:[%s193 + $0x18] sm:$0xf]
      %v208 = vld [vmem:[%s193 + $0x1c] sm:$0xf]
      %v209 = vld [vmem:[%s193 + $0x20] sm:$0xf]
      %v210 = vld [vmem:[%s193 + $0x24] sm:$0xf]
      %v211 = vld [vmem:[%s193 + $0x28] sm:$0xf]
      %v212 = vld [vmem:[%s193 + $0x2c] sm:$0xf]
      %v213 = vld [vmem:[%s193 + $0x30] sm:$0xf]
      %v214 = vld [vmem:[%s193 + $0x34] sm:$0xf]
      %v215 = vld [vmem:[%s193 + $0x38] sm:$0xf]
      %v216 = vld [vmem:[%s193 + $0x3c] sm:$0xf]
      %v217 = vld [vmem:[%s193 + $0x40] sm:$0xf]
      %v218 = vld [vmem:[%s193 + $0x44] sm:$0xf]
      %v219 = vld [vmem:[%s193 + $0x48] sm:$0xf]
      %v220 = vld [vmem:[%s193 + $0x4c] sm:$0xf]
      %v221 = vld [vmem:[%s193 + $0x50] sm:$0xf]
      %v222 = vld [vmem:[%s193 + $0x54] sm:$0xf]
      %v223 = vld [vmem:[%s193 + $0x58] sm:$0xf]
      %v224 = vld [vmem:[%s193 + $0x5c] sm:$0xf]
      %v225 = vld [vmem:[%s193 + $0x60] sm:$0xf]
      %v226 = vld [vmem:[%s193 + $0x64] sm:$0xf]
      %v227 = vld [vmem:[%s193 + $0x68] sm:$0xf]
      %v228 = vld [vmem:[%s193 + $0x6c] sm:$0xf]
      %v229 = vld [vmem:[%s193 + $0x70] sm:$0xf]
      %v230 = vld [vmem:[%s193 + $0x74] sm:$0xf]
      %v231 = vld [vmem:[%s193 + $0x78] sm:$0xf]
      %v232 = vld [vmem:[%s193 + $0x7c] sm:$0xf]
      %v233 = vld [vmem:[%s1] sm:$0xf]
      %v234 = vld [vmem:[%s1 + $0x4] sm:$0xf]
      %v235 = vld [vmem:[%s1 + $0x8] sm:$0xf]
      %v236 = vld [vmem:[%s1 + $0xc] sm:$0xf]
      %v237 = vld [vmem:[%s1 + $0x10] sm:$0xf]
      %v238 = vld [vmem:[%s1 + $0x14] sm:$0xf]
      %v239 = vld [vmem:[%s1 + $0x18] sm:$0xf]
      %v240 = vld [vmem:[%s1 + $0x1c] sm:$0xf]
      %v241 = vld [vmem:[%s1 + $0x20] sm:$0xf]
      %v242 = vld [vmem:[%s1 + $0x24] sm:$0xf]
      %v243 = vld [vmem:[%s1 + $0x28] sm:$0xf]
      %v244 = vld [vmem:[%s1 + $0x2c] sm:$0xf]
      %v245 = vld [vmem:[%s1 + $0x30] sm:$0xf]
      %v246 = vld [vmem:[%s1 + $0x34] sm:$0xf]
      %v247 = vld [vmem:[%s1 + $0x38] sm:$0xf]
      %v248 = vld [vmem:[%s1 + $0x3c] sm:$0xf]
      %v281 = vunpack.c.l.b16 %v201
      %v282 = vunpack.c.l.b16 %v202
      %v283 = vunpack.c.l.b16 %v203
      %v284 = vunpack.c.l.b16 %v204
      %v285 = vunpack.c.l.b16 %v205
      %v286 = vunpack.c.l.b16 %v206
      %v287 = vunpack.c.l.b16 %v207
      %v288 = vunpack.c.l.b16 %v208
      %v289 = vunpack.c.l.b16 %v209
      %v290 = vunpack.c.l.b16 %v210
      %v291 = vunpack.c.l.b16 %v211
      %v292 = vunpack.c.l.b16 %v212
      %v293 = vunpack.c.l.b16 %v213
      %v294 = vunpack.c.l.b16 %v214
      %v295 = vunpack.c.l.b16 %v215
      %v296 = vunpack.c.l.b16 %v216
      %v297 = vunpack.c.l.b16 %v217
      %v298 = vunpack.c.l.b16 %v218
      %v299 = vunpack.c.l.b16 %v219
      %v300 = vunpack.c.l.b16 %v220
      %v301 = vunpack.c.l.b16 %v221
      %v302 = vunpack.c.l.b16 %v222
      %v303 = vunpack.c.l.b16 %v223
      %v304 = vunpack.c.l.b16 %v224
      %v305 = vunpack.c.l.b16 %v225
      %v306 = vunpack.c.l.b16 %v226
      %v307 = vunpack.c.l.b16 %v227
      %v308 = vunpack.c.l.b16 %v228
      %v309 = vunpack.c.l.b16 %v229
      %v310 = vunpack.c.l.b16 %v230
      %v311 = vunpack.c.l.b16 %v231
      %v312 = vunpack.c.l.b16 %v232
      %v313 = vpack.c.b16 %v282, %v281
      %v314 = vpack.c.b16 %v284, %v283
      %v315 = vpack.c.b16 %v286, %v285
      %v316 = vpack.c.b16 %v288, %v287
      %v317 = vpack.c.b16 %v290, %v289
      %v318 = vpack.c.b16 %v292, %v291
      %v319 = vpack.c.b16 %v294, %v293
      %v320 = vpack.c.b16 %v296, %v295
      %v321 = vpack.c.b16 %v298, %v297
      %v322 = vpack.c.b16 %v300, %v299
      %v323 = vpack.c.b16 %v302, %v301
      %v324 = vpack.c.b16 %v304, %v303
      %v325 = vpack.c.b16 %v306, %v305
      %v326 = vpack.c.b16 %v308, %v307
      %v327 = vpack.c.b16 %v310, %v309
      %v328 = vpack.c.b16 %v312, %v311
      %v361 = vunpack.c.l.b16 %v233
      %v362 = vunpack.c.l.b16 %v234
      %v363 = vunpack.c.l.b16 %v235
      %v364 = vunpack.c.l.b16 %v236
      %v365 = vunpack.c.l.b16 %v237
      %v366 = vunpack.c.l.b16 %v238
      %v367 = vunpack.c.l.b16 %v239
      %v368 = vunpack.c.l.b16 %v240
      %v369 = vunpack.c.l.b16 %v241
      %v370 = vunpack.c.l.b16 %v242
      %v371 = vunpack.c.l.b16 %v243
      %v372 = vunpack.c.l.b16 %v244
      %v373 = vunpack.c.l.b16 %v245
      %v374 = vunpack.c.l.b16 %v246
      %v375 = vunpack.c.l.b16 %v247
      %v376 = vunpack.c.l.b16 %v248
      %v377 = vpack.c.b16 %v362, %v361
      %v378 = vpack.c.b16 %v364, %v363
      %v379 = vpack.c.b16 %v366, %v365
      %v380 = vpack.c.b16 %v368, %v367
      %v381 = vpack.c.b16 %v370, %v369
      %v382 = vpack.c.b16 %v372, %v371
      %v383 = vpack.c.b16 %v374, %v373
      %v384 = vpack.c.b16 %v376, %v375
      %393 = vmatpush.bf16.msra.mxu0 %v384
      %394 = vmatpush.bf16.msra.mxu0 %v383
      %395 = vmatpush.bf16.msra.mxu0 %v382
      %396 = vmatpush.bf16.msra.mxu0 %v381
      %397 = vmatpush.bf16.msra.mxu0 %v380
      %398 = vmatpush.bf16.msra.mxu0 %v379
      %399 = vmatpush.bf16.msra.mxu0 %v378
      %400 = vmatpush.bf16.msra.mxu0 %v377
      %401 = vmatmul.bf16.gmra.mxu0 %v313
      %v402 = vpop.f32.mrf.mxu0
      %v403 = vadd.f32 0.0, %v402
      %v404 = vpop.f32.mrf.mxu0
      %v405 = vadd.f32 0.0, %v404
      %406 = vmatmul.bf16.gmra.mxu0 %v314
      %v407 = vpop.f32.mrf.mxu0
      %v408 = vadd.f32 0.0, %v407
      %v409 = vpop.f32.mrf.mxu0
      %v410 = vadd.f32 0.0, %v409
      %411 = vmatmul.bf16.gmra.mxu0 %v315
      %v412 = vpop.f32.mrf.mxu0
      %v413 = vadd.f32 0.0, %v412
      %v414 = vpop.f32.mrf.mxu0
      %v415 = vadd.f32 0.0, %v414
      %416 = vmatmul.bf16.gmra.mxu0 %v316
      %v417 = vpop.f32.mrf.mxu0
      %v418 = vadd.f32 0.0, %v417
      %v419 = vpop.f32.mrf.mxu0
      %v420 = vadd.f32 0.0, %v419
      %421 = vmatmul.bf16.gmra.mxu0 %v317
      %v422 = vpop.f32.mrf.mxu0
      %v423 = vadd.f32 0.0, %v422
      %v424 = vpop.f32.mrf.mxu0
      %v425 = vadd.f32 0.0, %v424
      %426 = vmatmul.bf16.gmra.mxu0 %v318
      %v427 = vpop.f32.mrf.mxu0
      %v428 = vadd.f32 0.0, %v427
      %v429 = vpop.f32.mrf.mxu0
      %v430 = vadd.f32 0.0, %v429
      %431 = vmatmul.bf16.gmra.mxu0 %v319
      %v432 = vpop.f32.mrf.mxu0
      %v433 = vadd.f32 0.0, %v432
      %v434 = vpop.f32.mrf.mxu0
      %v435 = vadd.f32 0.0, %v434
      %436 = vmatmul.bf16.gmra.mxu0 %v320
      %v437 = vpop.f32.mrf.mxu0
      %v438 = vadd.f32 0.0, %v437
      %v439 = vpop.f32.mrf.mxu0
      %v440 = vadd.f32 0.0, %v439
      %441 = vmatmul.bf16.gmra.mxu0 %v321
      %v442 = vpop.f32.mrf.mxu0
      %v443 = vadd.f32 0.0, %v442
      %v444 = vpop.f32.mrf.mxu0
      %v445 = vadd.f32 0.0, %v444
      %446 = vmatmul.bf16.gmra.mxu0 %v322
      %v447 = vpop.f32.mrf.mxu0
      %v448 = vadd.f32 0.0, %v447
      %v449 = vpop.f32.mrf.mxu0
      %v450 = vadd.f32 0.0, %v449
      %451 = vmatmul.bf16.gmra.mxu0 %v323
      %v452 = vpop.f32.mrf.mxu0
      %v453 = vadd.f32 0.0, %v452
      %v454 = vpop.f32.mrf.mxu0
      %v455 = vadd.f32 0.0, %v454
      %456 = vmatmul.bf16.gmra.mxu0 %v324
      %v457 = vpop.f32.mrf.mxu0
      %v458 = vadd.f32 0.0, %v457
      %v459 = vpop.f32.mrf.mxu0
      %v460 = vadd.f32 0.0, %v459
      %461 = vmatmul.bf16.gmra.mxu0 %v325
      %v462 = vpop.f32.mrf.mxu0
      %v463 = vadd.f32 0.0, %v462
      %v464 = vpop.f32.mrf.mxu0
      %v465 = vadd.f32 0.0, %v464
      %466 = vmatmul.bf16.gmra.mxu0 %v326
      %v467 = vpop.f32.mrf.mxu0
      %v468 = vadd.f32 0.0, %v467
      %v469 = vpop.f32.mrf.mxu0
      %v470 = vadd.f32 0.0, %v469
      %471 = vmatmul.bf16.gmra.mxu0 %v327
      %v472 = vpop.f32.mrf.mxu0
      %v473 = vadd.f32 0.0, %v472
      %v474 = vpop.f32.mrf.mxu0
      %v475 = vadd.f32 0.0, %v474
      %476 = vmatmul.bf16.gmra.mxu0 %v328
      %v477 = vpop.f32.mrf.mxu0
      %v478 = vadd.f32 0.0, %v477
      %v479 = vpop.f32.mrf.mxu0
      %v480 = vadd.f32 0.0, %v479
      %481 = vdwg.mxu0
      %v482 = vld [vmem:[%s2] sm:$0x1]
      %v484 = vperm.slane %v482, 0
      %v486 = vmul.f32 %v403, %v484
      %v487 = vmul.f32 %v405, %v484
      %v488 = vmul.f32 %v408, %v484
      %v489 = vmul.f32 %v410, %v484
      %v490 = vmul.f32 %v413, %v484
      %v491 = vmul.f32 %v415, %v484
      %v492 = vmul.f32 %v418, %v484
      %v493 = vmul.f32 %v420, %v484
      %v494 = vmul.f32 %v423, %v484
      %v495 = vmul.f32 %v425, %v484
      %v496 = vmul.f32 %v428, %v484
      %v497 = vmul.f32 %v430, %v484
      %v498 = vmul.f32 %v433, %v484
      %v499 = vmul.f32 %v435, %v484
      %v500 = vmul.f32 %v438, %v484
      %v501 = vmul.f32 %v440, %v484
      %v502 = vmul.f32 %v443, %v484
      %v503 = vmul.f32 %v445, %v484
      %v504 = vmul.f32 %v448, %v484
      %v505 = vmul.f32 %v450, %v484
      %v506 = vmul.f32 %v453, %v484
      %v507 = vmul.f32 %v455, %v484
      %v508 = vmul.f32 %v458, %v484
      %v509 = vmul.f32 %v460, %v484
      %v510 = vmul.f32 %v463, %v484
      %v511 = vmul.f32 %v465, %v484
      %v512 = vmul.f32 %v468, %v484
      %v513 = vmul.f32 %v470, %v484
      %v514 = vmul.f32 %v473, %v484
      %v515 = vmul.f32 %v475, %v484
      %v516 = vmul.f32 %v478, %v484
      %v517 = vmul.f32 %v480, %v484
      %v518 = vld [vmem:[%s3] sm:$0x1]
      %v520 = vperm.slane %v518, 0
      %v522 = vadd.f32 %v486, %v520
      %v523 = vadd.f32 %v487, %v520
      %v524 = vadd.f32 %v488, %v520
      %v525 = vadd.f32 %v489, %v520
      %v526 = vadd.f32 %v490, %v520
      %v527 = vadd.f32 %v491, %v520
      %v528 = vadd.f32 %v492, %v520
      %v529 = vadd.f32 %v493, %v520
      %v530 = vadd.f32 %v494, %v520
      %v531 = vadd.f32 %v495, %v520
      %v532 = vadd.f32 %v496, %v520
      %v533 = vadd.f32 %v497, %v520
      %v534 = vadd.f32 %v498, %v520
      %v535 = vadd.f32 %v499, %v520
      %v536 = vadd.f32 %v500, %v520
      %v537 = vadd.f32 %v501, %v520
      %v538 = vadd.f32 %v502, %v520
      %v539 = vadd.f32 %v503, %v520
      %v540 = vadd.f32 %v504, %v520
      %v541 = vadd.f32 %v505, %v520
      %v542 = vadd.f32 %v506, %v520
      %v543 = vadd.f32 %v507, %v520
      %v544 = vadd.f32 %v508, %v520
      %v545 = vadd.f32 %v509, %v520
      %v546 = vadd.f32 %v510, %v520
      %v547 = vadd.f32 %v511, %v520
      %v548 = vadd.f32 %v512, %v520
      %v549 = vadd.f32 %v513, %v520
      %v550 = vadd.f32 %v514, %v520
      %v551 = vadd.f32 %v515, %v520
      %v552 = vadd.f32 %v516, %v520
      %v553 = vadd.f32 %v517, %v520
      %554 = vst [vmem:[%s199] sm:$0xff] %v522
      %555 = vst [vmem:[%s199 + $0x8] sm:$0xff] %v523
      %556 = vst [vmem:[%s199 + $0x10] sm:$0xff] %v524
      %557 = vst [vmem:[%s199 + $0x18] sm:$0xff] %v525
      %558 = vst [vmem:[%s199 + $0x20] sm:$0xff] %v526
      %559 = vst [vmem:[%s199 + $0x28] sm:$0xff] %v527
      %560 = vst [vmem:[%s199 + $0x30] sm:$0xff] %v528
      %561 = vst [vmem:[%s199 + $0x38] sm:$0xff] %v529
      %562 = vst [vmem:[%s199 + $0x40] sm:$0xff] %v530
      %563 = vst [vmem:[%s199 + $0x48] sm:$0xff] %v531
      %564 = vst [vmem:[%s199 + $0x50] sm:$0xff] %v532
      %565 = vst [vmem:[%s199 + $0x58] sm:$0xff] %v533
      %566 = vst [vmem:[%s199 + $0x60] sm:$0xff] %v534
      %567 = vst [vmem:[%s199 + $0x68] sm:$0xff] %v535
      %568 = vst [vmem:[%s199 + $0x70] sm:$0xff] %v536
      %569 = vst [vmem:[%s199 + $0x78] sm:$0xff] %v537
      %570 = vst [vmem:[%s199 + $0x80] sm:$0xff] %v538
      %571 = vst [vmem:[%s199 + $0x88] sm:$0xff] %v539
      %572 = vst [vmem:[%s199 + $0x90] sm:$0xff] %v540
      %573 = vst [vmem:[%s199 + $0x98] sm:$0xff] %v541
      %574 = vst [vmem:[%s199 + $0xa0] sm:$0xff] %v542
      %575 = vst [vmem:[%s199 + $0xa8] sm:$0xff] %v543
      %576 = vst [vmem:[%s199 + $0xb0] sm:$0xff] %v544
      %577 = vst [vmem:[%s199 + $0xb8] sm:$0xff] %v545
      %578 = vst [vmem:[%s199 + $0xc0] sm:$0xff] %v546
      %579 = vst [vmem:[%s199 + $0xc8] sm:$0xff] %v547
      %580 = vst [vmem:[%s199 + $0xd0] sm:$0xff] %v548
      %581 = vst [vmem:[%s199 + $0xd8] sm:$0xff] %v549
      %582 = vst [vmem:[%s199 + $0xe0] sm:$0xff] %v550
      %583 = vst [vmem:[%s199 + $0xe8] sm:$0xff] %v551
      %584 = vst [vmem:[%s199 + $0xf0] sm:$0xff] %v552
      %585 = vst [vmem:[%s199 + $0xf8] sm:$0xff] %v553
      %s586 = smul.u32 32, %s15
      %p587 = scmp.lt.s32.totalorder %s586, 63
      %s588 = scalar_select %p587, %s586, 63
      %s589 = smul.addr %s588, 8
      %s590 = scalar_lea.vmem %s4, %s589
      // Predicated region
      $region37: #{ppd_forward.8} parent=35 // pred_check
        %p591 = pneg %p122
      $region38: #{ppd_forward.8} parent=35 // pred_check_branch
        %593 = sbr.rel (%p591) target = $region40
      $region39: #{ppd_forward.8} parent=35 // pred_region
        %s594 = smul.u32 32, %s15
      $region40: #{ppd_forward.8} parent=35 // pred_fallthru
        _
    $region36: #{ppd_forward.8} parent=5 // pred_fallthru
      _
    %p595 = scmp.le.s32.totalorder 2, %s10
    // Predicated region
    $region41: #{ppd_forward.8} parent=5 // pred_check
      %p596 = pneg %p595
    $region42: #{ppd_forward.8} parent=5 // pred_check_branch
      %598 = sbr.rel (%p596) target = $region44
    $region43: #{ppd_forward.8} parent=5 // pred_region
      %s599 = ssub.s32 %s10, 2
      // Predicated region
      $region45: #{ppd_forward.8} parent=43 // pred_check
        %p600 = pneg %p128
      $region46: #{ppd_forward.8} parent=43 // pred_check_branch
        %602 = sbr.rel (%p600) target = $region48
      $region47: #{ppd_forward.8} parent=43 // pred_region
        %s603 = smul.u32 32, %s16
        %p604 = scmp.lt.s32.totalorder %s603, 63
        %s605 = scalar_select %p604, %s603, 63
        %s606 = smul.addr %s605, 8
        %s607 = scalar_lea.vmem %s4, %s606
      $region48: #{ppd_forward.8} parent=43 // pred_fallthru
        _
    $region44: #{ppd_forward.8} parent=5 // pred_fallthru
      _
  $region6: #{ppd_forward.8} parent=0 // loop_footer
    %s14 = sadd.s32 1, %s10
  $region7: #{ppd_forward.8} parent=0 // loop_footer_branch
    %9 = sbr.rel target = $region3
  $region8: #{ppd_forward.8} parent=0 // loop_exit
    _

</llo_original>
